<compile_context>
chip_gen: v5e
topology: v5e:2x2
jax: 0.10.0
libtpu: 0.0.40
codegen_flags: <defaults>
</compile_context>

<pallas_src>
import functools
import math

import jax
import jax.numpy as jnp
from jax.experimental import pallas as pl
from jax.experimental.pallas import tpu as pltpu

# ----------------------------------------------------------------------------
# Small config consistent with MTCN_AV (shrunk; num_class is a scalar so the
# single fc_action head + classification_mode='summary' path is exercised).
# ----------------------------------------------------------------------------
NUM_CLASS = 10
SEQ_LEN = 3
NUM_CLIPS = 2
VISUAL_DIM = 32
AUDIO_DIM = 32
D_MODEL = 32
DIM_FF = 64
NHEAD = 4
NUM_LAYERS = 2
BATCH = 2
NUM_SUMMARY = 1                      # scalar num_class -> one summary token

T = SEQ_LEN * NUM_CLIPS              # temporal tokens per modality
S = 2 * T + NUM_SUMMARY              # transformer sequence length


# ----------------------------------------------------------------------------
# In-kernel helpers
# ----------------------------------------------------------------------------
def _layer_norm(x, g, b, eps=1e-5):
    mean = jnp.mean(x, axis=-1, keepdims=True)
    var = jnp.mean((x - mean) ** 2, axis=-1, keepdims=True)
    return (x - mean) * jax.lax.rsqrt(var + eps) * g + b


def _bf16(x):
    return x.astype(jnp.bfloat16)


# ----------------------------------------------------------------------------
# Single fused Pallas kernel: embedding -> L encoder layers -> classifier
# ----------------------------------------------------------------------------
def _mtcn_fused_kernel(inputs_ref, emb_w_ref, emb_b_ref, pos_ref, summary_ref,
                       wqkv_ref, bqkv_ref, wo_ref, bo_ref, ln1g_ref, ln1b_ref,
                       w1_ref, b1_ref, w2_ref, b2_ref, ln2g_ref, ln2b_ref,
                       fcw_ref, fcb_ref, out_ref, *, nhead, num_layers):
    batch = inputs_ref.shape[0]
    dm = pos_ref.shape[-1]
    dh = dm // nhead

    pos = pos_ref[...]                     # (S, dm)  f32
    summary = summary_ref[...]             # (1, dm)  f32
    emb_w = emb_w_ref[...]                 # (2*din, 2*dm) bf16, block-diagonal
    emb_b = emb_b_ref[...]                 # (1, 2*dm) f32

    summ_rows = []
    for b in range(batch):                 # static loop over batch (tiny B)
        feats = inputs_ref[b]              # (T, visual+audio) f32
        # fused visual|audio embedding: one matmul, split columns after
        emb = jnp.dot(_bf16(feats), emb_w,
                      preferred_element_type=jnp.float32) + emb_b   # (T, 2*dm)
        # [visual tokens ; audio tokens ; summary token] + positional embedding
        x = jnp.concatenate([emb[:, :dm], emb[:, dm:], summary], axis=0) + pos

        for l in range(num_layers):        # static loop over encoder layers
            # fused QKV projection (Q already pre-scaled by 1/sqrt(dh) at init)
            qkv = jnp.dot(_bf16(x), wqkv_ref[l],
                          preferred_element_type=jnp.float32) + bqkv_ref[l]
            q = qkv[:, :dm]
            k = qkv[:, dm:2 * dm]
            v = qkv[:, 2 * dm:]
            wo = wo_ref[l]                 # (dm, dm) bf16

            attn = jnp.zeros((x.shape[0], dm), jnp.float32)
            for h in range(nhead):         # static loop over heads
                qh = q[:, h * dh:(h + 1) * dh]
                kh = k[:, h * dh:(h + 1) * dh]
                vh = v[:, h * dh:(h + 1) * dh]
                scores = jnp.dot(_bf16(qh), _bf16(kh.T),
                                 preferred_element_type=jnp.float32)  # (S, S)
                scores = scores - jnp.max(scores, axis=-1, keepdims=True)
                probs = jnp.exp(scores)
                probs = probs * pl.reciprocal(
                    jnp.sum(probs, axis=-1, keepdims=True), approx=True)
                head_out = jnp.dot(_bf16(probs), _bf16(vh),
                                   preferred_element_type=jnp.float32)  # (S, dh)
                # accumulate through the output projection (no lane concat)
                attn = attn + jnp.dot(_bf16(head_out),
                                      wo[h * dh:(h + 1) * dh, :],
                                      preferred_element_type=jnp.float32)
            attn = attn + bo_ref[l]

            # post-LN residual block 1 (dropout is identity at inference)
            x = _layer_norm(x + attn, ln1g_ref[l], ln1b_ref[l])

            # FFN: Linear -> ReLU -> Linear
            h1 = jnp.dot(_bf16(x), w1_ref[l],
                         preferred_element_type=jnp.float32) + b1_ref[l]
            h1 = jnp.maximum(h1, 0.0)
            h2 = jnp.dot(_bf16(h1), w2_ref[l],
                         preferred_element_type=jnp.float32) + b2_ref[l]
            x = _layer_norm(x + h2, ln2g_ref[l], ln2b_ref[l])

        summ_rows.append(x[-1:, :])        # summary token state, (1, dm)

    # classification_mode == 'summary': fc_action on the last (summary) token,
    # done once for the whole batch, written with a single full store.
    summ = jnp.concatenate(summ_rows, axis=0)                       # (B, dm)
    out_ref[...] = jnp.dot(_bf16(summ), fcw_ref[...],
                           preferred_element_type=jnp.float32) + fcb_ref[...]


def mtcn_av_forward(params, inputs):
    """inputs: (B, T, VISUAL_DIM + AUDIO_DIM) float32 -> (B, NUM_CLASS)."""
    B = inputs.shape[0]
    args = [inputs,
            params["emb_w"], params["emb_b"], params["pos"], params["summary"],
            params["wqkv"], params["bqkv"], params["wo"], params["bo"],
            params["ln1_g"], params["ln1_b"],
            params["w1"], params["b1"], params["w2"], params["b2"],
            params["ln2_g"], params["ln2_b"],
            params["fc_w"], params["fc_b"]]
    # Whole arrays resident in VMEM, single grid step (model is tiny: <100 KB).
    in_specs = [pl.BlockSpec(a.shape, lambda i, n=a.ndim: (0,) * n)
                for a in args]
    return pl.pallas_call(
        functools.partial(_mtcn_fused_kernel,
                          nhead=NHEAD, num_layers=NUM_LAYERS),
        out_shape=jax.ShapeDtypeStruct((B, NUM_CLASS), jnp.float32),
        grid=(1,),
        in_specs=in_specs,
        out_specs=pl.BlockSpec((B, NUM_CLASS), lambda i: (0, 0)),
        compiler_params=pltpu.CompilerParams(
            dimension_semantics=("arbitrary",)),
    )(*args)


# ----------------------------------------------------------------------------
# Parameters (deterministic init)
# ----------------------------------------------------------------------------
def init_params(key):
    keys = iter(jax.random.split(key, 64))

    def lin(kin, kout):
        bound = 1.0 / math.sqrt(kin)
        w = jax.random.uniform(next(keys), (kin, kout), jnp.float32, -bound, bound)
        b = jax.random.uniform(next(keys), (1, kout), jnp.float32, -bound, bound)
        return w, b

    # Fuse modality embeddings into one block-diagonal matmul.
    vis_w, vis_b = lin(VISUAL_DIM, D_MODEL)
    aud_w, aud_b = lin(AUDIO_DIM, D_MODEL)
    emb_w = jnp.zeros((VISUAL_DIM + AUDIO_DIM, 2 * D_MODEL), jnp.float32)
    emb_w = emb_w.at[:VISUAL_DIM, :D_MODEL].set(vis_w)
    emb_w = emb_w.at[VISUAL_DIM:, D_MODEL:].set(aud_w)
    emb_b = jnp.concatenate([vis_b, aud_b], axis=-1)

    pos = 0.02 * jax.random.normal(next(keys), (S, D_MODEL), jnp.float32)
    summary = 0.02 * jax.random.normal(
        next(keys), (NUM_SUMMARY, D_MODEL), jnp.float32)

    scale = 1.0 / math.sqrt(D_MODEL // NHEAD)
    stacks = {k: [] for k in ["wqkv", "bqkv", "wo", "bo", "ln1_g", "ln1_b",
                              "w1", "b1", "w2", "b2", "ln2_g", "ln2_b"]}
    for _ in range(NUM_LAYERS):
        wq, bq = lin(D_MODEL, D_MODEL)
        wk, bk = lin(D_MODEL, D_MODEL)
        wv, bv = lin(D_MODEL, D_MODEL)
        # fold 1/sqrt(d_head) into the Q projection (weights AND bias)
        stacks["wqkv"].append(jnp.concatenate([wq * scale, wk, wv], axis=1))
        stacks["bqkv"].append(jnp.concatenate([bq * scale, bk, bv], axis=1))
        wo, bo = lin(D_MODEL, D_MODEL)
        stacks["wo"].append(wo)
        stacks["bo"].append(bo)
        stacks["ln1_g"].append(jnp.ones((1, D_MODEL), jnp.float32))
        stacks["ln1_b"].append(jnp.zeros((1, D_MODEL), jnp.float32))
        w1, b1 = lin(D_MODEL, DIM_FF)
        w2, b2 = lin(DIM_FF, D_MODEL)
        stacks["w1"].append(w1)
        stacks["b1"].append(b1)
        stacks["w2"].append(w2)
        stacks["b2"].append(b2)
        stacks["ln2_g"].append(jnp.ones((1, D_MODEL), jnp.float32))
        stacks["ln2_b"].append(jnp.zeros((1, D_MODEL), jnp.float32))

    fc_w, fc_b = lin(D_MODEL, NUM_CLASS)

    # Matmul weights in bf16 (MXU inputs); biases / LN params / softmax stay f32.
    bf16_keys = {"wqkv", "wo", "w1", "w2"}
    params = {"emb_w": emb_w.astype(jnp.bfloat16), "emb_b": emb_b,
              "pos": pos, "summary": summary,
              "fc_w": fc_w.astype(jnp.bfloat16), "fc_b": fc_b}
    for k, v in stacks.items():
        arr = jnp.stack(v)
        params[k] = arr.astype(jnp.bfloat16) if k in bf16_keys else arr
    return params


if __name__ == "__main__":
    key = jax.random.PRNGKey(0)
    pkey, xkey = jax.random.split(key)
    params = init_params(pkey)
    inputs = jax.random.normal(xkey, (BATCH, T, VISUAL_DIM + AUDIO_DIM),
                               jnp.float32)

    out = jax.jit(mtcn_av_forward)(params, inputs)
    out = jax.block_until_ready(out)
    assert out.shape == (BATCH, NUM_CLASS), out.shape
    assert bool(jnp.all(jnp.isfinite(out)))
    print("KERNEL_OK")
</pallas_src>

<mosaic_0001>
module attributes {stable_mosaic.version = 11 : i64} {
  func.func @_mtcn_fused_kernel(%arg0: i32, %arg1: memref<2x6x64xf32, #tpu.memory_space<vmem>>, %arg2: memref<64x64xbf16, #tpu.memory_space<vmem>>, %arg3: memref<1x64xf32, #tpu.memory_space<vmem>>, %arg4: memref<13x32xf32, #tpu.memory_space<vmem>>, %arg5: memref<1x32xf32, #tpu.memory_space<vmem>>, %arg6: memref<2x32x96xbf16, #tpu.memory_space<vmem>>, %arg7: memref<2x1x96xf32, #tpu.memory_space<vmem>>, %arg8: memref<2x32x32xbf16, #tpu.memory_space<vmem>>, %arg9: memref<2x1x32xf32, #tpu.memory_space<vmem>>, %arg10: memref<2x1x32xf32, #tpu.memory_space<vmem>>, %arg11: memref<2x1x32xf32, #tpu.memory_space<vmem>>, %arg12: memref<2x32x64xbf16, #tpu.memory_space<vmem>>, %arg13: memref<2x1x64xf32, #tpu.memory_space<vmem>>, %arg14: memref<2x64x32xbf16, #tpu.memory_space<vmem>>, %arg15: memref<2x1x32xf32, #tpu.memory_space<vmem>>, %arg16: memref<2x1x32xf32, #tpu.memory_space<vmem>>, %arg17: memref<2x1x32xf32, #tpu.memory_space<vmem>>, %arg18: memref<32x10xbf16, #tpu.memory_space<vmem>>, %arg19: memref<1x10xf32, #tpu.memory_space<vmem>>, %arg20: memref<2x10xf32, #tpu.memory_space<vmem>>) attributes {dimension_semantics = [#tpu.dimension_semantics<arbitrary>], iteration_bounds = array<i64: 1>, scalar_prefetch = 0 : i64, scratch_operands = 0 : i64, tpu.core_type = #tpu.core_type<tc>, window_params = [{pipeline_mode = #tpu.pipeline_mode<synchronous>, transform_indices = @transform_0, window_bounds = array<i64: 2, 6, 64>}, {pipeline_mode = #tpu.pipeline_mode<synchronous>, transform_indices = @transform_1, window_bounds = array<i64: 64, 64>}, {pipeline_mode = #tpu.pipeline_mode<synchronous>, transform_indices = @transform_2, window_bounds = array<i64: 1, 64>}, {pipeline_mode = #tpu.pipeline_mode<synchronous>, transform_indices = @transform_3, window_bounds = array<i64: 13, 32>}, {pipeline_mode = #tpu.pipeline_mode<synchronous>, transform_indices = @transform_4, window_bounds = array<i64: 1, 32>}, {pipeline_mode = #tpu.pipeline_mode<synchronous>, transform_indices = @transform_5, window_bounds = array<i64: 2, 32, 96>}, {pipeline_mode = #tpu.pipeline_mode<synchronous>, transform_indices = @transform_6, window_bounds = array<i64: 2, 1, 96>}, {pipeline_mode = #tpu.pipeline_mode<synchronous>, transform_indices = @transform_7, window_bounds = array<i64: 2, 32, 32>}, {pipeline_mode = #tpu.pipeline_mode<synchronous>, transform_indices = @transform_8, window_bounds = array<i64: 2, 1, 32>}, {pipeline_mode = #tpu.pipeline_mode<synchronous>, transform_indices = @transform_9, window_bounds = array<i64: 2, 1, 32>}, {pipeline_mode = #tpu.pipeline_mode<synchronous>, transform_indices = @transform_10, window_bounds = array<i64: 2, 1, 32>}, {pipeline_mode = #tpu.pipeline_mode<synchronous>, transform_indices = @transform_11, window_bounds = array<i64: 2, 32, 64>}, {pipeline_mode = #tpu.pipeline_mode<synchronous>, transform_indices = @transform_12, window_bounds = array<i64: 2, 1, 64>}, {pipeline_mode = #tpu.pipeline_mode<synchronous>, transform_indices = @transform_13, window_bounds = array<i64: 2, 64, 32>}, {pipeline_mode = #tpu.pipeline_mode<synchronous>, transform_indices = @transform_14, window_bounds = array<i64: 2, 1, 32>}, {pipeline_mode = #tpu.pipeline_mode<synchronous>, transform_indices = @transform_15, window_bounds = array<i64: 2, 1, 32>}, {pipeline_mode = #tpu.pipeline_mode<synchronous>, transform_indices = @transform_16, window_bounds = array<i64: 2, 1, 32>}, {pipeline_mode = #tpu.pipeline_mode<synchronous>, transform_indices = @transform_17, window_bounds = array<i64: 32, 10>}, {pipeline_mode = #tpu.pipeline_mode<synchronous>, transform_indices = @transform_18, window_bounds = array<i64: 1, 10>}, {pipeline_mode = #tpu.pipeline_mode<synchronous>, transform_indices = @transform_19, window_bounds = array<i64: 2, 10>}]} {
    %c0 = arith.constant 0 : index
    %c0_0 = arith.constant 0 : index
    %0 = vector.load %arg4[%c0, %c0_0] : memref<13x32xf32, #tpu.memory_space<vmem>>, vector<13x32xf32>
    %c0_1 = arith.constant 0 : index
    %c0_2 = arith.constant 0 : index
    %1 = vector.load %arg5[%c0_1, %c0_2] : memref<1x32xf32, #tpu.memory_space<vmem>>, vector<1x32xf32>
    %c0_3 = arith.constant 0 : index
    %c0_4 = arith.constant 0 : index
    %2 = vector.load %arg2[%c0_3, %c0_4] : memref<64x64xbf16, #tpu.memory_space<vmem>>, vector<64x64xbf16>
    %c0_5 = arith.constant 0 : index
    %c0_6 = arith.constant 0 : index
    %3 = vector.load %arg3[%c0_5, %c0_6] : memref<1x64xf32, #tpu.memory_space<vmem>>, vector<1x64xf32>
    %c0_7 = arith.constant 0 : index
    %c0_8 = arith.constant 0 : index
    %c0_9 = arith.constant 0 : index
    %4 = vector.load %arg1[%c0_7, %c0_8, %c0_9] : memref<2x6x64xf32, #tpu.memory_space<vmem>>, vector<1x6x64xf32>
    %5 = vector.shape_cast %4 : vector<1x6x64xf32> to vector<6x64xf32>
    %6 = arith.truncf %5 : vector<6x64xf32> to vector<6x64xbf16>
    %cst = arith.constant dense<0.000000e+00> : vector<6x64xf32>
    %7 = tpu.matmul %6, %2, %cst {dimension_numbers = #tpu.dot_dimension_numbers<[1], [0], [0], [1], [0, 0, 1, 1], [], []>} : vector<6x64xbf16>, vector<64x64xbf16>, vector<6x64xf32> -> vector<6x64xf32>
    %8 = vector.broadcast %3 : vector<1x64xf32> to vector<6x64xf32>
    %9 = arith.addf %7, %8 : vector<6x64xf32>
    %10 = vector.extract_strided_slice %9 {offsets = [0, 0], sizes = [6, 32], strides = [1, 1]} : vector<6x64xf32> to vector<6x32xf32>
    %11 = vector.extract_strided_slice %9 {offsets = [0, 32], sizes = [6, 32], strides = [1, 1]} : vector<6x64xf32> to vector<6x32xf32>
    %12 = tpu.concatenate %10, %11, %1 in 0 : vector<6x32xf32>, vector<6x32xf32>, vector<1x32xf32> -> vector<13x32xf32>
    %13 = arith.addf %12, %0 : vector<13x32xf32>
    %14 = arith.truncf %13 : vector<13x32xf32> to vector<13x32xbf16>
    %c0_10 = arith.constant 0 : index
    %c0_11 = arith.constant 0 : index
    %c0_12 = arith.constant 0 : index
    %15 = vector.load %arg6[%c0_10, %c0_11, %c0_12] : memref<2x32x96xbf16, #tpu.memory_space<vmem>>, vector<1x32x96xbf16>
    %16 = vector.shape_cast %15 : vector<1x32x96xbf16> to vector<32x96xbf16>
    %cst_13 = arith.constant dense<0.000000e+00> : vector<13x96xf32>
    %17 = tpu.matmul %14, %16, %cst_13 {dimension_numbers = #tpu.dot_dimension_numbers<[1], [0], [0], [1], [0, 0, 1, 1], [], []>} : vector<13x32xbf16>, vector<32x96xbf16>, vector<13x96xf32> -> vector<13x96xf32>
    %c0_14 = arith.constant 0 : index
    %c0_15 = arith.constant 0 : index
    %c0_16 = arith.constant 0 : index
    %18 = vector.load %arg7[%c0_14, %c0_15, %c0_16] : memref<2x1x96xf32, #tpu.memory_space<vmem>>, vector<1x1x96xf32>
    %19 = vector.shape_cast %18 : vector<1x1x96xf32> to vector<1x96xf32>
    %20 = vector.broadcast %19 : vector<1x96xf32> to vector<13x96xf32>
    %21 = arith.addf %17, %20 : vector<13x96xf32>
    %22 = vector.extract_strided_slice %21 {offsets = [0, 0], sizes = [13, 32], strides = [1, 1]} : vector<13x96xf32> to vector<13x32xf32>
    %23 = vector.extract_strided_slice %21 {offsets = [0, 32], sizes = [13, 32], strides = [1, 1]} : vector<13x96xf32> to vector<13x32xf32>
    %24 = vector.extract_strided_slice %21 {offsets = [0, 64], sizes = [13, 32], strides = [1, 1]} : vector<13x96xf32> to vector<13x32xf32>
    %c0_17 = arith.constant 0 : index
    %c0_18 = arith.constant 0 : index
    %c0_19 = arith.constant 0 : index
    %25 = vector.load %arg8[%c0_17, %c0_18, %c0_19] : memref<2x32x32xbf16, #tpu.memory_space<vmem>>, vector<1x32x32xbf16>
    %26 = vector.shape_cast %25 : vector<1x32x32xbf16> to vector<32x32xbf16>
    %cst_20 = arith.constant 0.000000e+00 : f32
    %27 = vector.broadcast %cst_20 : f32 to vector<13x32xf32>
    %28 = vector.extract_strided_slice %22 {offsets = [0, 0], sizes = [13, 8], strides = [1, 1]} : vector<13x32xf32> to vector<13x8xf32>
    %29 = vector.extract_strided_slice %23 {offsets = [0, 0], sizes = [13, 8], strides = [1, 1]} : vector<13x32xf32> to vector<13x8xf32>
    %30 = vector.extract_strided_slice %24 {offsets = [0, 0], sizes = [13, 8], strides = [1, 1]} : vector<13x32xf32> to vector<13x8xf32>
    %31 = arith.truncf %28 : vector<13x8xf32> to vector<13x8xbf16>
    %32 = tpu.transpose %29, [1, 0] : vector<13x8xf32> -> vector<8x13xf32>
    %33 = arith.truncf %32 : vector<8x13xf32> to vector<8x13xbf16>
    %cst_21 = arith.constant dense<0.000000e+00> : vector<13x13xf32>
    %34 = tpu.matmul %31, %33, %cst_21 {dimension_numbers = #tpu.dot_dimension_numbers<[1], [0], [0], [1], [0, 0, 1, 1], [], []>} : vector<13x8xbf16>, vector<8x13xbf16>, vector<13x13xf32> -> vector<13x13xf32>
    %cst_22 = arith.constant dense<0xFF800000> : vector<13xf32>
    %35 = vector.multi_reduction <maximumf>, %34, %cst_22 [1] : vector<13x13xf32> to vector<13xf32>
    %36 = vector.shape_cast %35 : vector<13xf32> to vector<13x1xf32>
    %37 = vector.broadcast %36 : vector<13x1xf32> to vector<13x13xf32>
    %38 = arith.subf %34, %37 : vector<13x13xf32>
    %39 = math.exp %38 : vector<13x13xf32>
    %cst_23 = arith.constant dense<0.000000e+00> : vector<13xf32>
    %40 = vector.multi_reduction <add>, %39, %cst_23 [1] : vector<13x13xf32> to vector<13xf32>
    %41 = vector.shape_cast %40 : vector<13xf32> to vector<13x1xf32>
    %42 = tpu.reciprocal %41 {approx = true} : vector<13x1xf32> -> vector<13x1xf32>
    %43 = vector.broadcast %42 : vector<13x1xf32> to vector<13x13xf32>
    %44 = arith.mulf %39, %43 : vector<13x13xf32>
    %45 = arith.truncf %44 : vector<13x13xf32> to vector<13x13xbf16>
    %46 = arith.truncf %30 : vector<13x8xf32> to vector<13x8xbf16>
    %cst_24 = arith.constant dense<0.000000e+00> : vector<13x8xf32>
    %47 = tpu.matmul %45, %46, %cst_24 {dimension_numbers = #tpu.dot_dimension_numbers<[1], [0], [0], [1], [0, 0, 1, 1], [], []>} : vector<13x13xbf16>, vector<13x8xbf16>, vector<13x8xf32> -> vector<13x8xf32>
    %48 = arith.truncf %47 : vector<13x8xf32> to vector<13x8xbf16>
    %49 = vector.extract_strided_slice %26 {offsets = [0, 0], sizes = [8, 32], strides = [1, 1]} : vector<32x32xbf16> to vector<8x32xbf16>
    %cst_25 = arith.constant dense<0.000000e+00> : vector<13x32xf32>
    %50 = tpu.matmul %48, %49, %cst_25 {dimension_numbers = #tpu.dot_dimension_numbers<[1], [0], [0], [1], [0, 0, 1, 1], [], []>} : vector<13x8xbf16>, vector<8x32xbf16>, vector<13x32xf32> -> vector<13x32xf32>
    %51 = arith.addf %27, %50 : vector<13x32xf32>
    %52 = vector.extract_strided_slice %22 {offsets = [0, 8], sizes = [13, 8], strides = [1, 1]} : vector<13x32xf32> to vector<13x8xf32>
    %53 = vector.extract_strided_slice %23 {offsets = [0, 8], sizes = [13, 8], strides = [1, 1]} : vector<13x32xf32> to vector<13x8xf32>
    %54 = vector.extract_strided_slice %24 {offsets = [0, 8], sizes = [13, 8], strides = [1, 1]} : vector<13x32xf32> to vector<13x8xf32>
    %55 = arith.truncf %52 : vector<13x8xf32> to vector<13x8xbf16>
    %56 = tpu.transpose %53, [1, 0] : vector<13x8xf32> -> vector<8x13xf32>
    %57 = arith.truncf %56 : vector<8x13xf32> to vector<8x13xbf16>
    %cst_26 = arith.constant dense<0.000000e+00> : vector<13x13xf32>
    %58 = tpu.matmul %55, %57, %cst_26 {dimension_numbers = #tpu.dot_dimension_numbers<[1], [0], [0], [1], [0, 0, 1, 1], [], []>} : vector<13x8xbf16>, vector<8x13xbf16>, vector<13x13xf32> -> vector<13x13xf32>
    %cst_27 = arith.constant dense<0xFF800000> : vector<13xf32>
    %59 = vector.multi_reduction <maximumf>, %58, %cst_27 [1] : vector<13x13xf32> to vector<13xf32>
    %60 = vector.shape_cast %59 : vector<13xf32> to vector<13x1xf32>
    %61 = vector.broadcast %60 : vector<13x1xf32> to vector<13x13xf32>
    %62 = arith.subf %58, %61 : vector<13x13xf32>
    %63 = math.exp %62 : vector<13x13xf32>
    %cst_28 = arith.constant dense<0.000000e+00> : vector<13xf32>
    %64 = vector.multi_reduction <add>, %63, %cst_28 [1] : vector<13x13xf32> to vector<13xf32>
    %65 = vector.shape_cast %64 : vector<13xf32> to vector<13x1xf32>
    %66 = tpu.reciprocal %65 {approx = true} : vector<13x1xf32> -> vector<13x1xf32>
    %67 = vector.broadcast %66 : vector<13x1xf32> to vector<13x13xf32>
    %68 = arith.mulf %63, %67 : vector<13x13xf32>
    %69 = arith.truncf %68 : vector<13x13xf32> to vector<13x13xbf16>
    %70 = arith.truncf %54 : vector<13x8xf32> to vector<13x8xbf16>
    %cst_29 = arith.constant dense<0.000000e+00> : vector<13x8xf32>
    %71 = tpu.matmul %69, %70, %cst_29 {dimension_numbers = #tpu.dot_dimension_numbers<[1], [0], [0], [1], [0, 0, 1, 1], [], []>} : vector<13x13xbf16>, vector<13x8xbf16>, vector<13x8xf32> -> vector<13x8xf32>
    %72 = arith.truncf %71 : vector<13x8xf32> to vector<13x8xbf16>
    %73 = vector.extract_strided_slice %26 {offsets = [8, 0], sizes = [8, 32], strides = [1, 1]} : vector<32x32xbf16> to vector<8x32xbf16>
    %cst_30 = arith.constant dense<0.000000e+00> : vector<13x32xf32>
    %74 = tpu.matmul %72, %73, %cst_30 {dimension_numbers = #tpu.dot_dimension_numbers<[1], [0], [0], [1], [0, 0, 1, 1], [], []>} : vector<13x8xbf16>, vector<8x32xbf16>, vector<13x32xf32> -> vector<13x32xf32>
    %75 = arith.addf %51, %74 : vector<13x32xf32>
    %76 = vector.extract_strided_slice %22 {offsets = [0, 16], sizes = [13, 8], strides = [1, 1]} : vector<13x32xf32> to vector<13x8xf32>
    %77 = vector.extract_strided_slice %23 {offsets = [0, 16], sizes = [13, 8], strides = [1, 1]} : vector<13x32xf32> to vector<13x8xf32>
    %78 = vector.extract_strided_slice %24 {offsets = [0, 16], sizes = [13, 8], strides = [1, 1]} : vector<13x32xf32> to vector<13x8xf32>
    %79 = arith.truncf %76 : vector<13x8xf32> to vector<13x8xbf16>
    %80 = tpu.transpose %77, [1, 0] : vector<13x8xf32> -> vector<8x13xf32>
    %81 = arith.truncf %80 : vector<8x13xf32> to vector<8x13xbf16>
    %cst_31 = arith.constant dense<0.000000e+00> : vector<13x13xf32>
    %82 = tpu.matmul %79, %81, %cst_31 {dimension_numbers = #tpu.dot_dimension_numbers<[1], [0], [0], [1], [0, 0, 1, 1], [], []>} : vector<13x8xbf16>, vector<8x13xbf16>, vector<13x13xf32> -> vector<13x13xf32>
    %cst_32 = arith.constant dense<0xFF800000> : vector<13xf32>
    %83 = vector.multi_reduction <maximumf>, %82, %cst_32 [1] : vector<13x13xf32> to vector<13xf32>
    %84 = vector.shape_cast %83 : vector<13xf32> to vector<13x1xf32>
    %85 = vector.broadcast %84 : vector<13x1xf32> to vector<13x13xf32>
    %86 = arith.subf %82, %85 : vector<13x13xf32>
    %87 = math.exp %86 : vector<13x13xf32>
    %cst_33 = arith.constant dense<0.000000e+00> : vector<13xf32>
    %88 = vector.multi_reduction <add>, %87, %cst_33 [1] : vector<13x13xf32> to vector<13xf32>
    %89 = vector.shape_cast %88 : vector<13xf32> to vector<13x1xf32>
    %90 = tpu.reciprocal %89 {approx = true} : vector<13x1xf32> -> vector<13x1xf32>
    %91 = vector.broadcast %90 : vector<13x1xf32> to vector<13x13xf32>
    %92 = arith.mulf %87, %91 : vector<13x13xf32>
    %93 = arith.truncf %92 : vector<13x13xf32> to vector<13x13xbf16>
    %94 = arith.truncf %78 : vector<13x8xf32> to vector<13x8xbf16>
    %cst_34 = arith.constant dense<0.000000e+00> : vector<13x8xf32>
    %95 = tpu.matmul %93, %94, %cst_34 {dimension_numbers = #tpu.dot_dimension_numbers<[1], [0], [0], [1], [0, 0, 1, 1], [], []>} : vector<13x13xbf16>, vector<13x8xbf16>, vector<13x8xf32> -> vector<13x8xf32>
    %96 = arith.truncf %95 : vector<13x8xf32> to vector<13x8xbf16>
    %97 = vector.extract_strided_slice %26 {offsets = [16, 0], sizes = [8, 32], strides = [1, 1]} : vector<32x32xbf16> to vector<8x32xbf16>
    %cst_35 = arith.constant dense<0.000000e+00> : vector<13x32xf32>
    %98 = tpu.matmul %96, %97, %cst_35 {dimension_numbers = #tpu.dot_dimension_numbers<[1], [0], [0], [1], [0, 0, 1, 1], [], []>} : vector<13x8xbf16>, vector<8x32xbf16>, vector<13x32xf32> -> vector<13x32xf32>
    %99 = arith.addf %75, %98 : vector<13x32xf32>
    %100 = vector.extract_strided_slice %22 {offsets = [0, 24], sizes = [13, 8], strides = [1, 1]} : vector<13x32xf32> to vector<13x8xf32>
    %101 = vector.extract_strided_slice %23 {offsets = [0, 24], sizes = [13, 8], strides = [1, 1]} : vector<13x32xf32> to vector<13x8xf32>
    %102 = vector.extract_strided_slice %24 {offsets = [0, 24], sizes = [13, 8], strides = [1, 1]} : vector<13x32xf32> to vector<13x8xf32>
    %103 = arith.truncf %100 : vector<13x8xf32> to vector<13x8xbf16>
    %104 = tpu.transpose %101, [1, 0] : vector<13x8xf32> -> vector<8x13xf32>
    %105 = arith.truncf %104 : vector<8x13xf32> to vector<8x13xbf16>
    %cst_36 = arith.constant dense<0.000000e+00> : vector<13x13xf32>
    %106 = tpu.matmul %103, %105, %cst_36 {dimension_numbers = #tpu.dot_dimension_numbers<[1], [0], [0], [1], [0, 0, 1, 1], [], []>} : vector<13x8xbf16>, vector<8x13xbf16>, vector<13x13xf32> -> vector<13x13xf32>
    %cst_37 = arith.constant dense<0xFF800000> : vector<13xf32>
    %107 = vector.multi_reduction <maximumf>, %106, %cst_37 [1] : vector<13x13xf32> to vector<13xf32>
    %108 = vector.shape_cast %107 : vector<13xf32> to vector<13x1xf32>
    %109 = vector.broadcast %108 : vector<13x1xf32> to vector<13x13xf32>
    %110 = arith.subf %106, %109 : vector<13x13xf32>
    %111 = math.exp %110 : vector<13x13xf32>
    %cst_38 = arith.constant dense<0.000000e+00> : vector<13xf32>
    %112 = vector.multi_reduction <add>, %111, %cst_38 [1] : vector<13x13xf32> to vector<13xf32>
    %113 = vector.shape_cast %112 : vector<13xf32> to vector<13x1xf32>
    %114 = tpu.reciprocal %113 {approx = true} : vector<13x1xf32> -> vector<13x1xf32>
    %115 = vector.broadcast %114 : vector<13x1xf32> to vector<13x13xf32>
    %116 = arith.mulf %111, %115 : vector<13x13xf32>
    %117 = arith.truncf %116 : vector<13x13xf32> to vector<13x13xbf16>
    %118 = arith.truncf %102 : vector<13x8xf32> to vector<13x8xbf16>
    %cst_39 = arith.constant dense<0.000000e+00> : vector<13x8xf32>
    %119 = tpu.matmul %117, %118, %cst_39 {dimension_numbers = #tpu.dot_dimension_numbers<[1], [0], [0], [1], [0, 0, 1, 1], [], []>} : vector<13x13xbf16>, vector<13x8xbf16>, vector<13x8xf32> -> vector<13x8xf32>
    %120 = arith.truncf %119 : vector<13x8xf32> to vector<13x8xbf16>
    %121 = vector.extract_strided_slice %26 {offsets = [24, 0], sizes = [8, 32], strides = [1, 1]} : vector<32x32xbf16> to vector<8x32xbf16>
    %cst_40 = arith.constant dense<0.000000e+00> : vector<13x32xf32>
    %122 = tpu.matmul %120, %121, %cst_40 {dimension_numbers = #tpu.dot_dimension_numbers<[1], [0], [0], [1], [0, 0, 1, 1], [], []>} : vector<13x8xbf16>, vector<8x32xbf16>, vector<13x32xf32> -> vector<13x32xf32>
    %123 = arith.addf %99, %122 : vector<13x32xf32>
    %c0_41 = arith.constant 0 : index
    %c0_42 = arith.constant 0 : index
    %c0_43 = arith.constant 0 : index
    %124 = vector.load %arg9[%c0_41, %c0_42, %c0_43] : memref<2x1x32xf32, #tpu.memory_space<vmem>>, vector<1x1x32xf32>
    %125 = vector.shape_cast %124 : vector<1x1x32xf32> to vector<1x32xf32>
    %126 = vector.broadcast %125 : vector<1x32xf32> to vector<13x32xf32>
    %127 = arith.addf %123, %126 : vector<13x32xf32>
    %128 = arith.addf %13, %127 : vector<13x32xf32>
    %c0_44 = arith.constant 0 : index
    %c0_45 = arith.constant 0 : index
    %c0_46 = arith.constant 0 : index
    %129 = vector.load %arg10[%c0_44, %c0_45, %c0_46] : memref<2x1x32xf32, #tpu.memory_space<vmem>>, vector<1x1x32xf32>
    %130 = vector.shape_cast %129 : vector<1x1x32xf32> to vector<1x32xf32>
    %c0_47 = arith.constant 0 : index
    %c0_48 = arith.constant 0 : index
    %c0_49 = arith.constant 0 : index
    %131 = vector.load %arg11[%c0_47, %c0_48, %c0_49] : memref<2x1x32xf32, #tpu.memory_space<vmem>>, vector<1x1x32xf32>
    %132 = vector.shape_cast %131 : vector<1x1x32xf32> to vector<1x32xf32>
    %cst_50 = arith.constant dense<0.000000e+00> : vector<13xf32>
    %133 = vector.multi_reduction <add>, %128, %cst_50 [1] : vector<13x32xf32> to vector<13xf32>
    %134 = vector.shape_cast %133 : vector<13xf32> to vector<13x1xf32>
    %cst_51 = arith.constant 3.200000e+01 : f32
    %135 = vector.broadcast %cst_51 : f32 to vector<13x1xf32>
    %136 = arith.divf %134, %135 : vector<13x1xf32>
    %137 = vector.broadcast %136 : vector<13x1xf32> to vector<13x32xf32>
    %138 = arith.subf %128, %137 : vector<13x32xf32>
    %139 = arith.mulf %138, %138 : vector<13x32xf32>
    %cst_52 = arith.constant dense<0.000000e+00> : vector<13xf32>
    %140 = vector.multi_reduction <add>, %139, %cst_52 [1] : vector<13x32xf32> to vector<13xf32>
    %141 = vector.shape_cast %140 : vector<13xf32> to vector<13x1xf32>
    %cst_53 = arith.constant 3.200000e+01 : f32
    %142 = vector.broadcast %cst_53 : f32 to vector<13x1xf32>
    %143 = arith.divf %141, %142 : vector<13x1xf32>
    %144 = vector.broadcast %136 : vector<13x1xf32> to vector<13x32xf32>
    %145 = arith.subf %128, %144 : vector<13x32xf32>
    %cst_54 = arith.constant 9.99999974E-6 : f32
    %146 = vector.broadcast %cst_54 : f32 to vector<13x1xf32>
    %147 = arith.addf %143, %146 : vector<13x1xf32>
    %148 = math.rsqrt %147 : vector<13x1xf32>
    %149 = vector.broadcast %148 : vector<13x1xf32> to vector<13x32xf32>
    %150 = arith.mulf %145, %149 : vector<13x32xf32>
    %151 = vector.broadcast %130 : vector<1x32xf32> to vector<13x32xf32>
    %152 = arith.mulf %150, %151 : vector<13x32xf32>
    %153 = vector.broadcast %132 : vector<1x32xf32> to vector<13x32xf32>
    %154 = arith.addf %152, %153 : vector<13x32xf32>
    %155 = arith.truncf %154 : vector<13x32xf32> to vector<13x32xbf16>
    %c0_55 = arith.constant 0 : index
    %c0_56 = arith.constant 0 : index
    %c0_57 = arith.constant 0 : index
    %156 = vector.load %arg12[%c0_55, %c0_56, %c0_57] : memref<2x32x64xbf16, #tpu.memory_space<vmem>>, vector<1x32x64xbf16>
    %157 = vector.shape_cast %156 : vector<1x32x64xbf16> to vector<32x64xbf16>
    %cst_58 = arith.constant dense<0.000000e+00> : vector<13x64xf32>
    %158 = tpu.matmul %155, %157, %cst_58 {dimension_numbers = #tpu.dot_dimension_numbers<[1], [0], [0], [1], [0, 0, 1, 1], [], []>} : vector<13x32xbf16>, vector<32x64xbf16>, vector<13x64xf32> -> vector<13x64xf32>
    %c0_59 = arith.constant 0 : index
    %c0_60 = arith.constant 0 : index
    %c0_61 = arith.constant 0 : index
    %159 = vector.load %arg13[%c0_59, %c0_60, %c0_61] : memref<2x1x64xf32, #tpu.memory_space<vmem>>, vector<1x1x64xf32>
    %160 = vector.shape_cast %159 : vector<1x1x64xf32> to vector<1x64xf32>
    %161 = vector.broadcast %160 : vector<1x64xf32> to vector<13x64xf32>
    %162 = arith.addf %158, %161 : vector<13x64xf32>
    %cst_62 = arith.constant 0.000000e+00 : f32
    %163 = vector.broadcast %cst_62 : f32 to vector<13x64xf32>
    %164 = arith.maximumf %162, %163 : vector<13x64xf32>
    %165 = arith.truncf %164 : vector<13x64xf32> to vector<13x64xbf16>
    %c0_63 = arith.constant 0 : index
    %c0_64 = arith.constant 0 : index
    %c0_65 = arith.constant 0 : index
    %166 = vector.load %arg14[%c0_63, %c0_64, %c0_65] : memref<2x64x32xbf16, #tpu.memory_space<vmem>>, vector<1x64x32xbf16>
    %167 = vector.shape_cast %166 : vector<1x64x32xbf16> to vector<64x32xbf16>
    %cst_66 = arith.constant dense<0.000000e+00> : vector<13x32xf32>
    %168 = tpu.matmul %165, %167, %cst_66 {dimension_numbers = #tpu.dot_dimension_numbers<[1], [0], [0], [1], [0, 0, 1, 1], [], []>} : vector<13x64xbf16>, vector<64x32xbf16>, vector<13x32xf32> -> vector<13x32xf32>
    %c0_67 = arith.constant 0 : index
    %c0_68 = arith.constant 0 : index
    %c0_69 = arith.constant 0 : index
    %169 = vector.load %arg15[%c0_67, %c0_68, %c0_69] : memref<2x1x32xf32, #tpu.memory_space<vmem>>, vector<1x1x32xf32>
    %170 = vector.shape_cast %169 : vector<1x1x32xf32> to vector<1x32xf32>
    %171 = vector.broadcast %170 : vector<1x32xf32> to vector<13x32xf32>
    %172 = arith.addf %168, %171 : vector<13x32xf32>
    %173 = arith.addf %154, %172 : vector<13x32xf32>
    %c0_70 = arith.constant 0 : index
    %c0_71 = arith.constant 0 : index
    %c0_72 = arith.constant 0 : index
    %174 = vector.load %arg16[%c0_70, %c0_71, %c0_72] : memref<2x1x32xf32, #tpu.memory_space<vmem>>, vector<1x1x32xf32>
    %175 = vector.shape_cast %174 : vector<1x1x32xf32> to vector<1x32xf32>
    %c0_73 = arith.constant 0 : index
    %c0_74 = arith.constant 0 : index
    %c0_75 = arith.constant 0 : index
    %176 = vector.load %arg17[%c0_73, %c0_74, %c0_75] : memref<2x1x32xf32, #tpu.memory_space<vmem>>, vector<1x1x32xf32>
    %177 = vector.shape_cast %176 : vector<1x1x32xf32> to vector<1x32xf32>
    %cst_76 = arith.constant dense<0.000000e+00> : vector<13xf32>
    %178 = vector.multi_reduction <add>, %173, %cst_76 [1] : vector<13x32xf32> to vector<13xf32>
    %179 = vector.shape_cast %178 : vector<13xf32> to vector<13x1xf32>
    %cst_77 = arith.constant 3.200000e+01 : f32
    %180 = vector.broadcast %cst_77 : f32 to vector<13x1xf32>
    %181 = arith.divf %179, %180 : vector<13x1xf32>
    %182 = vector.broadcast %181 : vector<13x1xf32> to vector<13x32xf32>
    %183 = arith.subf %173, %182 : vector<13x32xf32>
    %184 = arith.mulf %183, %183 : vector<13x32xf32>
    %cst_78 = arith.constant dense<0.000000e+00> : vector<13xf32>
    %185 = vector.multi_reduction <add>, %184, %cst_78 [1] : vector<13x32xf32> to vector<13xf32>
    %186 = vector.shape_cast %185 : vector<13xf32> to vector<13x1xf32>
    %cst_79 = arith.constant 3.200000e+01 : f32
    %187 = vector.broadcast %cst_79 : f32 to vector<13x1xf32>
    %188 = arith.divf %186, %187 : vector<13x1xf32>
    %189 = vector.broadcast %181 : vector<13x1xf32> to vector<13x32xf32>
    %190 = arith.subf %173, %189 : vector<13x32xf32>
    %cst_80 = arith.constant 9.99999974E-6 : f32
    %191 = vector.broadcast %cst_80 : f32 to vector<13x1xf32>
    %192 = arith.addf %188, %191 : vector<13x1xf32>
    %193 = math.rsqrt %192 : vector<13x1xf32>
    %194 = vector.broadcast %193 : vector<13x1xf32> to vector<13x32xf32>
    %195 = arith.mulf %190, %194 : vector<13x32xf32>
    %196 = vector.broadcast %175 : vector<1x32xf32> to vector<13x32xf32>
    %197 = arith.mulf %195, %196 : vector<13x32xf32>
    %198 = vector.broadcast %177 : vector<1x32xf32> to vector<13x32xf32>
    %199 = arith.addf %197, %198 : vector<13x32xf32>
    %200 = arith.truncf %199 : vector<13x32xf32> to vector<13x32xbf16>
    %c1 = arith.constant 1 : index
    %c0_81 = arith.constant 0 : index
    %c0_82 = arith.constant 0 : index
    %201 = vector.load %arg6[%c1, %c0_81, %c0_82] : memref<2x32x96xbf16, #tpu.memory_space<vmem>>, vector<1x32x96xbf16>
    %202 = vector.shape_cast %201 : vector<1x32x96xbf16> to vector<32x96xbf16>
    %cst_83 = arith.constant dense<0.000000e+00> : vector<13x96xf32>
    %203 = tpu.matmul %200, %202, %cst_83 {dimension_numbers = #tpu.dot_dimension_numbers<[1], [0], [0], [1], [0, 0, 1, 1], [], []>} : vector<13x32xbf16>, vector<32x96xbf16>, vector<13x96xf32> -> vector<13x96xf32>
    %c1_84 = arith.constant 1 : index
    %c0_85 = arith.constant 0 : index
    %c0_86 = arith.constant 0 : index
    %204 = vector.load %arg7[%c1_84, %c0_85, %c0_86] : memref<2x1x96xf32, #tpu.memory_space<vmem>>, vector<1x1x96xf32>
    %205 = vector.shape_cast %204 : vector<1x1x96xf32> to vector<1x96xf32>
    %206 = vector.broadcast %205 : vector<1x96xf32> to vector<13x96xf32>
    %207 = arith.addf %203, %206 : vector<13x96xf32>
    %208 = vector.extract_strided_slice %207 {offsets = [0, 0], sizes = [13, 32], strides = [1, 1]} : vector<13x96xf32> to vector<13x32xf32>
    %209 = vector.extract_strided_slice %207 {offsets = [0, 32], sizes = [13, 32], strides = [1, 1]} : vector<13x96xf32> to vector<13x32xf32>
    %210 = vector.extract_strided_slice %207 {offsets = [0, 64], sizes = [13, 32], strides = [1, 1]} : vector<13x96xf32> to vector<13x32xf32>
    %c1_87 = arith.constant 1 : index
    %c0_88 = arith.constant 0 : index
    %c0_89 = arith.constant 0 : index
    %211 = vector.load %arg8[%c1_87, %c0_88, %c0_89] : memref<2x32x32xbf16, #tpu.memory_space<vmem>>, vector<1x32x32xbf16>
    %212 = vector.shape_cast %211 : vector<1x32x32xbf16> to vector<32x32xbf16>
    %cst_90 = arith.constant 0.000000e+00 : f32
    %213 = vector.broadcast %cst_90 : f32 to vector<13x32xf32>
    %214 = vector.extract_strided_slice %208 {offsets = [0, 0], sizes = [13, 8], strides = [1, 1]} : vector<13x32xf32> to vector<13x8xf32>
    %215 = vector.extract_strided_slice %209 {offsets = [0, 0], sizes = [13, 8], strides = [1, 1]} : vector<13x32xf32> to vector<13x8xf32>
    %216 = vector.extract_strided_slice %210 {offsets = [0, 0], sizes = [13, 8], strides = [1, 1]} : vector<13x32xf32> to vector<13x8xf32>
    %217 = arith.truncf %214 : vector<13x8xf32> to vector<13x8xbf16>
    %218 = tpu.transpose %215, [1, 0] : vector<13x8xf32> -> vector<8x13xf32>
    %219 = arith.truncf %218 : vector<8x13xf32> to vector<8x13xbf16>
    %cst_91 = arith.constant dense<0.000000e+00> : vector<13x13xf32>
    %220 = tpu.matmul %217, %219, %cst_91 {dimension_numbers = #tpu.dot_dimension_numbers<[1], [0], [0], [1], [0, 0, 1, 1], [], []>} : vector<13x8xbf16>, vector<8x13xbf16>, vector<13x13xf32> -> vector<13x13xf32>
    %cst_92 = arith.constant dense<0xFF800000> : vector<13xf32>
    %221 = vector.multi_reduction <maximumf>, %220, %cst_92 [1] : vector<13x13xf32> to vector<13xf32>
    %222 = vector.shape_cast %221 : vector<13xf32> to vector<13x1xf32>
    %223 = vector.broadcast %222 : vector<13x1xf32> to vector<13x13xf32>
    %224 = arith.subf %220, %223 : vector<13x13xf32>
    %225 = math.exp %224 : vector<13x13xf32>
    %cst_93 = arith.constant dense<0.000000e+00> : vector<13xf32>
    %226 = vector.multi_reduction <add>, %225, %cst_93 [1] : vector<13x13xf32> to vector<13xf32>
    %227 = vector.shape_cast %226 : vector<13xf32> to vector<13x1xf32>
    %228 = tpu.reciprocal %227 {approx = true} : vector<13x1xf32> -> vector<13x1xf32>
    %229 = vector.broadcast %228 : vector<13x1xf32> to vector<13x13xf32>
    %230 = arith.mulf %225, %229 : vector<13x13xf32>
    %231 = arith.truncf %230 : vector<13x13xf32> to vector<13x13xbf16>
    %232 = arith.truncf %216 : vector<13x8xf32> to vector<13x8xbf16>
    %cst_94 = arith.constant dense<0.000000e+00> : vector<13x8xf32>
    %233 = tpu.matmul %231, %232, %cst_94 {dimension_numbers = #tpu.dot_dimension_numbers<[1], [0], [0], [1], [0, 0, 1, 1], [], []>} : vector<13x13xbf16>, vector<13x8xbf16>, vector<13x8xf32> -> vector<13x8xf32>
    %234 = arith.truncf %233 : vector<13x8xf32> to vector<13x8xbf16>
    %235 = vector.extract_strided_slice %212 {offsets = [0, 0], sizes = [8, 32], strides = [1, 1]} : vector<32x32xbf16> to vector<8x32xbf16>
    %cst_95 = arith.constant dense<0.000000e+00> : vector<13x32xf32>
    %236 = tpu.matmul %234, %235, %cst_95 {dimension_numbers = #tpu.dot_dimension_numbers<[1], [0], [0], [1], [0, 0, 1, 1], [], []>} : vector<13x8xbf16>, vector<8x32xbf16>, vector<13x32xf32> -> vector<13x32xf32>
    %237 = arith.addf %213, %236 : vector<13x32xf32>
    %238 = vector.extract_strided_slice %208 {offsets = [0, 8], sizes = [13, 8], strides = [1, 1]} : vector<13x32xf32> to vector<13x8xf32>
    %239 = vector.extract_strided_slice %209 {offsets = [0, 8], sizes = [13, 8], strides = [1, 1]} : vector<13x32xf32> to vector<13x8xf32>
    %240 = vector.extract_strided_slice %210 {offsets = [0, 8], sizes = [13, 8], strides = [1, 1]} : vector<13x32xf32> to vector<13x8xf32>
    %241 = arith.truncf %238 : vector<13x8xf32> to vector<13x8xbf16>
    %242 = tpu.transpose %239, [1, 0] : vector<13x8xf32> -> vector<8x13xf32>
    %243 = arith.truncf %242 : vector<8x13xf32> to vector<8x13xbf16>
    %cst_96 = arith.constant dense<0.000000e+00> : vector<13x13xf32>
    %244 = tpu.matmul %241, %243, %cst_96 {dimension_numbers = #tpu.dot_dimension_numbers<[1], [0], [0], [1], [0, 0, 1, 1], [], []>} : vector<13x8xbf16>, vector<8x13xbf16>, vector<13x13xf32> -> vector<13x13xf32>
    %cst_97 = arith.constant dense<0xFF800000> : vector<13xf32>
    %245 = vector.multi_reduction <maximumf>, %244, %cst_97 [1] : vector<13x13xf32> to vector<13xf32>
    %246 = vector.shape_cast %245 : vector<13xf32> to vector<13x1xf32>
    %247 = vector.broadcast %246 : vector<13x1xf32> to vector<13x13xf32>
    %248 = arith.subf %244, %247 : vector<13x13xf32>
    %249 = math.exp %248 : vector<13x13xf32>
    %cst_98 = arith.constant dense<0.000000e+00> : vector<13xf32>
    %250 = vector.multi_reduction <add>, %249, %cst_98 [1] : vector<13x13xf32> to vector<13xf32>
    %251 = vector.shape_cast %250 : vector<13xf32> to vector<13x1xf32>
    %252 = tpu.reciprocal %251 {approx = true} : vector<13x1xf32> -> vector<13x1xf32>
    %253 = vector.broadcast %252 : vector<13x1xf32> to vector<13x13xf32>
    %254 = arith.mulf %249, %253 : vector<13x13xf32>
    %255 = arith.truncf %254 : vector<13x13xf32> to vector<13x13xbf16>
    %256 = arith.truncf %240 : vector<13x8xf32> to vector<13x8xbf16>
    %cst_99 = arith.constant dense<0.000000e+00> : vector<13x8xf32>
    %257 = tpu.matmul %255, %256, %cst_99 {dimension_numbers = #tpu.dot_dimension_numbers<[1], [0], [0], [1], [0, 0, 1, 1], [], []>} : vector<13x13xbf16>, vector<13x8xbf16>, vector<13x8xf32> -> vector<13x8xf32>
    %258 = arith.truncf %257 : vector<13x8xf32> to vector<13x8xbf16>
    %259 = vector.extract_strided_slice %212 {offsets = [8, 0], sizes = [8, 32], strides = [1, 1]} : vector<32x32xbf16> to vector<8x32xbf16>
    %cst_100 = arith.constant dense<0.000000e+00> : vector<13x32xf32>
    %260 = tpu.matmul %258, %259, %cst_100 {dimension_numbers = #tpu.dot_dimension_numbers<[1], [0], [0], [1], [0, 0, 1, 1], [], []>} : vector<13x8xbf16>, vector<8x32xbf16>, vector<13x32xf32> -> vector<13x32xf32>
    %261 = arith.addf %237, %260 : vector<13x32xf32>
    %262 = vector.extract_strided_slice %208 {offsets = [0, 16], sizes = [13, 8], strides = [1, 1]} : vector<13x32xf32> to vector<13x8xf32>
    %263 = vector.extract_strided_slice %209 {offsets = [0, 16], sizes = [13, 8], strides = [1, 1]} : vector<13x32xf32> to vector<13x8xf32>
    %264 = vector.extract_strided_slice %210 {offsets = [0, 16], sizes = [13, 8], strides = [1, 1]} : vector<13x32xf32> to vector<13x8xf32>
    %265 = arith.truncf %262 : vector<13x8xf32> to vector<13x8xbf16>
    %266 = tpu.transpose %263, [1, 0] : vector<13x8xf32> -> vector<8x13xf32>
    %267 = arith.truncf %266 : vector<8x13xf32> to vector<8x13xbf16>
    %cst_101 = arith.constant dense<0.000000e+00> : vector<13x13xf32>
    %268 = tpu.matmul %265, %267, %cst_101 {dimension_numbers = #tpu.dot_dimension_numbers<[1], [0], [0], [1], [0, 0, 1, 1], [], []>} : vector<13x8xbf16>, vector<8x13xbf16>, vector<13x13xf32> -> vector<13x13xf32>
    %cst_102 = arith.constant dense<0xFF800000> : vector<13xf32>
    %269 = vector.multi_reduction <maximumf>, %268, %cst_102 [1] : vector<13x13xf32> to vector<13xf32>
    %270 = vector.shape_cast %269 : vector<13xf32> to vector<13x1xf32>
    %271 = vector.broadcast %270 : vector<13x1xf32> to vector<13x13xf32>
    %272 = arith.subf %268, %271 : vector<13x13xf32>
    %273 = math.exp %272 : vector<13x13xf32>
    %cst_103 = arith.constant dense<0.000000e+00> : vector<13xf32>
    %274 = vector.multi_reduction <add>, %273, %cst_103 [1] : vector<13x13xf32> to vector<13xf32>
    %275 = vector.shape_cast %274 : vector<13xf32> to vector<13x1xf32>
    %276 = tpu.reciprocal %275 {approx = true} : vector<13x1xf32> -> vector<13x1xf32>
    %277 = vector.broadcast %276 : vector<13x1xf32> to vector<13x13xf32>
    %278 = arith.mulf %273, %277 : vector<13x13xf32>
    %279 = arith.truncf %278 : vector<13x13xf32> to vector<13x13xbf16>
    %280 = arith.truncf %264 : vector<13x8xf32> to vector<13x8xbf16>
    %cst_104 = arith.constant dense<0.000000e+00> : vector<13x8xf32>
    %281 = tpu.matmul %279, %280, %cst_104 {dimension_numbers = #tpu.dot_dimension_numbers<[1], [0], [0], [1], [0, 0, 1, 1], [], []>} : vector<13x13xbf16>, vector<13x8xbf16>, vector<13x8xf32> -> vector<13x8xf32>
    %282 = arith.truncf %281 : vector<13x8xf32> to vector<13x8xbf16>
    %283 = vector.extract_strided_slice %212 {offsets = [16, 0], sizes = [8, 32], strides = [1, 1]} : vector<32x32xbf16> to vector<8x32xbf16>
    %cst_105 = arith.constant dense<0.000000e+00> : vector<13x32xf32>
    %284 = tpu.matmul %282, %283, %cst_105 {dimension_numbers = #tpu.dot_dimension_numbers<[1], [0], [0], [1], [0, 0, 1, 1], [], []>} : vector<13x8xbf16>, vector<8x32xbf16>, vector<13x32xf32> -> vector<13x32xf32>
    %285 = arith.addf %261, %284 : vector<13x32xf32>
    %286 = vector.extract_strided_slice %208 {offsets = [0, 24], sizes = [13, 8], strides = [1, 1]} : vector<13x32xf32> to vector<13x8xf32>
    %287 = vector.extract_strided_slice %209 {offsets = [0, 24], sizes = [13, 8], strides = [1, 1]} : vector<13x32xf32> to vector<13x8xf32>
    %288 = vector.extract_strided_slice %210 {offsets = [0, 24], sizes = [13, 8], strides = [1, 1]} : vector<13x32xf32> to vector<13x8xf32>
    %289 = arith.truncf %286 : vector<13x8xf32> to vector<13x8xbf16>
    %290 = tpu.transpose %287, [1, 0] : vector<13x8xf32> -> vector<8x13xf32>
    %291 = arith.truncf %290 : vector<8x13xf32> to vector<8x13xbf16>
    %cst_106 = arith.constant dense<0.000000e+00> : vector<13x13xf32>
    %292 = tpu.matmul %289, %291, %cst_106 {dimension_numbers = #tpu.dot_dimension_numbers<[1], [0], [0], [1], [0, 0, 1, 1], [], []>} : vector<13x8xbf16>, vector<8x13xbf16>, vector<13x13xf32> -> vector<13x13xf32>
    %cst_107 = arith.constant dense<0xFF800000> : vector<13xf32>
    %293 = vector.multi_reduction <maximumf>, %292, %cst_107 [1] : vector<13x13xf32> to vector<13xf32>
    %294 = vector.shape_cast %293 : vector<13xf32> to vector<13x1xf32>
    %295 = vector.broadcast %294 : vector<13x1xf32> to vector<13x13xf32>
    %296 = arith.subf %292, %295 : vector<13x13xf32>
    %297 = math.exp %296 : vector<13x13xf32>
    %cst_108 = arith.constant dense<0.000000e+00> : vector<13xf32>
    %298 = vector.multi_reduction <add>, %297, %cst_108 [1] : vector<13x13xf32> to vector<13xf32>
    %299 = vector.shape_cast %298 : vector<13xf32> to vector<13x1xf32>
    %300 = tpu.reciprocal %299 {approx = true} : vector<13x1xf32> -> vector<13x1xf32>
    %301 = vector.broadcast %300 : vector<13x1xf32> to vector<13x13xf32>
    %302 = arith.mulf %297, %301 : vector<13x13xf32>
    %303 = arith.truncf %302 : vector<13x13xf32> to vector<13x13xbf16>
    %304 = arith.truncf %288 : vector<13x8xf32> to vector<13x8xbf16>
    %cst_109 = arith.constant dense<0.000000e+00> : vector<13x8xf32>
    %305 = tpu.matmul %303, %304, %cst_109 {dimension_numbers = #tpu.dot_dimension_numbers<[1], [0], [0], [1], [0, 0, 1, 1], [], []>} : vector<13x13xbf16>, vector<13x8xbf16>, vector<13x8xf32> -> vector<13x8xf32>
    %306 = arith.truncf %305 : vector<13x8xf32> to vector<13x8xbf16>
    %307 = vector.extract_strided_slice %212 {offsets = [24, 0], sizes = [8, 32], strides = [1, 1]} : vector<32x32xbf16> to vector<8x32xbf16>
    %cst_110 = arith.constant dense<0.000000e+00> : vector<13x32xf32>
    %308 = tpu.matmul %306, %307, %cst_110 {dimension_numbers = #tpu.dot_dimension_numbers<[1], [0], [0], [1], [0, 0, 1, 1], [], []>} : vector<13x8xbf16>, vector<8x32xbf16>, vector<13x32xf32> -> vector<13x32xf32>
    %309 = arith.addf %285, %308 : vector<13x32xf32>
    %c1_111 = arith.constant 1 : index
    %c0_112 = arith.constant 0 : index
    %c0_113 = arith.constant 0 : index
    %310 = vector.load %arg9[%c1_111, %c0_112, %c0_113] : memref<2x1x32xf32, #tpu.memory_space<vmem>>, vector<1x1x32xf32>
    %311 = vector.shape_cast %310 : vector<1x1x32xf32> to vector<1x32xf32>
    %312 = vector.broadcast %311 : vector<1x32xf32> to vector<13x32xf32>
    %313 = arith.addf %309, %312 : vector<13x32xf32>
    %314 = arith.addf %199, %313 : vector<13x32xf32>
    %c1_114 = arith.constant 1 : index
    %c0_115 = arith.constant 0 : index
    %c0_116 = arith.constant 0 : index
    %315 = vector.load %arg10[%c1_114, %c0_115, %c0_116] : memref<2x1x32xf32, #tpu.memory_space<vmem>>, vector<1x1x32xf32>
    %316 = vector.shape_cast %315 : vector<1x1x32xf32> to vector<1x32xf32>
    %c1_117 = arith.constant 1 : index
    %c0_118 = arith.constant 0 : index
    %c0_119 = arith.constant 0 : index
    %317 = vector.load %arg11[%c1_117, %c0_118, %c0_119] : memref<2x1x32xf32, #tpu.memory_space<vmem>>, vector<1x1x32xf32>
    %318 = vector.shape_cast %317 : vector<1x1x32xf32> to vector<1x32xf32>
    %cst_120 = arith.constant dense<0.000000e+00> : vector<13xf32>
    %319 = vector.multi_reduction <add>, %314, %cst_120 [1] : vector<13x32xf32> to vector<13xf32>
    %320 = vector.shape_cast %319 : vector<13xf32> to vector<13x1xf32>
    %cst_121 = arith.constant 3.200000e+01 : f32
    %321 = vector.broadcast %cst_121 : f32 to vector<13x1xf32>
    %322 = arith.divf %320, %321 : vector<13x1xf32>
    %323 = vector.broadcast %322 : vector<13x1xf32> to vector<13x32xf32>
    %324 = arith.subf %314, %323 : vector<13x32xf32>
    %325 = arith.mulf %324, %324 : vector<13x32xf32>
    %cst_122 = arith.constant dense<0.000000e+00> : vector<13xf32>
    %326 = vector.multi_reduction <add>, %325, %cst_122 [1] : vector<13x32xf32> to vector<13xf32>
    %327 = vector.shape_cast %326 : vector<13xf32> to vector<13x1xf32>
    %cst_123 = arith.constant 3.200000e+01 : f32
    %328 = vector.broadcast %cst_123 : f32 to vector<13x1xf32>
    %329 = arith.divf %327, %328 : vector<13x1xf32>
    %330 = vector.broadcast %322 : vector<13x1xf32> to vector<13x32xf32>
    %331 = arith.subf %314, %330 : vector<13x32xf32>
    %cst_124 = arith.constant 9.99999974E-6 : f32
    %332 = vector.broadcast %cst_124 : f32 to vector<13x1xf32>
    %333 = arith.addf %329, %332 : vector<13x1xf32>
    %334 = math.rsqrt %333 : vector<13x1xf32>
    %335 = vector.broadcast %334 : vector<13x1xf32> to vector<13x32xf32>
    %336 = arith.mulf %331, %335 : vector<13x32xf32>
    %337 = vector.broadcast %316 : vector<1x32xf32> to vector<13x32xf32>
    %338 = arith.mulf %336, %337 : vector<13x32xf32>
    %339 = vector.broadcast %318 : vector<1x32xf32> to vector<13x32xf32>
    %340 = arith.addf %338, %339 : vector<13x32xf32>
    %341 = arith.truncf %340 : vector<13x32xf32> to vector<13x32xbf16>
    %c1_125 = arith.constant 1 : index
    %c0_126 = arith.constant 0 : index
    %c0_127 = arith.constant 0 : index
    %342 = vector.load %arg12[%c1_125, %c0_126, %c0_127] : memref<2x32x64xbf16, #tpu.memory_space<vmem>>, vector<1x32x64xbf16>
    %343 = vector.shape_cast %342 : vector<1x32x64xbf16> to vector<32x64xbf16>
    %cst_128 = arith.constant dense<0.000000e+00> : vector<13x64xf32>
    %344 = tpu.matmul %341, %343, %cst_128 {dimension_numbers = #tpu.dot_dimension_numbers<[1], [0], [0], [1], [0, 0, 1, 1], [], []>} : vector<13x32xbf16>, vector<32x64xbf16>, vector<13x64xf32> -> vector<13x64xf32>
    %c1_129 = arith.constant 1 : index
    %c0_130 = arith.constant 0 : index
    %c0_131 = arith.constant 0 : index
    %345 = vector.load %arg13[%c1_129, %c0_130, %c0_131] : memref<2x1x64xf32, #tpu.memory_space<vmem>>, vector<1x1x64xf32>
    %346 = vector.shape_cast %345 : vector<1x1x64xf32> to vector<1x64xf32>
    %347 = vector.broadcast %346 : vector<1x64xf32> to vector<13x64xf32>
    %348 = arith.addf %344, %347 : vector<13x64xf32>
    %cst_132 = arith.constant 0.000000e+00 : f32
    %349 = vector.broadcast %cst_132 : f32 to vector<13x64xf32>
    %350 = arith.maximumf %348, %349 : vector<13x64xf32>
    %351 = arith.truncf %350 : vector<13x64xf32> to vector<13x64xbf16>
    %c1_133 = arith.constant 1 : index
    %c0_134 = arith.constant 0 : index
    %c0_135 = arith.constant 0 : index
    %352 = vector.load %arg14[%c1_133, %c0_134, %c0_135] : memref<2x64x32xbf16, #tpu.memory_space<vmem>>, vector<1x64x32xbf16>
    %353 = vector.shape_cast %352 : vector<1x64x32xbf16> to vector<64x32xbf16>
    %cst_136 = arith.constant dense<0.000000e+00> : vector<13x32xf32>
    %354 = tpu.matmul %351, %353, %cst_136 {dimension_numbers = #tpu.dot_dimension_numbers<[1], [0], [0], [1], [0, 0, 1, 1], [], []>} : vector<13x64xbf16>, vector<64x32xbf16>, vector<13x32xf32> -> vector<13x32xf32>
    %c1_137 = arith.constant 1 : index
    %c0_138 = arith.constant 0 : index
    %c0_139 = arith.constant 0 : index
    %355 = vector.load %arg15[%c1_137, %c0_138, %c0_139] : memref<2x1x32xf32, #tpu.memory_space<vmem>>, vector<1x1x32xf32>
    %356 = vector.shape_cast %355 : vector<1x1x32xf32> to vector<1x32xf32>
    %357 = vector.broadcast %356 : vector<1x32xf32> to vector<13x32xf32>
    %358 = arith.addf %354, %357 : vector<13x32xf32>
    %359 = arith.addf %340, %358 : vector<13x32xf32>
    %c1_140 = arith.constant 1 : index
    %c0_141 = arith.constant 0 : index
    %c0_142 = arith.constant 0 : index
    %360 = vector.load %arg16[%c1_140, %c0_141, %c0_142] : memref<2x1x32xf32, #tpu.memory_space<vmem>>, vector<1x1x32xf32>
    %361 = vector.shape_cast %360 : vector<1x1x32xf32> to vector<1x32xf32>
    %c1_143 = arith.constant 1 : index
    %c0_144 = arith.constant 0 : index
    %c0_145 = arith.constant 0 : index
    %362 = vector.load %arg17[%c1_143, %c0_144, %c0_145] : memref<2x1x32xf32, #tpu.memory_space<vmem>>, vector<1x1x32xf32>
    %363 = vector.shape_cast %362 : vector<1x1x32xf32> to vector<1x32xf32>
    %cst_146 = arith.constant dense<0.000000e+00> : vector<13xf32>
    %364 = vector.multi_reduction <add>, %359, %cst_146 [1] : vector<13x32xf32> to vector<13xf32>
    %365 = vector.shape_cast %364 : vector<13xf32> to vector<13x1xf32>
    %cst_147 = arith.constant 3.200000e+01 : f32
    %366 = vector.broadcast %cst_147 : f32 to vector<13x1xf32>
    %367 = arith.divf %365, %366 : vector<13x1xf32>
    %368 = vector.broadcast %367 : vector<13x1xf32> to vector<13x32xf32>
    %369 = arith.subf %359, %368 : vector<13x32xf32>
    %370 = arith.mulf %369, %369 : vector<13x32xf32>
    %cst_148 = arith.constant dense<0.000000e+00> : vector<13xf32>
    %371 = vector.multi_reduction <add>, %370, %cst_148 [1] : vector<13x32xf32> to vector<13xf32>
    %372 = vector.shape_cast %371 : vector<13xf32> to vector<13x1xf32>
    %cst_149 = arith.constant 3.200000e+01 : f32
    %373 = vector.broadcast %cst_149 : f32 to vector<13x1xf32>
    %374 = arith.divf %372, %373 : vector<13x1xf32>
    %375 = vector.broadcast %367 : vector<13x1xf32> to vector<13x32xf32>
    %376 = arith.subf %359, %375 : vector<13x32xf32>
    %cst_150 = arith.constant 9.99999974E-6 : f32
    %377 = vector.broadcast %cst_150 : f32 to vector<13x1xf32>
    %378 = arith.addf %374, %377 : vector<13x1xf32>
    %379 = math.rsqrt %378 : vector<13x1xf32>
    %380 = vector.broadcast %379 : vector<13x1xf32> to vector<13x32xf32>
    %381 = arith.mulf %376, %380 : vector<13x32xf32>
    %382 = vector.broadcast %361 : vector<1x32xf32> to vector<13x32xf32>
    %383 = arith.mulf %381, %382 : vector<13x32xf32>
    %384 = vector.broadcast %363 : vector<1x32xf32> to vector<13x32xf32>
    %385 = arith.addf %383, %384 : vector<13x32xf32>
    %386 = vector.extract_strided_slice %385 {offsets = [12, 0], sizes = [1, 32], strides = [1, 1]} : vector<13x32xf32> to vector<1x32xf32>
    %c1_151 = arith.constant 1 : index
    %c0_152 = arith.constant 0 : index
    %c0_153 = arith.constant 0 : index
    %387 = vector.load %arg1[%c1_151, %c0_152, %c0_153] : memref<2x6x64xf32, #tpu.memory_space<vmem>>, vector<1x6x64xf32>
    %388 = vector.shape_cast %387 : vector<1x6x64xf32> to vector<6x64xf32>
    %389 = arith.truncf %388 : vector<6x64xf32> to vector<6x64xbf16>
    %cst_154 = arith.constant dense<0.000000e+00> : vector<6x64xf32>
    %390 = tpu.matmul %389, %2, %cst_154 {dimension_numbers = #tpu.dot_dimension_numbers<[1], [0], [0], [1], [0, 0, 1, 1], [], []>} : vector<6x64xbf16>, vector<64x64xbf16>, vector<6x64xf32> -> vector<6x64xf32>
    %391 = vector.broadcast %3 : vector<1x64xf32> to vector<6x64xf32>
    %392 = arith.addf %390, %391 : vector<6x64xf32>
    %393 = vector.extract_strided_slice %392 {offsets = [0, 0], sizes = [6, 32], strides = [1, 1]} : vector<6x64xf32> to vector<6x32xf32>
    %394 = vector.extract_strided_slice %392 {offsets = [0, 32], sizes = [6, 32], strides = [1, 1]} : vector<6x64xf32> to vector<6x32xf32>
    %395 = tpu.concatenate %393, %394, %1 in 0 : vector<6x32xf32>, vector<6x32xf32>, vector<1x32xf32> -> vector<13x32xf32>
    %396 = arith.addf %395, %0 : vector<13x32xf32>
    %397 = arith.truncf %396 : vector<13x32xf32> to vector<13x32xbf16>
    %c0_155 = arith.constant 0 : index
    %c0_156 = arith.constant 0 : index
    %c0_157 = arith.constant 0 : index
    %398 = vector.load %arg6[%c0_155, %c0_156, %c0_157] : memref<2x32x96xbf16, #tpu.memory_space<vmem>>, vector<1x32x96xbf16>
    %399 = vector.shape_cast %398 : vector<1x32x96xbf16> to vector<32x96xbf16>
    %cst_158 = arith.constant dense<0.000000e+00> : vector<13x96xf32>
    %400 = tpu.matmul %397, %399, %cst_158 {dimension_numbers = #tpu.dot_dimension_numbers<[1], [0], [0], [1], [0, 0, 1, 1], [], []>} : vector<13x32xbf16>, vector<32x96xbf16>, vector<13x96xf32> -> vector<13x96xf32>
    %c0_159 = arith.constant 0 : index
    %c0_160 = arith.constant 0 : index
    %c0_161 = arith.constant 0 : index
    %401 = vector.load %arg7[%c0_159, %c0_160, %c0_161] : memref<2x1x96xf32, #tpu.memory_space<vmem>>, vector<1x1x96xf32>
    %402 = vector.shape_cast %401 : vector<1x1x96xf32> to vector<1x96xf32>
    %403 = vector.broadcast %402 : vector<1x96xf32> to vector<13x96xf32>
    %404 = arith.addf %400, %403 : vector<13x96xf32>
    %405 = vector.extract_strided_slice %404 {offsets = [0, 0], sizes = [13, 32], strides = [1, 1]} : vector<13x96xf32> to vector<13x32xf32>
    %406 = vector.extract_strided_slice %404 {offsets = [0, 32], sizes = [13, 32], strides = [1, 1]} : vector<13x96xf32> to vector<13x32xf32>
    %407 = vector.extract_strided_slice %404 {offsets = [0, 64], sizes = [13, 32], strides = [1, 1]} : vector<13x96xf32> to vector<13x32xf32>
    %c0_162 = arith.constant 0 : index
    %c0_163 = arith.constant 0 : index
    %c0_164 = arith.constant 0 : index
    %408 = vector.load %arg8[%c0_162, %c0_163, %c0_164] : memref<2x32x32xbf16, #tpu.memory_space<vmem>>, vector<1x32x32xbf16>
    %409 = vector.shape_cast %408 : vector<1x32x32xbf16> to vector<32x32xbf16>
    %cst_165 = arith.constant 0.000000e+00 : f32
    %410 = vector.broadcast %cst_165 : f32 to vector<13x32xf32>
    %411 = vector.extract_strided_slice %405 {offsets = [0, 0], sizes = [13, 8], strides = [1, 1]} : vector<13x32xf32> to vector<13x8xf32>
    %412 = vector.extract_strided_slice %406 {offsets = [0, 0], sizes = [13, 8], strides = [1, 1]} : vector<13x32xf32> to vector<13x8xf32>
    %413 = vector.extract_strided_slice %407 {offsets = [0, 0], sizes = [13, 8], strides = [1, 1]} : vector<13x32xf32> to vector<13x8xf32>
    %414 = arith.truncf %411 : vector<13x8xf32> to vector<13x8xbf16>
    %415 = tpu.transpose %412, [1, 0] : vector<13x8xf32> -> vector<8x13xf32>
    %416 = arith.truncf %415 : vector<8x13xf32> to vector<8x13xbf16>
    %cst_166 = arith.constant dense<0.000000e+00> : vector<13x13xf32>
    %417 = tpu.matmul %414, %416, %cst_166 {dimension_numbers = #tpu.dot_dimension_numbers<[1], [0], [0], [1], [0, 0, 1, 1], [], []>} : vector<13x8xbf16>, vector<8x13xbf16>, vector<13x13xf32> -> vector<13x13xf32>
    %cst_167 = arith.constant dense<0xFF800000> : vector<13xf32>
    %418 = vector.multi_reduction <maximumf>, %417, %cst_167 [1] : vector<13x13xf32> to vector<13xf32>
    %419 = vector.shape_cast %418 : vector<13xf32> to vector<13x1xf32>
    %420 = vector.broadcast %419 : vector<13x1xf32> to vector<13x13xf32>
    %421 = arith.subf %417, %420 : vector<13x13xf32>
    %422 = math.exp %421 : vector<13x13xf32>
    %cst_168 = arith.constant dense<0.000000e+00> : vector<13xf32>
    %423 = vector.multi_reduction <add>, %422, %cst_168 [1] : vector<13x13xf32> to vector<13xf32>
    %424 = vector.shape_cast %423 : vector<13xf32> to vector<13x1xf32>
    %425 = tpu.reciprocal %424 {approx = true} : vector<13x1xf32> -> vector<13x1xf32>
    %426 = vector.broadcast %425 : vector<13x1xf32> to vector<13x13xf32>
    %427 = arith.mulf %422, %426 : vector<13x13xf32>
    %428 = arith.truncf %427 : vector<13x13xf32> to vector<13x13xbf16>
    %429 = arith.truncf %413 : vector<13x8xf32> to vector<13x8xbf16>
    %cst_169 = arith.constant dense<0.000000e+00> : vector<13x8xf32>
    %430 = tpu.matmul %428, %429, %cst_169 {dimension_numbers = #tpu.dot_dimension_numbers<[1], [0], [0], [1], [0, 0, 1, 1], [], []>} : vector<13x13xbf16>, vector<13x8xbf16>, vector<13x8xf32> -> vector<13x8xf32>
    %431 = arith.truncf %430 : vector<13x8xf32> to vector<13x8xbf16>
    %432 = vector.extract_strided_slice %409 {offsets = [0, 0], sizes = [8, 32], strides = [1, 1]} : vector<32x32xbf16> to vector<8x32xbf16>
    %cst_170 = arith.constant dense<0.000000e+00> : vector<13x32xf32>
    %433 = tpu.matmul %431, %432, %cst_170 {dimension_numbers = #tpu.dot_dimension_numbers<[1], [0], [0], [1], [0, 0, 1, 1], [], []>} : vector<13x8xbf16>, vector<8x32xbf16>, vector<13x32xf32> -> vector<13x32xf32>
    %434 = arith.addf %410, %433 : vector<13x32xf32>
    %435 = vector.extract_strided_slice %405 {offsets = [0, 8], sizes = [13, 8], strides = [1, 1]} : vector<13x32xf32> to vector<13x8xf32>
    %436 = vector.extract_strided_slice %406 {offsets = [0, 8], sizes = [13, 8], strides = [1, 1]} : vector<13x32xf32> to vector<13x8xf32>
    %437 = vector.extract_strided_slice %407 {offsets = [0, 8], sizes = [13, 8], strides = [1, 1]} : vector<13x32xf32> to vector<13x8xf32>
    %438 = arith.truncf %435 : vector<13x8xf32> to vector<13x8xbf16>
    %439 = tpu.transpose %436, [1, 0] : vector<13x8xf32> -> vector<8x13xf32>
    %440 = arith.truncf %439 : vector<8x13xf32> to vector<8x13xbf16>
    %cst_171 = arith.constant dense<0.000000e+00> : vector<13x13xf32>
    %441 = tpu.matmul %438, %440, %cst_171 {dimension_numbers = #tpu.dot_dimension_numbers<[1], [0], [0], [1], [0, 0, 1, 1], [], []>} : vector<13x8xbf16>, vector<8x13xbf16>, vector<13x13xf32> -> vector<13x13xf32>
    %cst_172 = arith.constant dense<0xFF800000> : vector<13xf32>
    %442 = vector.multi_reduction <maximumf>, %441, %cst_172 [1] : vector<13x13xf32> to vector<13xf32>
    %443 = vector.shape_cast %442 : vector<13xf32> to vector<13x1xf32>
    %444 = vector.broadcast %443 : vector<13x1xf32> to vector<13x13xf32>
    %445 = arith.subf %441, %444 : vector<13x13xf32>
    %446 = math.exp %445 : vector<13x13xf32>
    %cst_173 = arith.constant dense<0.000000e+00> : vector<13xf32>
    %447 = vector.multi_reduction <add>, %446, %cst_173 [1] : vector<13x13xf32> to vector<13xf32>
    %448 = vector.shape_cast %447 : vector<13xf32> to vector<13x1xf32>
    %449 = tpu.reciprocal %448 {approx = true} : vector<13x1xf32> -> vector<13x1xf32>
    %450 = vector.broadcast %449 : vector<13x1xf32> to vector<13x13xf32>
    %451 = arith.mulf %446, %450 : vector<13x13xf32>
    %452 = arith.truncf %451 : vector<13x13xf32> to vector<13x13xbf16>
    %453 = arith.truncf %437 : vector<13x8xf32> to vector<13x8xbf16>
    %cst_174 = arith.constant dense<0.000000e+00> : vector<13x8xf32>
    %454 = tpu.matmul %452, %453, %cst_174 {dimension_numbers = #tpu.dot_dimension_numbers<[1], [0], [0], [1], [0, 0, 1, 1], [], []>} : vector<13x13xbf16>, vector<13x8xbf16>, vector<13x8xf32> -> vector<13x8xf32>
    %455 = arith.truncf %454 : vector<13x8xf32> to vector<13x8xbf16>
    %456 = vector.extract_strided_slice %409 {offsets = [8, 0], sizes = [8, 32], strides = [1, 1]} : vector<32x32xbf16> to vector<8x32xbf16>
    %cst_175 = arith.constant dense<0.000000e+00> : vector<13x32xf32>
    %457 = tpu.matmul %455, %456, %cst_175 {dimension_numbers = #tpu.dot_dimension_numbers<[1], [0], [0], [1], [0, 0, 1, 1], [], []>} : vector<13x8xbf16>, vector<8x32xbf16>, vector<13x32xf32> -> vector<13x32xf32>
    %458 = arith.addf %434, %457 : vector<13x32xf32>
    %459 = vector.extract_strided_slice %405 {offsets = [0, 16], sizes = [13, 8], strides = [1, 1]} : vector<13x32xf32> to vector<13x8xf32>
    %460 = vector.extract_strided_slice %406 {offsets = [0, 16], sizes = [13, 8], strides = [1, 1]} : vector<13x32xf32> to vector<13x8xf32>
    %461 = vector.extract_strided_slice %407 {offsets = [0, 16], sizes = [13, 8], strides = [1, 1]} : vector<13x32xf32> to vector<13x8xf32>
    %462 = arith.truncf %459 : vector<13x8xf32> to vector<13x8xbf16>
    %463 = tpu.transpose %460, [1, 0] : vector<13x8xf32> -> vector<8x13xf32>
    %464 = arith.truncf %463 : vector<8x13xf32> to vector<8x13xbf16>
    %cst_176 = arith.constant dense<0.000000e+00> : vector<13x13xf32>
    %465 = tpu.matmul %462, %464, %cst_176 {dimension_numbers = #tpu.dot_dimension_numbers<[1], [0], [0], [1], [0, 0, 1, 1], [], []>} : vector<13x8xbf16>, vector<8x13xbf16>, vector<13x13xf32> -> vector<13x13xf32>
    %cst_177 = arith.constant dense<0xFF800000> : vector<13xf32>
    %466 = vector.multi_reduction <maximumf>, %465, %cst_177 [1] : vector<13x13xf32> to vector<13xf32>
    %467 = vector.shape_cast %466 : vector<13xf32> to vector<13x1xf32>
    %468 = vector.broadcast %467 : vector<13x1xf32> to vector<13x13xf32>
    %469 = arith.subf %465, %468 : vector<13x13xf32>
    %470 = math.exp %469 : vector<13x13xf32>
    %cst_178 = arith.constant dense<0.000000e+00> : vector<13xf32>
    %471 = vector.multi_reduction <add>, %470, %cst_178 [1] : vector<13x13xf32> to vector<13xf32>
    %472 = vector.shape_cast %471 : vector<13xf32> to vector<13x1xf32>
    %473 = tpu.reciprocal %472 {approx = true} : vector<13x1xf32> -> vector<13x1xf32>
    %474 = vector.broadcast %473 : vector<13x1xf32> to vector<13x13xf32>
    %475 = arith.mulf %470, %474 : vector<13x13xf32>
    %476 = arith.truncf %475 : vector<13x13xf32> to vector<13x13xbf16>
    %477 = arith.truncf %461 : vector<13x8xf32> to vector<13x8xbf16>
    %cst_179 = arith.constant dense<0.000000e+00> : vector<13x8xf32>
    %478 = tpu.matmul %476, %477, %cst_179 {dimension_numbers = #tpu.dot_dimension_numbers<[1], [0], [0], [1], [0, 0, 1, 1], [], []>} : vector<13x13xbf16>, vector<13x8xbf16>, vector<13x8xf32> -> vector<13x8xf32>
    %479 = arith.truncf %478 : vector<13x8xf32> to vector<13x8xbf16>
    %480 = vector.extract_strided_slice %409 {offsets = [16, 0], sizes = [8, 32], strides = [1, 1]} : vector<32x32xbf16> to vector<8x32xbf16>
    %cst_180 = arith.constant dense<0.000000e+00> : vector<13x32xf32>
    %481 = tpu.matmul %479, %480, %cst_180 {dimension_numbers = #tpu.dot_dimension_numbers<[1], [0], [0], [1], [0, 0, 1, 1], [], []>} : vector<13x8xbf16>, vector<8x32xbf16>, vector<13x32xf32> -> vector<13x32xf32>
    %482 = arith.addf %458, %481 : vector<13x32xf32>
    %483 = vector.extract_strided_slice %405 {offsets = [0, 24], sizes = [13, 8], strides = [1, 1]} : vector<13x32xf32> to vector<13x8xf32>
    %484 = vector.extract_strided_slice %406 {offsets = [0, 24], sizes = [13, 8], strides = [1, 1]} : vector<13x32xf32> to vector<13x8xf32>
    %485 = vector.extract_strided_slice %407 {offsets = [0, 24], sizes = [13, 8], strides = [1, 1]} : vector<13x32xf32> to vector<13x8xf32>
    %486 = arith.truncf %483 : vector<13x8xf32> to vector<13x8xbf16>
    %487 = tpu.transpose %484, [1, 0] : vector<13x8xf32> -> vector<8x13xf32>
    %488 = arith.truncf %487 : vector<8x13xf32> to vector<8x13xbf16>
    %cst_181 = arith.constant dense<0.000000e+00> : vector<13x13xf32>
    %489 = tpu.matmul %486, %488, %cst_181 {dimension_numbers = #tpu.dot_dimension_numbers<[1], [0], [0], [1], [0, 0, 1, 1], [], []>} : vector<13x8xbf16>, vector<8x13xbf16>, vector<13x13xf32> -> vector<13x13xf32>
    %cst_182 = arith.constant dense<0xFF800000> : vector<13xf32>
    %490 = vector.multi_reduction <maximumf>, %489, %cst_182 [1] : vector<13x13xf32> to vector<13xf32>
    %491 = vector.shape_cast %490 : vector<13xf32> to vector<13x1xf32>
    %492 = vector.broadcast %491 : vector<13x1xf32> to vector<13x13xf32>
    %493 = arith.subf %489, %492 : vector<13x13xf32>
    %494 = math.exp %493 : vector<13x13xf32>
    %cst_183 = arith.constant dense<0.000000e+00> : vector<13xf32>
    %495 = vector.multi_reduction <add>, %494, %cst_183 [1] : vector<13x13xf32> to vector<13xf32>
    %496 = vector.shape_cast %495 : vector<13xf32> to vector<13x1xf32>
    %497 = tpu.reciprocal %496 {approx = true} : vector<13x1xf32> -> vector<13x1xf32>
    %498 = vector.broadcast %497 : vector<13x1xf32> to vector<13x13xf32>
    %499 = arith.mulf %494, %498 : vector<13x13xf32>
    %500 = arith.truncf %499 : vector<13x13xf32> to vector<13x13xbf16>
    %501 = arith.truncf %485 : vector<13x8xf32> to vector<13x8xbf16>
    %cst_184 = arith.constant dense<0.000000e+00> : vector<13x8xf32>
    %502 = tpu.matmul %500, %501, %cst_184 {dimension_numbers = #tpu.dot_dimension_numbers<[1], [0], [0], [1], [0, 0, 1, 1], [], []>} : vector<13x13xbf16>, vector<13x8xbf16>, vector<13x8xf32> -> vector<13x8xf32>
    %503 = arith.truncf %502 : vector<13x8xf32> to vector<13x8xbf16>
    %504 = vector.extract_strided_slice %409 {offsets = [24, 0], sizes = [8, 32], strides = [1, 1]} : vector<32x32xbf16> to vector<8x32xbf16>
    %cst_185 = arith.constant dense<0.000000e+00> : vector<13x32xf32>
    %505 = tpu.matmul %503, %504, %cst_185 {dimension_numbers = #tpu.dot_dimension_numbers<[1], [0], [0], [1], [0, 0, 1, 1], [], []>} : vector<13x8xbf16>, vector<8x32xbf16>, vector<13x32xf32> -> vector<13x32xf32>
    %506 = arith.addf %482, %505 : vector<13x32xf32>
    %c0_186 = arith.constant 0 : index
    %c0_187 = arith.constant 0 : index
    %c0_188 = arith.constant 0 : index
    %507 = vector.load %arg9[%c0_186, %c0_187, %c0_188] : memref<2x1x32xf32, #tpu.memory_space<vmem>>, vector<1x1x32xf32>
    %508 = vector.shape_cast %507 : vector<1x1x32xf32> to vector<1x32xf32>
    %509 = vector.broadcast %508 : vector<1x32xf32> to vector<13x32xf32>
    %510 = arith.addf %506, %509 : vector<13x32xf32>
    %511 = arith.addf %396, %510 : vector<13x32xf32>
    %c0_189 = arith.constant 0 : index
    %c0_190 = arith.constant 0 : index
    %c0_191 = arith.constant 0 : index
    %512 = vector.load %arg10[%c0_189, %c0_190, %c0_191] : memref<2x1x32xf32, #tpu.memory_space<vmem>>, vector<1x1x32xf32>
    %513 = vector.shape_cast %512 : vector<1x1x32xf32> to vector<1x32xf32>
    %c0_192 = arith.constant 0 : index
    %c0_193 = arith.constant 0 : index
    %c0_194 = arith.constant 0 : index
    %514 = vector.load %arg11[%c0_192, %c0_193, %c0_194] : memref<2x1x32xf32, #tpu.memory_space<vmem>>, vector<1x1x32xf32>
    %515 = vector.shape_cast %514 : vector<1x1x32xf32> to vector<1x32xf32>
    %cst_195 = arith.constant dense<0.000000e+00> : vector<13xf32>
    %516 = vector.multi_reduction <add>, %511, %cst_195 [1] : vector<13x32xf32> to vector<13xf32>
    %517 = vector.shape_cast %516 : vector<13xf32> to vector<13x1xf32>
    %cst_196 = arith.constant 3.200000e+01 : f32
    %518 = vector.broadcast %cst_196 : f32 to vector<13x1xf32>
    %519 = arith.divf %517, %518 : vector<13x1xf32>
    %520 = vector.broadcast %519 : vector<13x1xf32> to vector<13x32xf32>
    %521 = arith.subf %511, %520 : vector<13x32xf32>
    %522 = arith.mulf %521, %521 : vector<13x32xf32>
    %cst_197 = arith.constant dense<0.000000e+00> : vector<13xf32>
    %523 = vector.multi_reduction <add>, %522, %cst_197 [1] : vector<13x32xf32> to vector<13xf32>
    %524 = vector.shape_cast %523 : vector<13xf32> to vector<13x1xf32>
    %cst_198 = arith.constant 3.200000e+01 : f32
    %525 = vector.broadcast %cst_198 : f32 to vector<13x1xf32>
    %526 = arith.divf %524, %525 : vector<13x1xf32>
    %527 = vector.broadcast %519 : vector<13x1xf32> to vector<13x32xf32>
    %528 = arith.subf %511, %527 : vector<13x32xf32>
    %cst_199 = arith.constant 9.99999974E-6 : f32
    %529 = vector.broadcast %cst_199 : f32 to vector<13x1xf32>
    %530 = arith.addf %526, %529 : vector<13x1xf32>
    %531 = math.rsqrt %530 : vector<13x1xf32>
    %532 = vector.broadcast %531 : vector<13x1xf32> to vector<13x32xf32>
    %533 = arith.mulf %528, %532 : vector<13x32xf32>
    %534 = vector.broadcast %513 : vector<1x32xf32> to vector<13x32xf32>
    %535 = arith.mulf %533, %534 : vector<13x32xf32>
    %536 = vector.broadcast %515 : vector<1x32xf32> to vector<13x32xf32>
    %537 = arith.addf %535, %536 : vector<13x32xf32>
    %538 = arith.truncf %537 : vector<13x32xf32> to vector<13x32xbf16>
    %c0_200 = arith.constant 0 : index
    %c0_201 = arith.constant 0 : index
    %c0_202 = arith.constant 0 : index
    %539 = vector.load %arg12[%c0_200, %c0_201, %c0_202] : memref<2x32x64xbf16, #tpu.memory_space<vmem>>, vector<1x32x64xbf16>
    %540 = vector.shape_cast %539 : vector<1x32x64xbf16> to vector<32x64xbf16>
    %cst_203 = arith.constant dense<0.000000e+00> : vector<13x64xf32>
    %541 = tpu.matmul %538, %540, %cst_203 {dimension_numbers = #tpu.dot_dimension_numbers<[1], [0], [0], [1], [0, 0, 1, 1], [], []>} : vector<13x32xbf16>, vector<32x64xbf16>, vector<13x64xf32> -> vector<13x64xf32>
    %c0_204 = arith.constant 0 : index
    %c0_205 = arith.constant 0 : index
    %c0_206 = arith.constant 0 : index
    %542 = vector.load %arg13[%c0_204, %c0_205, %c0_206] : memref<2x1x64xf32, #tpu.memory_space<vmem>>, vector<1x1x64xf32>
    %543 = vector.shape_cast %542 : vector<1x1x64xf32> to vector<1x64xf32>
    %544 = vector.broadcast %543 : vector<1x64xf32> to vector<13x64xf32>
    %545 = arith.addf %541, %544 : vector<13x64xf32>
    %cst_207 = arith.constant 0.000000e+00 : f32
    %546 = vector.broadcast %cst_207 : f32 to vector<13x64xf32>
    %547 = arith.maximumf %545, %546 : vector<13x64xf32>
    %548 = arith.truncf %547 : vector<13x64xf32> to vector<13x64xbf16>
    %c0_208 = arith.constant 0 : index
    %c0_209 = arith.constant 0 : index
    %c0_210 = arith.constant 0 : index
    %549 = vector.load %arg14[%c0_208, %c0_209, %c0_210] : memref<2x64x32xbf16, #tpu.memory_space<vmem>>, vector<1x64x32xbf16>
    %550 = vector.shape_cast %549 : vector<1x64x32xbf16> to vector<64x32xbf16>
    %cst_211 = arith.constant dense<0.000000e+00> : vector<13x32xf32>
    %551 = tpu.matmul %548, %550, %cst_211 {dimension_numbers = #tpu.dot_dimension_numbers<[1], [0], [0], [1], [0, 0, 1, 1], [], []>} : vector<13x64xbf16>, vector<64x32xbf16>, vector<13x32xf32> -> vector<13x32xf32>
    %c0_212 = arith.constant 0 : index
    %c0_213 = arith.constant 0 : index
    %c0_214 = arith.constant 0 : index
    %552 = vector.load %arg15[%c0_212, %c0_213, %c0_214] : memref<2x1x32xf32, #tpu.memory_space<vmem>>, vector<1x1x32xf32>
    %553 = vector.shape_cast %552 : vector<1x1x32xf32> to vector<1x32xf32>
    %554 = vector.broadcast %553 : vector<1x32xf32> to vector<13x32xf32>
    %555 = arith.addf %551, %554 : vector<13x32xf32>
    %556 = arith.addf %537, %555 : vector<13x32xf32>
    %c0_215 = arith.constant 0 : index
    %c0_216 = arith.constant 0 : index
    %c0_217 = arith.constant 0 : index
    %557 = vector.load %arg16[%c0_215, %c0_216, %c0_217] : memref<2x1x32xf32, #tpu.memory_space<vmem>>, vector<1x1x32xf32>
    %558 = vector.shape_cast %557 : vector<1x1x32xf32> to vector<1x32xf32>
    %c0_218 = arith.constant 0 : index
    %c0_219 = arith.constant 0 : index
    %c0_220 = arith.constant 0 : index
    %559 = vector.load %arg17[%c0_218, %c0_219, %c0_220] : memref<2x1x32xf32, #tpu.memory_space<vmem>>, vector<1x1x32xf32>
    %560 = vector.shape_cast %559 : vector<1x1x32xf32> to vector<1x32xf32>
    %cst_221 = arith.constant dense<0.000000e+00> : vector<13xf32>
    %561 = vector.multi_reduction <add>, %556, %cst_221 [1] : vector<13x32xf32> to vector<13xf32>
    %562 = vector.shape_cast %561 : vector<13xf32> to vector<13x1xf32>
    %cst_222 = arith.constant 3.200000e+01 : f32
    %563 = vector.broadcast %cst_222 : f32 to vector<13x1xf32>
    %564 = arith.divf %562, %563 : vector<13x1xf32>
    %565 = vector.broadcast %564 : vector<13x1xf32> to vector<13x32xf32>
    %566 = arith.subf %556, %565 : vector<13x32xf32>
    %567 = arith.mulf %566, %566 : vector<13x32xf32>
    %cst_223 = arith.constant dense<0.000000e+00> : vector<13xf32>
    %568 = vector.multi_reduction <add>, %567, %cst_223 [1] : vector<13x32xf32> to vector<13xf32>
    %569 = vector.shape_cast %568 : vector<13xf32> to vector<13x1xf32>
    %cst_224 = arith.constant 3.200000e+01 : f32
    %570 = vector.broadcast %cst_224 : f32 to vector<13x1xf32>
    %571 = arith.divf %569, %570 : vector<13x1xf32>
    %572 = vector.broadcast %564 : vector<13x1xf32> to vector<13x32xf32>
    %573 = arith.subf %556, %572 : vector<13x32xf32>
    %cst_225 = arith.constant 9.99999974E-6 : f32
    %574 = vector.broadcast %cst_225 : f32 to vector<13x1xf32>
    %575 = arith.addf %571, %574 : vector<13x1xf32>
    %576 = math.rsqrt %575 : vector<13x1xf32>
    %577 = vector.broadcast %576 : vector<13x1xf32> to vector<13x32xf32>
    %578 = arith.mulf %573, %577 : vector<13x32xf32>
    %579 = vector.broadcast %558 : vector<1x32xf32> to vector<13x32xf32>
    %580 = arith.mulf %578, %579 : vector<13x32xf32>
    %581 = vector.broadcast %560 : vector<1x32xf32> to vector<13x32xf32>
    %582 = arith.addf %580, %581 : vector<13x32xf32>
    %583 = arith.truncf %582 : vector<13x32xf32> to vector<13x32xbf16>
    %c1_226 = arith.constant 1 : index
    %c0_227 = arith.constant 0 : index
    %c0_228 = arith.constant 0 : index
    %584 = vector.load %arg6[%c1_226, %c0_227, %c0_228] : memref<2x32x96xbf16, #tpu.memory_space<vmem>>, vector<1x32x96xbf16>
    %585 = vector.shape_cast %584 : vector<1x32x96xbf16> to vector<32x96xbf16>
    %cst_229 = arith.constant dense<0.000000e+00> : vector<13x96xf32>
    %586 = tpu.matmul %583, %585, %cst_229 {dimension_numbers = #tpu.dot_dimension_numbers<[1], [0], [0], [1], [0, 0, 1, 1], [], []>} : vector<13x32xbf16>, vector<32x96xbf16>, vector<13x96xf32> -> vector<13x96xf32>
    %c1_230 = arith.constant 1 : index
    %c0_231 = arith.constant 0 : index
    %c0_232 = arith.constant 0 : index
    %587 = vector.load %arg7[%c1_230, %c0_231, %c0_232] : memref<2x1x96xf32, #tpu.memory_space<vmem>>, vector<1x1x96xf32>
    %588 = vector.shape_cast %587 : vector<1x1x96xf32> to vector<1x96xf32>
    %589 = vector.broadcast %588 : vector<1x96xf32> to vector<13x96xf32>
    %590 = arith.addf %586, %589 : vector<13x96xf32>
    %591 = vector.extract_strided_slice %590 {offsets = [0, 0], sizes = [13, 32], strides = [1, 1]} : vector<13x96xf32> to vector<13x32xf32>
    %592 = vector.extract_strided_slice %590 {offsets = [0, 32], sizes = [13, 32], strides = [1, 1]} : vector<13x96xf32> to vector<13x32xf32>
    %593 = vector.extract_strided_slice %590 {offsets = [0, 64], sizes = [13, 32], strides = [1, 1]} : vector<13x96xf32> to vector<13x32xf32>
    %c1_233 = arith.constant 1 : index
    %c0_234 = arith.constant 0 : index
    %c0_235 = arith.constant 0 : index
    %594 = vector.load %arg8[%c1_233, %c0_234, %c0_235] : memref<2x32x32xbf16, #tpu.memory_space<vmem>>, vector<1x32x32xbf16>
    %595 = vector.shape_cast %594 : vector<1x32x32xbf16> to vector<32x32xbf16>
    %cst_236 = arith.constant 0.000000e+00 : f32
    %596 = vector.broadcast %cst_236 : f32 to vector<13x32xf32>
    %597 = vector.extract_strided_slice %591 {offsets = [0, 0], sizes = [13, 8], strides = [1, 1]} : vector<13x32xf32> to vector<13x8xf32>
    %598 = vector.extract_strided_slice %592 {offsets = [0, 0], sizes = [13, 8], strides = [1, 1]} : vector<13x32xf32> to vector<13x8xf32>
    %599 = vector.extract_strided_slice %593 {offsets = [0, 0], sizes = [13, 8], strides = [1, 1]} : vector<13x32xf32> to vector<13x8xf32>
    %600 = arith.truncf %597 : vector<13x8xf32> to vector<13x8xbf16>
    %601 = tpu.transpose %598, [1, 0] : vector<13x8xf32> -> vector<8x13xf32>
    %602 = arith.truncf %601 : vector<8x13xf32> to vector<8x13xbf16>
    %cst_237 = arith.constant dense<0.000000e+00> : vector<13x13xf32>
    %603 = tpu.matmul %600, %602, %cst_237 {dimension_numbers = #tpu.dot_dimension_numbers<[1], [0], [0], [1], [0, 0, 1, 1], [], []>} : vector<13x8xbf16>, vector<8x13xbf16>, vector<13x13xf32> -> vector<13x13xf32>
    %cst_238 = arith.constant dense<0xFF800000> : vector<13xf32>
    %604 = vector.multi_reduction <maximumf>, %603, %cst_238 [1] : vector<13x13xf32> to vector<13xf32>
    %605 = vector.shape_cast %604 : vector<13xf32> to vector<13x1xf32>
    %606 = vector.broadcast %605 : vector<13x1xf32> to vector<13x13xf32>
    %607 = arith.subf %603, %606 : vector<13x13xf32>
    %608 = math.exp %607 : vector<13x13xf32>
    %cst_239 = arith.constant dense<0.000000e+00> : vector<13xf32>
    %609 = vector.multi_reduction <add>, %608, %cst_239 [1] : vector<13x13xf32> to vector<13xf32>
    %610 = vector.shape_cast %609 : vector<13xf32> to vector<13x1xf32>
    %611 = tpu.reciprocal %610 {approx = true} : vector<13x1xf32> -> vector<13x1xf32>
    %612 = vector.broadcast %611 : vector<13x1xf32> to vector<13x13xf32>
    %613 = arith.mulf %608, %612 : vector<13x13xf32>
    %614 = arith.truncf %613 : vector<13x13xf32> to vector<13x13xbf16>
    %615 = arith.truncf %599 : vector<13x8xf32> to vector<13x8xbf16>
    %cst_240 = arith.constant dense<0.000000e+00> : vector<13x8xf32>
    %616 = tpu.matmul %614, %615, %cst_240 {dimension_numbers = #tpu.dot_dimension_numbers<[1], [0], [0], [1], [0, 0, 1, 1], [], []>} : vector<13x13xbf16>, vector<13x8xbf16>, vector<13x8xf32> -> vector<13x8xf32>
    %617 = arith.truncf %616 : vector<13x8xf32> to vector<13x8xbf16>
    %618 = vector.extract_strided_slice %595 {offsets = [0, 0], sizes = [8, 32], strides = [1, 1]} : vector<32x32xbf16> to vector<8x32xbf16>
    %cst_241 = arith.constant dense<0.000000e+00> : vector<13x32xf32>
    %619 = tpu.matmul %617, %618, %cst_241 {dimension_numbers = #tpu.dot_dimension_numbers<[1], [0], [0], [1], [0, 0, 1, 1], [], []>} : vector<13x8xbf16>, vector<8x32xbf16>, vector<13x32xf32> -> vector<13x32xf32>
    %620 = arith.addf %596, %619 : vector<13x32xf32>
    %621 = vector.extract_strided_slice %591 {offsets = [0, 8], sizes = [13, 8], strides = [1, 1]} : vector<13x32xf32> to vector<13x8xf32>
    %622 = vector.extract_strided_slice %592 {offsets = [0, 8], sizes = [13, 8], strides = [1, 1]} : vector<13x32xf32> to vector<13x8xf32>
    %623 = vector.extract_strided_slice %593 {offsets = [0, 8], sizes = [13, 8], strides = [1, 1]} : vector<13x32xf32> to vector<13x8xf32>
    %624 = arith.truncf %621 : vector<13x8xf32> to vector<13x8xbf16>
    %625 = tpu.transpose %622, [1, 0] : vector<13x8xf32> -> vector<8x13xf32>
    %626 = arith.truncf %625 : vector<8x13xf32> to vector<8x13xbf16>
    %cst_242 = arith.constant dense<0.000000e+00> : vector<13x13xf32>
    %627 = tpu.matmul %624, %626, %cst_242 {dimension_numbers = #tpu.dot_dimension_numbers<[1], [0], [0], [1], [0, 0, 1, 1], [], []>} : vector<13x8xbf16>, vector<8x13xbf16>, vector<13x13xf32> -> vector<13x13xf32>
    %cst_243 = arith.constant dense<0xFF800000> : vector<13xf32>
    %628 = vector.multi_reduction <maximumf>, %627, %cst_243 [1] : vector<13x13xf32> to vector<13xf32>
    %629 = vector.shape_cast %628 : vector<13xf32> to vector<13x1xf32>
    %630 = vector.broadcast %629 : vector<13x1xf32> to vector<13x13xf32>
    %631 = arith.subf %627, %630 : vector<13x13xf32>
    %632 = math.exp %631 : vector<13x13xf32>
    %cst_244 = arith.constant dense<0.000000e+00> : vector<13xf32>
    %633 = vector.multi_reduction <add>, %632, %cst_244 [1] : vector<13x13xf32> to vector<13xf32>
    %634 = vector.shape_cast %633 : vector<13xf32> to vector<13x1xf32>
    %635 = tpu.reciprocal %634 {approx = true} : vector<13x1xf32> -> vector<13x1xf32>
    %636 = vector.broadcast %635 : vector<13x1xf32> to vector<13x13xf32>
    %637 = arith.mulf %632, %636 : vector<13x13xf32>
    %638 = arith.truncf %637 : vector<13x13xf32> to vector<13x13xbf16>
    %639 = arith.truncf %623 : vector<13x8xf32> to vector<13x8xbf16>
    %cst_245 = arith.constant dense<0.000000e+00> : vector<13x8xf32>
    %640 = tpu.matmul %638, %639, %cst_245 {dimension_numbers = #tpu.dot_dimension_numbers<[1], [0], [0], [1], [0, 0, 1, 1], [], []>} : vector<13x13xbf16>, vector<13x8xbf16>, vector<13x8xf32> -> vector<13x8xf32>
    %641 = arith.truncf %640 : vector<13x8xf32> to vector<13x8xbf16>
    %642 = vector.extract_strided_slice %595 {offsets = [8, 0], sizes = [8, 32], strides = [1, 1]} : vector<32x32xbf16> to vector<8x32xbf16>
    %cst_246 = arith.constant dense<0.000000e+00> : vector<13x32xf32>
    %643 = tpu.matmul %641, %642, %cst_246 {dimension_numbers = #tpu.dot_dimension_numbers<[1], [0], [0], [1], [0, 0, 1, 1], [], []>} : vector<13x8xbf16>, vector<8x32xbf16>, vector<13x32xf32> -> vector<13x32xf32>
    %644 = arith.addf %620, %643 : vector<13x32xf32>
    %645 = vector.extract_strided_slice %591 {offsets = [0, 16], sizes = [13, 8], strides = [1, 1]} : vector<13x32xf32> to vector<13x8xf32>
    %646 = vector.extract_strided_slice %592 {offsets = [0, 16], sizes = [13, 8], strides = [1, 1]} : vector<13x32xf32> to vector<13x8xf32>
    %647 = vector.extract_strided_slice %593 {offsets = [0, 16], sizes = [13, 8], strides = [1, 1]} : vector<13x32xf32> to vector<13x8xf32>
    %648 = arith.truncf %645 : vector<13x8xf32> to vector<13x8xbf16>
    %649 = tpu.transpose %646, [1, 0] : vector<13x8xf32> -> vector<8x13xf32>
    %650 = arith.truncf %649 : vector<8x13xf32> to vector<8x13xbf16>
    %cst_247 = arith.constant dense<0.000000e+00> : vector<13x13xf32>
    %651 = tpu.matmul %648, %650, %cst_247 {dimension_numbers = #tpu.dot_dimension_numbers<[1], [0], [0], [1], [0, 0, 1, 1], [], []>} : vector<13x8xbf16>, vector<8x13xbf16>, vector<13x13xf32> -> vector<13x13xf32>
    %cst_248 = arith.constant dense<0xFF800000> : vector<13xf32>
    %652 = vector.multi_reduction <maximumf>, %651, %cst_248 [1] : vector<13x13xf32> to vector<13xf32>
    %653 = vector.shape_cast %652 : vector<13xf32> to vector<13x1xf32>
    %654 = vector.broadcast %653 : vector<13x1xf32> to vector<13x13xf32>
    %655 = arith.subf %651, %654 : vector<13x13xf32>
    %656 = math.exp %655 : vector<13x13xf32>
    %cst_249 = arith.constant dense<0.000000e+00> : vector<13xf32>
    %657 = vector.multi_reduction <add>, %656, %cst_249 [1] : vector<13x13xf32> to vector<13xf32>
    %658 = vector.shape_cast %657 : vector<13xf32> to vector<13x1xf32>
    %659 = tpu.reciprocal %658 {approx = true} : vector<13x1xf32> -> vector<13x1xf32>
    %660 = vector.broadcast %659 : vector<13x1xf32> to vector<13x13xf32>
    %661 = arith.mulf %656, %660 : vector<13x13xf32>
    %662 = arith.truncf %661 : vector<13x13xf32> to vector<13x13xbf16>
    %663 = arith.truncf %647 : vector<13x8xf32> to vector<13x8xbf16>
    %cst_250 = arith.constant dense<0.000000e+00> : vector<13x8xf32>
    %664 = tpu.matmul %662, %663, %cst_250 {dimension_numbers = #tpu.dot_dimension_numbers<[1], [0], [0], [1], [0, 0, 1, 1], [], []>} : vector<13x13xbf16>, vector<13x8xbf16>, vector<13x8xf32> -> vector<13x8xf32>
    %665 = arith.truncf %664 : vector<13x8xf32> to vector<13x8xbf16>
    %666 = vector.extract_strided_slice %595 {offsets = [16, 0], sizes = [8, 32], strides = [1, 1]} : vector<32x32xbf16> to vector<8x32xbf16>
    %cst_251 = arith.constant dense<0.000000e+00> : vector<13x32xf32>
    %667 = tpu.matmul %665, %666, %cst_251 {dimension_numbers = #tpu.dot_dimension_numbers<[1], [0], [0], [1], [0, 0, 1, 1], [], []>} : vector<13x8xbf16>, vector<8x32xbf16>, vector<13x32xf32> -> vector<13x32xf32>
    %668 = arith.addf %644, %667 : vector<13x32xf32>
    %669 = vector.extract_strided_slice %591 {offsets = [0, 24], sizes = [13, 8], strides = [1, 1]} : vector<13x32xf32> to vector<13x8xf32>
    %670 = vector.extract_strided_slice %592 {offsets = [0, 24], sizes = [13, 8], strides = [1, 1]} : vector<13x32xf32> to vector<13x8xf32>
    %671 = vector.extract_strided_slice %593 {offsets = [0, 24], sizes = [13, 8], strides = [1, 1]} : vector<13x32xf32> to vector<13x8xf32>
    %672 = arith.truncf %669 : vector<13x8xf32> to vector<13x8xbf16>
    %673 = tpu.transpose %670, [1, 0] : vector<13x8xf32> -> vector<8x13xf32>
    %674 = arith.truncf %673 : vector<8x13xf32> to vector<8x13xbf16>
    %cst_252 = arith.constant dense<0.000000e+00> : vector<13x13xf32>
    %675 = tpu.matmul %672, %674, %cst_252 {dimension_numbers = #tpu.dot_dimension_numbers<[1], [0], [0], [1], [0, 0, 1, 1], [], []>} : vector<13x8xbf16>, vector<8x13xbf16>, vector<13x13xf32> -> vector<13x13xf32>
    %cst_253 = arith.constant dense<0xFF800000> : vector<13xf32>
    %676 = vector.multi_reduction <maximumf>, %675, %cst_253 [1] : vector<13x13xf32> to vector<13xf32>
    %677 = vector.shape_cast %676 : vector<13xf32> to vector<13x1xf32>
    %678 = vector.broadcast %677 : vector<13x1xf32> to vector<13x13xf32>
    %679 = arith.subf %675, %678 : vector<13x13xf32>
    %680 = math.exp %679 : vector<13x13xf32>
    %cst_254 = arith.constant dense<0.000000e+00> : vector<13xf32>
    %681 = vector.multi_reduction <add>, %680, %cst_254 [1] : vector<13x13xf32> to vector<13xf32>
    %682 = vector.shape_cast %681 : vector<13xf32> to vector<13x1xf32>
    %683 = tpu.reciprocal %682 {approx = true} : vector<13x1xf32> -> vector<13x1xf32>
    %684 = vector.broadcast %683 : vector<13x1xf32> to vector<13x13xf32>
    %685 = arith.mulf %680, %684 : vector<13x13xf32>
    %686 = arith.truncf %685 : vector<13x13xf32> to vector<13x13xbf16>
    %687 = arith.truncf %671 : vector<13x8xf32> to vector<13x8xbf16>
    %cst_255 = arith.constant dense<0.000000e+00> : vector<13x8xf32>
    %688 = tpu.matmul %686, %687, %cst_255 {dimension_numbers = #tpu.dot_dimension_numbers<[1], [0], [0], [1], [0, 0, 1, 1], [], []>} : vector<13x13xbf16>, vector<13x8xbf16>, vector<13x8xf32> -> vector<13x8xf32>
    %689 = arith.truncf %688 : vector<13x8xf32> to vector<13x8xbf16>
    %690 = vector.extract_strided_slice %595 {offsets = [24, 0], sizes = [8, 32], strides = [1, 1]} : vector<32x32xbf16> to vector<8x32xbf16>
    %cst_256 = arith.constant dense<0.000000e+00> : vector<13x32xf32>
    %691 = tpu.matmul %689, %690, %cst_256 {dimension_numbers = #tpu.dot_dimension_numbers<[1], [0], [0], [1], [0, 0, 1, 1], [], []>} : vector<13x8xbf16>, vector<8x32xbf16>, vector<13x32xf32> -> vector<13x32xf32>
    %692 = arith.addf %668, %691 : vector<13x32xf32>
    %c1_257 = arith.constant 1 : index
    %c0_258 = arith.constant 0 : index
    %c0_259 = arith.constant 0 : index
    %693 = vector.load %arg9[%c1_257, %c0_258, %c0_259] : memref<2x1x32xf32, #tpu.memory_space<vmem>>, vector<1x1x32xf32>
    %694 = vector.shape_cast %693 : vector<1x1x32xf32> to vector<1x32xf32>
    %695 = vector.broadcast %694 : vector<1x32xf32> to vector<13x32xf32>
    %696 = arith.addf %692, %695 : vector<13x32xf32>
    %697 = arith.addf %582, %696 : vector<13x32xf32>
    %c1_260 = arith.constant 1 : index
    %c0_261 = arith.constant 0 : index
    %c0_262 = arith.constant 0 : index
    %698 = vector.load %arg10[%c1_260, %c0_261, %c0_262] : memref<2x1x32xf32, #tpu.memory_space<vmem>>, vector<1x1x32xf32>
    %699 = vector.shape_cast %698 : vector<1x1x32xf32> to vector<1x32xf32>
    %c1_263 = arith.constant 1 : index
    %c0_264 = arith.constant 0 : index
    %c0_265 = arith.constant 0 : index
    %700 = vector.load %arg11[%c1_263, %c0_264, %c0_265] : memref<2x1x32xf32, #tpu.memory_space<vmem>>, vector<1x1x32xf32>
    %701 = vector.shape_cast %700 : vector<1x1x32xf32> to vector<1x32xf32>
    %cst_266 = arith.constant dense<0.000000e+00> : vector<13xf32>
    %702 = vector.multi_reduction <add>, %697, %cst_266 [1] : vector<13x32xf32> to vector<13xf32>
    %703 = vector.shape_cast %702 : vector<13xf32> to vector<13x1xf32>
    %cst_267 = arith.constant 3.200000e+01 : f32
    %704 = vector.broadcast %cst_267 : f32 to vector<13x1xf32>
    %705 = arith.divf %703, %704 : vector<13x1xf32>
    %706 = vector.broadcast %705 : vector<13x1xf32> to vector<13x32xf32>
    %707 = arith.subf %697, %706 : vector<13x32xf32>
    %708 = arith.mulf %707, %707 : vector<13x32xf32>
    %cst_268 = arith.constant dense<0.000000e+00> : vector<13xf32>
    %709 = vector.multi_reduction <add>, %708, %cst_268 [1] : vector<13x32xf32> to vector<13xf32>
    %710 = vector.shape_cast %709 : vector<13xf32> to vector<13x1xf32>
    %cst_269 = arith.constant 3.200000e+01 : f32
    %711 = vector.broadcast %cst_269 : f32 to vector<13x1xf32>
    %712 = arith.divf %710, %711 : vector<13x1xf32>
    %713 = vector.broadcast %705 : vector<13x1xf32> to vector<13x32xf32>
    %714 = arith.subf %697, %713 : vector<13x32xf32>
    %cst_270 = arith.constant 9.99999974E-6 : f32
    %715 = vector.broadcast %cst_270 : f32 to vector<13x1xf32>
    %716 = arith.addf %712, %715 : vector<13x1xf32>
    %717 = math.rsqrt %716 : vector<13x1xf32>
    %718 = vector.broadcast %717 : vector<13x1xf32> to vector<13x32xf32>
    %719 = arith.mulf %714, %718 : vector<13x32xf32>
    %720 = vector.broadcast %699 : vector<1x32xf32> to vector<13x32xf32>
    %721 = arith.mulf %719, %720 : vector<13x32xf32>
    %722 = vector.broadcast %701 : vector<1x32xf32> to vector<13x32xf32>
    %723 = arith.addf %721, %722 : vector<13x32xf32>
    %724 = arith.truncf %723 : vector<13x32xf32> to vector<13x32xbf16>
    %c1_271 = arith.constant 1 : index
    %c0_272 = arith.constant 0 : index
    %c0_273 = arith.constant 0 : index
    %725 = vector.load %arg12[%c1_271, %c0_272, %c0_273] : memref<2x32x64xbf16, #tpu.memory_space<vmem>>, vector<1x32x64xbf16>
    %726 = vector.shape_cast %725 : vector<1x32x64xbf16> to vector<32x64xbf16>
    %cst_274 = arith.constant dense<0.000000e+00> : vector<13x64xf32>
    %727 = tpu.matmul %724, %726, %cst_274 {dimension_numbers = #tpu.dot_dimension_numbers<[1], [0], [0], [1], [0, 0, 1, 1], [], []>} : vector<13x32xbf16>, vector<32x64xbf16>, vector<13x64xf32> -> vector<13x64xf32>
    %c1_275 = arith.constant 1 : index
    %c0_276 = arith.constant 0 : index
    %c0_277 = arith.constant 0 : index
    %728 = vector.load %arg13[%c1_275, %c0_276, %c0_277] : memref<2x1x64xf32, #tpu.memory_space<vmem>>, vector<1x1x64xf32>
    %729 = vector.shape_cast %728 : vector<1x1x64xf32> to vector<1x64xf32>
    %730 = vector.broadcast %729 : vector<1x64xf32> to vector<13x64xf32>
    %731 = arith.addf %727, %730 : vector<13x64xf32>
    %cst_278 = arith.constant 0.000000e+00 : f32
    %732 = vector.broadcast %cst_278 : f32 to vector<13x64xf32>
    %733 = arith.maximumf %731, %732 : vector<13x64xf32>
    %734 = arith.truncf %733 : vector<13x64xf32> to vector<13x64xbf16>
    %c1_279 = arith.constant 1 : index
    %c0_280 = arith.constant 0 : index
    %c0_281 = arith.constant 0 : index
    %735 = vector.load %arg14[%c1_279, %c0_280, %c0_281] : memref<2x64x32xbf16, #tpu.memory_space<vmem>>, vector<1x64x32xbf16>
    %736 = vector.shape_cast %735 : vector<1x64x32xbf16> to vector<64x32xbf16>
    %cst_282 = arith.constant dense<0.000000e+00> : vector<13x32xf32>
    %737 = tpu.matmul %734, %736, %cst_282 {dimension_numbers = #tpu.dot_dimension_numbers<[1], [0], [0], [1], [0, 0, 1, 1], [], []>} : vector<13x64xbf16>, vector<64x32xbf16>, vector<13x32xf32> -> vector<13x32xf32>
    %c1_283 = arith.constant 1 : index
    %c0_284 = arith.constant 0 : index
    %c0_285 = arith.constant 0 : index
    %738 = vector.load %arg15[%c1_283, %c0_284, %c0_285] : memref<2x1x32xf32, #tpu.memory_space<vmem>>, vector<1x1x32xf32>
    %739 = vector.shape_cast %738 : vector<1x1x32xf32> to vector<1x32xf32>
    %740 = vector.broadcast %739 : vector<1x32xf32> to vector<13x32xf32>
    %741 = arith.addf %737, %740 : vector<13x32xf32>
    %742 = arith.addf %723, %741 : vector<13x32xf32>
    %c1_286 = arith.constant 1 : index
    %c0_287 = arith.constant 0 : index
    %c0_288 = arith.constant 0 : index
    %743 = vector.load %arg16[%c1_286, %c0_287, %c0_288] : memref<2x1x32xf32, #tpu.memory_space<vmem>>, vector<1x1x32xf32>
    %744 = vector.shape_cast %743 : vector<1x1x32xf32> to vector<1x32xf32>
    %c1_289 = arith.constant 1 : index
    %c0_290 = arith.constant 0 : index
    %c0_291 = arith.constant 0 : index
    %745 = vector.load %arg17[%c1_289, %c0_290, %c0_291] : memref<2x1x32xf32, #tpu.memory_space<vmem>>, vector<1x1x32xf32>
    %746 = vector.shape_cast %745 : vector<1x1x32xf32> to vector<1x32xf32>
    %cst_292 = arith.constant dense<0.000000e+00> : vector<13xf32>
    %747 = vector.multi_reduction <add>, %742, %cst_292 [1] : vector<13x32xf32> to vector<13xf32>
    %748 = vector.shape_cast %747 : vector<13xf32> to vector<13x1xf32>
    %cst_293 = arith.constant 3.200000e+01 : f32
    %749 = vector.broadcast %cst_293 : f32 to vector<13x1xf32>
    %750 = arith.divf %748, %749 : vector<13x1xf32>
    %751 = vector.broadcast %750 : vector<13x1xf32> to vector<13x32xf32>
    %752 = arith.subf %742, %751 : vector<13x32xf32>
    %753 = arith.mulf %752, %752 : vector<13x32xf32>
    %cst_294 = arith.constant dense<0.000000e+00> : vector<13xf32>
    %754 = vector.multi_reduction <add>, %753, %cst_294 [1] : vector<13x32xf32> to vector<13xf32>
    %755 = vector.shape_cast %754 : vector<13xf32> to vector<13x1xf32>
    %cst_295 = arith.constant 3.200000e+01 : f32
    %756 = vector.broadcast %cst_295 : f32 to vector<13x1xf32>
    %757 = arith.divf %755, %756 : vector<13x1xf32>
    %758 = vector.broadcast %750 : vector<13x1xf32> to vector<13x32xf32>
    %759 = arith.subf %742, %758 : vector<13x32xf32>
    %cst_296 = arith.constant 9.99999974E-6 : f32
    %760 = vector.broadcast %cst_296 : f32 to vector<13x1xf32>
    %761 = arith.addf %757, %760 : vector<13x1xf32>
    %762 = math.rsqrt %761 : vector<13x1xf32>
    %763 = vector.broadcast %762 : vector<13x1xf32> to vector<13x32xf32>
    %764 = arith.mulf %759, %763 : vector<13x32xf32>
    %765 = vector.broadcast %744 : vector<1x32xf32> to vector<13x32xf32>
    %766 = arith.mulf %764, %765 : vector<13x32xf32>
    %767 = vector.broadcast %746 : vector<1x32xf32> to vector<13x32xf32>
    %768 = arith.addf %766, %767 : vector<13x32xf32>
    %769 = vector.extract_strided_slice %768 {offsets = [12, 0], sizes = [1, 32], strides = [1, 1]} : vector<13x32xf32> to vector<1x32xf32>
    %770 = tpu.concatenate %386, %769 in 0 : vector<1x32xf32>, vector<1x32xf32> -> vector<2x32xf32>
    %771 = arith.truncf %770 : vector<2x32xf32> to vector<2x32xbf16>
    %c0_297 = arith.constant 0 : index
    %c0_298 = arith.constant 0 : index
    %772 = vector.load %arg18[%c0_297, %c0_298] : memref<32x10xbf16, #tpu.memory_space<vmem>>, vector<32x10xbf16>
    %cst_299 = arith.constant dense<0.000000e+00> : vector<2x10xf32>
    %773 = tpu.matmul %771, %772, %cst_299 {dimension_numbers = #tpu.dot_dimension_numbers<[1], [0], [0], [1], [0, 0, 1, 1], [], []>} : vector<2x32xbf16>, vector<32x10xbf16>, vector<2x10xf32> -> vector<2x10xf32>
    %c0_300 = arith.constant 0 : index
    %c0_301 = arith.constant 0 : index
    %774 = vector.load %arg19[%c0_300, %c0_301] : memref<1x10xf32, #tpu.memory_space<vmem>>, vector<1x10xf32>
    %775 = vector.broadcast %774 : vector<1x10xf32> to vector<2x10xf32>
    %776 = arith.addf %773, %775 : vector<2x10xf32>
    %c0_302 = arith.constant 0 : index
    %c0_303 = arith.constant 0 : index
    %777 = vector.load %arg20[%c0_302, %c0_303] : memref<2x10xf32, #tpu.memory_space<vmem>>, vector<2x10xf32>
    tpu.vector_store %arg20[%c0_302, %c0_303], %776 {strides = array<i32>} : memref<2x10xf32, #tpu.memory_space<vmem>>, vector<2x10xf32>,
    return
  }
  func.func @transform_0(%arg0: i32) -> (i32, i32, i32) {
    %c0_i32 = arith.constant 0 : i32
    %c0_i32_0 = arith.constant 0 : i32
    %c0_i32_1 = arith.constant 0 : i32
    %c0_i32_2 = arith.constant 0 : i32
    return %c0_i32, %c0_i32_0, %c0_i32_1 : i32, i32, i32
  }
  func.func @transform_1(%arg0: i32) -> (i32, i32) {
    %c0_i32 = arith.constant 0 : i32
    %c0_i32_0 = arith.constant 0 : i32
    %c0_i32_1 = arith.constant 0 : i32
    return %c0_i32, %c0_i32_0 : i32, i32
  }
  func.func @transform_2(%arg0: i32) -> (i32, i32) {
    %c0_i32 = arith.constant 0 : i32
    %c0_i32_0 = arith.constant 0 : i32
    %c0_i32_1 = arith.constant 0 : i32
    return %c0_i32, %c0_i32_0 : i32, i32
  }
  func.func @transform_3(%arg0: i32) -> (i32, i32) {
    %c0_i32 = arith.constant 0 : i32
    %c0_i32_0 = arith.constant 0 : i32
    %c0_i32_1 = arith.constant 0 : i32
    return %c0_i32, %c0_i32_0 : i32, i32
  }
  func.func @transform_4(%arg0: i32) -> (i32, i32) {
    %c0_i32 = arith.constant 0 : i32
    %c0_i32_0 = arith.constant 0 : i32
    %c0_i32_1 = arith.constant 0 : i32
    return %c0_i32, %c0_i32_0 : i32, i32
  }
  func.func @transform_5(%arg0: i32) -> (i32, i32, i32) {
    %c0_i32 = arith.constant 0 : i32
    %c0_i32_0 = arith.constant 0 : i32
    %c0_i32_1 = arith.constant 0 : i32
    %c0_i32_2 = arith.constant 0 : i32
    return %c0_i32, %c0_i32_0, %c0_i32_1 : i32, i32, i32
  }
  func.func @transform_6(%arg0: i32) -> (i32, i32, i32) {
    %c0_i32 = arith.constant 0 : i32
    %c0_i32_0 = arith.constant 0 : i32
    %c0_i32_1 = arith.constant 0 : i32
    %c0_i32_2 = arith.constant 0 : i32
    return %c0_i32, %c0_i32_0, %c0_i32_1 : i32, i32, i32
  }
  func.func @transform_7(%arg0: i32) -> (i32, i32, i32) {
    %c0_i32 = arith.constant 0 : i32
    %c0_i32_0 = arith.constant 0 : i32
    %c0_i32_1 = arith.constant 0 : i32
    %c0_i32_2 = arith.constant 0 : i32
    return %c0_i32, %c0_i32_0, %c0_i32_1 : i32, i32, i32
  }
  func.func @transform_8(%arg0: i32) -> (i32, i32, i32) {
    %c0_i32 = arith.constant 0 : i32
    %c0_i32_0 = arith.constant 0 : i32
    %c0_i32_1 = arith.constant 0 : i32
    %c0_i32_2 = arith.constant 0 : i32
    return %c0_i32, %c0_i32_0, %c0_i32_1 : i32, i32, i32
  }
  func.func @transform_9(%arg0: i32) -> (i32, i32, i32) {
    %c0_i32 = arith.constant 0 : i32
    %c0_i32_0 = arith.constant 0 : i32
    %c0_i32_1 = arith.constant 0 : i32
    %c0_i32_2 = arith.constant 0 : i32
    return %c0_i32, %c0_i32_0, %c0_i32_1 : i32, i32, i32
  }
  func.func @transform_10(%arg0: i32) -> (i32, i32, i32) {
    %c0_i32 = arith.constant 0 : i32
    %c0_i32_0 = arith.constant 0 : i32
    %c0_i32_1 = arith.constant 0 : i32
    %c0_i32_2 = arith.constant 0 : i32
    return %c0_i32, %c0_i32_0, %c0_i32_1 : i32, i32, i32
  }
  func.func @transform_11(%arg0: i32) -> (i32, i32, i32) {
    %c0_i32 = arith.constant 0 : i32
    %c0_i32_0 = arith.constant 0 : i32
    %c0_i32_1 = arith.constant 0 : i32
    %c0_i32_2 = arith.constant 0 : i32
    return %c0_i32, %c0_i32_0, %c0_i32_1 : i32, i32, i32
  }
  func.func @transform_12(%arg0: i32) -> (i32, i32, i32) {
    %c0_i32 = arith.constant 0 : i32
    %c0_i32_0 = arith.constant 0 : i32
    %c0_i32_1 = arith.constant 0 : i32
    %c0_i32_2 = arith.constant 0 : i32
    return %c0_i32, %c0_i32_0, %c0_i32_1 : i32, i32, i32
  }
  func.func @transform_13(%arg0: i32) -> (i32, i32, i32) {
    %c0_i32 = arith.constant 0 : i32
    %c0_i32_0 = arith.constant 0 : i32
    %c0_i32_1 = arith.constant 0 : i32
    %c0_i32_2 = arith.constant 0 : i32
    return %c0_i32, %c0_i32_0, %c0_i32_1 : i32, i32, i32
  }
  func.func @transform_14(%arg0: i32) -> (i32, i32, i32) {
    %c0_i32 = arith.constant 0 : i32
    %c0_i32_0 = arith.constant 0 : i32
    %c0_i32_1 = arith.constant 0 : i32
    %c0_i32_2 = arith.constant 0 : i32
    return %c0_i32, %c0_i32_0, %c0_i32_1 : i32, i32, i32
  }
  func.func @transform_15(%arg0: i32) -> (i32, i32, i32) {
    %c0_i32 = arith.constant 0 : i32
    %c0_i32_0 = arith.constant 0 : i32
    %c0_i32_1 = arith.constant 0 : i32
    %c0_i32_2 = arith.constant 0 : i32
    return %c0_i32, %c0_i32_0, %c0_i32_1 : i32, i32, i32
  }
  func.func @transform_16(%arg0: i32) -> (i32, i32, i32) {
    %c0_i32 = arith.constant 0 : i32
    %c0_i32_0 = arith.constant 0 : i32
    %c0_i32_1 = arith.constant 0 : i32
    %c0_i32_2 = arith.constant 0 : i32
    return %c0_i32, %c0_i32_0, %c0_i32_1 : i32, i32, i32
  }
  func.func @transform_17(%arg0: i32) -> (i32, i32) {
    %c0_i32 = arith.constant 0 : i32
    %c0_i32_0 = arith.constant 0 : i32
    %c0_i32_1 = arith.constant 0 : i32
    return %c0_i32, %c0_i32_0 : i32, i32
  }
  func.func @transform_18(%arg0: i32) -> (i32, i32) {
    %c0_i32 = arith.constant 0 : i32
    %c0_i32_0 = arith.constant 0 : i32
    %c0_i32_1 = arith.constant 0 : i32
    return %c0_i32, %c0_i32_0 : i32, i32
  }
  func.func @transform_19(%arg0: i32) -> (i32, i32) {
    %c0_i32 = arith.constant 0 : i32
    %c0_i32_0 = arith.constant 0 : i32
    %c0_i32_1 = arith.constant 0 : i32
    return %c0_i32, %c0_i32_0 : i32, i32
  }
}

</mosaic_0001>

<llo_original>
// kernel: mtcn_av_forward.1
$region0: #{mtcn_av_forward.1}
  #allocation0 [shape = 'u32[]', space=smem, size = 0x4, offset = 0x4, fixed_abs, tag = 'smem constant byte address 0x4 - core index']
  #allocation1 [shape = 'u32[72,128]{1,0:T(1,128)}', space=vmem, size = 0x9000, scoped, tag = 'internal scratch']
  %s0 = inlined_call_operand.vmem [shape: f32[2,6,64], index: 0, kind: input, shape index: {}]
  %s1 = inlined_call_operand.vmem [shape: bf16[64,64], index: 1, kind: input, shape index: {}]
  %s2 = inlined_call_operand.hbm [shape: f32[1,64], index: 2, kind: input, shape index: {}]
  %s3 = inlined_call_operand.vmem [shape: f32[13,32], index: 3, kind: input, shape index: {}]
  %s4 = inlined_call_operand.hbm [shape: f32[1,32], index: 4, kind: input, shape index: {}]
  %s5 = inlined_call_operand.vmem [shape: bf16[2,32,96], index: 5, kind: input, shape index: {}]
  %s6 = inlined_call_operand.vmem [shape: f32[2,1,96], index: 6, kind: input, shape index: {}]
  %s7 = inlined_call_operand.vmem [shape: bf16[2,32,32], index: 7, kind: input, shape index: {}]
  %s8 = inlined_call_operand.vmem [shape: f32[2,1,32], index: 8, kind: input, shape index: {}]
  %s9 = inlined_call_operand.hbm [shape: f32[2,1,32], index: 9, kind: input, shape index: {}]
  %s10 = inlined_call_operand.hbm [shape: f32[2,1,32], index: 10, kind: input, shape index: {}]
  %s11 = inlined_call_operand.hbm [shape: bf16[2,32,64], index: 11, kind: input, shape index: {}]
  %s12 = inlined_call_operand.hbm [shape: f32[2,1,64], index: 12, kind: input, shape index: {}]
  %s13 = inlined_call_operand.vmem [shape: bf16[2,64,32], index: 13, kind: input, shape index: {}]
  %s14 = inlined_call_operand.hbm [shape: f32[2,1,32], index: 14, kind: input, shape index: {}]
  %s15 = inlined_call_operand.hbm [shape: f32[2,1,32], index: 15, kind: input, shape index: {}]
  %s16 = inlined_call_operand.hbm [shape: f32[2,1,32], index: 16, kind: input, shape index: {}]
  %s17 = inlined_call_operand.vmem [shape: bf16[32,10], index: 17, kind: input, shape index: {}]
  %s18 = inlined_call_operand.hbm [shape: f32[1,10], index: 18, kind: input, shape index: {}]
  %s19 = inlined_call_operand.hbm [shape: f32[2,10], index: 19, kind: output, shape index: {}]
  %s20 = sld [smem:[#allocation0]]
  $region126: #{mtcn_av_forward.1} parent=0
    _
  %s22 = ssub.s32 1, %s20
  %s23 = scalar_select 0, %s22, %s20
  $region1: #{mtcn_av_forward.1} parent=0
    #allocation2 [shape = 'u8[512]{0}', space=vmem, size = 0x400, scoped, tag = 'input window, operand 2, single buffered']
    #allocation3 [shape = 's32[1]{0}', space=sflag, size = 0x4, scoped, tag = 'scoped memory for mtcn_av_forward.1']
    #allocation4 [shape = 's32[1]{0}', space=sflag, size = 0x4, scoped, tag = 'scoped memory for mtcn_av_forward.1']
    #allocation5 [shape = 'u8[512]{0}', space=vmem, size = 0x400, scoped, tag = 'input window, operand 4, single buffered']
    #allocation6 [shape = 's32[1]{0}', space=sflag, size = 0x4, scoped, tag = 'scoped memory for mtcn_av_forward.1']
    #allocation7 [shape = 'u8[1024]{0}', space=vmem, size = 0x400, scoped, tag = 'input window, operand 9, single buffered']
    #allocation8 [shape = 'u8[1024]{0}', space=vmem, size = 0x400, scoped, tag = 'input window, operand 10, single buffered']
    #allocation9 [shape = 's32[1]{0}', space=sflag, size = 0x4, scoped, tag = 'scoped memory for mtcn_av_forward.1']
    #allocation10 [shape = 'u8[16384]{0}', space=vmem, size = 0x4000, scoped, tag = 'input window, operand 11, single buffered']
    #allocation11 [shape = 'u8[1024]{0}', space=vmem, size = 0x400, scoped, tag = 'input window, operand 12, single buffered']
    #allocation12 [shape = 's32[1]{0}', space=sflag, size = 0x4, scoped, tag = 'scoped memory for mtcn_av_forward.1']
    #allocation13 [shape = 'u8[1024]{0}', space=vmem, size = 0x400, scoped, tag = 'input window, operand 14, single buffered']
    #allocation14 [shape = 'u8[1024]{0}', space=vmem, size = 0x400, scoped, tag = 'input window, operand 15, single buffered']
    #allocation15 [shape = 's32[1]{0}', space=sflag, size = 0x4, scoped, tag = 'scoped memory for mtcn_av_forward.1']
    #allocation16 [shape = 'u8[1024]{0}', space=vmem, size = 0x400, scoped, tag = 'input window, operand 16, single buffered']
    #allocation17 [shape = 'u8[512]{0}', space=vmem, size = 0x400, scoped, tag = 'input window, operand 18, single buffered']
    #allocation18 [shape = 's32[1]{0}', space=sflag, size = 0x4, scoped, tag = 'scoped memory for mtcn_av_forward.1']
    #allocation19 [shape = 'u8[1024]{0}', space=vmem, size = 0x400, scoped, tag = 'output window, operand 0, single buffered']
    %24 = vsyncpa [#allocation3], 0
    %25 = vsyncpa [#allocation6], 0
    %26 = vsyncpa [#allocation9], 0
    %27 = vsyncpa [#allocation12], 0
    %28 = vsyncpa [#allocation15], 0
    %29 = vsyncpa [#allocation18], 0
    %30 = vsyncpa [#allocation4], 0
    // Predicated region
    $region2: #{mtcn_av_forward.1} parent=1 // pred_check
      _
    $region3: #{mtcn_av_forward.1} parent=1 // pred_check_branch
      %32 = sbr.rel (0) target = $region5
    $region4: #{mtcn_av_forward.1} parent=1 // pred_region
      _
    $region5: #{mtcn_av_forward.1} parent=1 // pred_fallthru
      _
    // Predicated region
    $region6: #{mtcn_av_forward.1} parent=1 // pred_check
      _
    $region7: #{mtcn_av_forward.1} parent=1 // pred_check_branch
      %34 = sbr.rel (0) target = $region9
    $region8: #{mtcn_av_forward.1} parent=1 // pred_region
      _
    $region9: #{mtcn_av_forward.1} parent=1 // pred_fallthru
      _
    // Predicated region
    $region10: #{mtcn_av_forward.1} parent=1 // pred_check
      _
    $region11: #{mtcn_av_forward.1} parent=1 // pred_check_branch
      %36 = sbr.rel (0) target = $region13
    $region12: #{mtcn_av_forward.1} parent=1 // pred_region
      %38 = vsyncadd [#allocation3], 0
      %s40 = sshll.u32 %s2, 4
      %s41 = int_to_ptr.hbm [resolvable:$true] %s40
      %s42 = sshll.u32 [#allocation2], 4
      %s43 = int_to_ptr.vmem [resolvable:$true] %s42
      %45 = dma.hbm_to_vmem [thread:$0]  %s41, 16, %s43, [#allocation3]
    $region13: #{mtcn_av_forward.1} parent=1 // pred_fallthru
      _
    // Predicated region
    $region14: #{mtcn_av_forward.1} parent=1 // pred_check
      _
    $region15: #{mtcn_av_forward.1} parent=1 // pred_check_branch
      %47 = sbr.rel (0) target = $region17
    $region16: #{mtcn_av_forward.1} parent=1 // pred_region
      _
    $region17: #{mtcn_av_forward.1} parent=1 // pred_fallthru
      _
    // Predicated region
    $region18: #{mtcn_av_forward.1} parent=1 // pred_check
      _
    $region19: #{mtcn_av_forward.1} parent=1 // pred_check_branch
      %49 = sbr.rel (0) target = $region21
    $region20: #{mtcn_av_forward.1} parent=1 // pred_region
      %51 = vsyncadd [#allocation6], 0
      %s53 = sshll.u32 %s4, 4
      %s54 = int_to_ptr.hbm [resolvable:$true] %s53
      %s55 = sshll.u32 [#allocation5], 4
      %s56 = int_to_ptr.vmem [resolvable:$true] %s55
      %58 = dma.hbm_to_vmem [thread:$0]  %s54, 16, %s56, [#allocation6]
    $region21: #{mtcn_av_forward.1} parent=1 // pred_fallthru
      _
    // Predicated region
    $region22: #{mtcn_av_forward.1} parent=1 // pred_check
      _
    $region23: #{mtcn_av_forward.1} parent=1 // pred_check_branch
      %60 = sbr.rel (0) target = $region25
    $region24: #{mtcn_av_forward.1} parent=1 // pred_region
      _
    $region25: #{mtcn_av_forward.1} parent=1 // pred_fallthru
      _
    // Predicated region
    $region26: #{mtcn_av_forward.1} parent=1 // pred_check
      _
    $region27: #{mtcn_av_forward.1} parent=1 // pred_check_branch
      %62 = sbr.rel (0) target = $region29
    $region28: #{mtcn_av_forward.1} parent=1 // pred_region
      _
    $region29: #{mtcn_av_forward.1} parent=1 // pred_fallthru
      _
    // Predicated region
    $region30: #{mtcn_av_forward.1} parent=1 // pred_check
      _
    $region31: #{mtcn_av_forward.1} parent=1 // pred_check_branch
      %64 = sbr.rel (0) target = $region33
    $region32: #{mtcn_av_forward.1} parent=1 // pred_region
      _
    $region33: #{mtcn_av_forward.1} parent=1 // pred_fallthru
      _
    // Predicated region
    $region34: #{mtcn_av_forward.1} parent=1 // pred_check
      _
    $region35: #{mtcn_av_forward.1} parent=1 // pred_check_branch
      %66 = sbr.rel (0) target = $region37
    $region36: #{mtcn_av_forward.1} parent=1 // pred_region
      _
    $region37: #{mtcn_av_forward.1} parent=1 // pred_fallthru
      _
    // Predicated region
    $region38: #{mtcn_av_forward.1} parent=1 // pred_check
      _
    $region39: #{mtcn_av_forward.1} parent=1 // pred_check_branch
      %68 = sbr.rel (0) target = $region41
    $region40: #{mtcn_av_forward.1} parent=1 // pred_region
      %70 = vsyncadd [#allocation6], 0
      %s71 = sshll.u32 %s9, 4
      %s72 = int_to_ptr.hbm [resolvable:$true] %s71
      %s73 = sshll.u32 [#allocation7], 4
      %s74 = int_to_ptr.vmem [resolvable:$true] %s73
      %79 = dma.hbm_to_vmem [thread:$0]  %s72, 32, %s74, [#allocation6], 16, 16, 1
    $region41: #{mtcn_av_forward.1} parent=1 // pred_fallthru
      _
    // Predicated region
    $region42: #{mtcn_av_forward.1} parent=1 // pred_check
      _
    $region43: #{mtcn_av_forward.1} parent=1 // pred_check_branch
      %81 = sbr.rel (0) target = $region45
    $region44: #{mtcn_av_forward.1} parent=1 // pred_region
      %83 = vsyncadd [#allocation9], 0
      %s84 = sshll.u32 %s10, 4
      %s85 = int_to_ptr.hbm [resolvable:$true] %s84
      %s86 = sshll.u32 [#allocation8], 4
      %s87 = int_to_ptr.vmem [resolvable:$true] %s86
      %92 = dma.hbm_to_vmem [thread:$0]  %s85, 32, %s87, [#allocation9], 16, 16, 1
    $region45: #{mtcn_av_forward.1} parent=1 // pred_fallthru
      _
    // Predicated region
    $region46: #{mtcn_av_forward.1} parent=1 // pred_check
      _
    $region47: #{mtcn_av_forward.1} parent=1 // pred_check_branch
      %94 = sbr.rel (0) target = $region49
    $region48: #{mtcn_av_forward.1} parent=1 // pred_region
      %96 = vsyncadd [#allocation9], 0
      %s97 = sshll.u32 %s11, 4
      %s98 = int_to_ptr.hbm [resolvable:$true] %s97
      %s99 = sshll.u32 [#allocation10], 4
      %s100 = int_to_ptr.vmem [resolvable:$true] %s99
      %105 = dma.hbm_to_vmem [thread:$0]  %s98, 512, %s100, [#allocation9], 64, 64, 4
    $region49: #{mtcn_av_forward.1} parent=1 // pred_fallthru
      _
    // Predicated region
    $region50: #{mtcn_av_forward.1} parent=1 // pred_check
      _
    $region51: #{mtcn_av_forward.1} parent=1 // pred_check_branch
      %107 = sbr.rel (0) target = $region53
    $region52: #{mtcn_av_forward.1} parent=1 // pred_region
      %109 = vsyncadd [#allocation12], 0
      %s110 = sshll.u32 %s12, 4
      %s111 = int_to_ptr.hbm [resolvable:$true] %s110
      %s112 = sshll.u32 [#allocation11], 4
      %s113 = int_to_ptr.vmem [resolvable:$true] %s112
      %118 = dma.hbm_to_vmem [thread:$0]  %s111, 32, %s113, [#allocation12], 16, 16, 1
    $region53: #{mtcn_av_forward.1} parent=1 // pred_fallthru
      _
    // Predicated region
    $region54: #{mtcn_av_forward.1} parent=1 // pred_check
      _
    $region55: #{mtcn_av_forward.1} parent=1 // pred_check_branch
      %120 = sbr.rel (0) target = $region57
    $region56: #{mtcn_av_forward.1} parent=1 // pred_region
      _
    $region57: #{mtcn_av_forward.1} parent=1 // pred_fallthru
      _
    // Predicated region
    $region58: #{mtcn_av_forward.1} parent=1 // pred_check
      _
    $region59: #{mtcn_av_forward.1} parent=1 // pred_check_branch
      %122 = sbr.rel (0) target = $region61
    $region60: #{mtcn_av_forward.1} parent=1 // pred_region
      %124 = vsyncadd [#allocation12], 0
      %s125 = sshll.u32 %s14, 4
      %s126 = int_to_ptr.hbm [resolvable:$true] %s125
      %s127 = sshll.u32 [#allocation13], 4
      %s128 = int_to_ptr.vmem [resolvable:$true] %s127
      %133 = dma.hbm_to_vmem [thread:$0]  %s126, 32, %s128, [#allocation12], 16, 16, 1
    $region61: #{mtcn_av_forward.1} parent=1 // pred_fallthru
      _
    // Predicated region
    $region62: #{mtcn_av_forward.1} parent=1 // pred_check
      _
    $region63: #{mtcn_av_forward.1} parent=1 // pred_check_branch
      %135 = sbr.rel (0) target = $region65
    $region64: #{mtcn_av_forward.1} parent=1 // pred_region
      %137 = vsyncadd [#allocation15], 0
      %s138 = sshll.u32 %s15, 4
      %s139 = int_to_ptr.hbm [resolvable:$true] %s138
      %s140 = sshll.u32 [#allocation14], 4
      %s141 = int_to_ptr.vmem [resolvable:$true] %s140
      %146 = dma.hbm_to_vmem [thread:$0]  %s139, 32, %s141, [#allocation15], 16, 16, 1
    $region65: #{mtcn_av_forward.1} parent=1 // pred_fallthru
      _
    // Predicated region
    $region66: #{mtcn_av_forward.1} parent=1 // pred_check
      _
    $region67: #{mtcn_av_forward.1} parent=1 // pred_check_branch
      %148 = sbr.rel (0) target = $region69
    $region68: #{mtcn_av_forward.1} parent=1 // pred_region
      %150 = vsyncadd [#allocation15], 0
      %s151 = sshll.u32 %s16, 4
      %s152 = int_to_ptr.hbm [resolvable:$true] %s151
      %s153 = sshll.u32 [#allocation16], 4
      %s154 = int_to_ptr.vmem [resolvable:$true] %s153
      %159 = dma.hbm_to_vmem [thread:$0]  %s152, 32, %s154, [#allocation15], 16, 16, 1
    $region69: #{mtcn_av_forward.1} parent=1 // pred_fallthru
      _
    // Predicated region
    $region70: #{mtcn_av_forward.1} parent=1 // pred_check
      _
    $region71: #{mtcn_av_forward.1} parent=1 // pred_check_branch
      %161 = sbr.rel (0) target = $region73
    $region72: #{mtcn_av_forward.1} parent=1 // pred_region
      _
    $region73: #{mtcn_av_forward.1} parent=1 // pred_fallthru
      _
    // Predicated region
    $region74: #{mtcn_av_forward.1} parent=1 // pred_check
      _
    $region75: #{mtcn_av_forward.1} parent=1 // pred_check_branch
      %163 = sbr.rel (0) target = $region77
    $region76: #{mtcn_av_forward.1} parent=1 // pred_region
      %165 = vsyncadd [#allocation18], 0
      %s167 = sshll.u32 %s18, 4
      %s168 = int_to_ptr.hbm [resolvable:$true] %s167
      %s169 = sshll.u32 [#allocation17], 4
      %s170 = int_to_ptr.vmem [resolvable:$true] %s169
      %172 = dma.hbm_to_vmem [thread:$0]  %s168, 16, %s170, [#allocation18]
    $region77: #{mtcn_av_forward.1} parent=1 // pred_fallthru
      _
    // Predicated region
    $region78: #{mtcn_av_forward.1} parent=1 // pred_check
      _
    $region79: #{mtcn_av_forward.1} parent=1 // pred_check_branch
      %174 = sbr.rel (0) target = $region81
    $region80: #{mtcn_av_forward.1} parent=1 // pred_region
      %176 = dma.done [#allocation3], 16
    $region81: #{mtcn_av_forward.1} parent=1 // pred_fallthru
      _
    // Predicated region
    $region82: #{mtcn_av_forward.1} parent=1 // pred_check
      _
    $region83: #{mtcn_av_forward.1} parent=1 // pred_check_branch
      %178 = sbr.rel (0) target = $region85
    $region84: #{mtcn_av_forward.1} parent=1 // pred_region
      %180 = dma.done [#allocation6], 16
    $region85: #{mtcn_av_forward.1} parent=1 // pred_fallthru
      _
    // Predicated region
    $region86: #{mtcn_av_forward.1} parent=1 // pred_check
      _
    $region87: #{mtcn_av_forward.1} parent=1 // pred_check_branch
      %182 = sbr.rel (0) target = $region89
    $region88: #{mtcn_av_forward.1} parent=1 // pred_region
      %184 = dma.done [#allocation6], 32
    $region89: #{mtcn_av_forward.1} parent=1 // pred_fallthru
      _
    // Predicated region
    $region90: #{mtcn_av_forward.1} parent=1 // pred_check
      _
    $region91: #{mtcn_av_forward.1} parent=1 // pred_check_branch
      %186 = sbr.rel (0) target = $region93
    $region92: #{mtcn_av_forward.1} parent=1 // pred_region
      %188 = dma.done [#allocation9], 32
    $region93: #{mtcn_av_forward.1} parent=1 // pred_fallthru
      _
    // Predicated region
    $region94: #{mtcn_av_forward.1} parent=1 // pred_check
      _
    $region95: #{mtcn_av_forward.1} parent=1 // pred_check_branch
      %190 = sbr.rel (0) target = $region97
    $region96: #{mtcn_av_forward.1} parent=1 // pred_region
      %192 = dma.done [#allocation9], 512
    $region97: #{mtcn_av_forward.1} parent=1 // pred_fallthru
      _
    // Predicated region
    $region98: #{mtcn_av_forward.1} parent=1 // pred_check
      _
    $region99: #{mtcn_av_forward.1} parent=1 // pred_check_branch
      %194 = sbr.rel (0) target = $region101
    $region100: #{mtcn_av_forward.1} parent=1 // pred_region
      %196 = dma.done [#allocation12], 32
    $region101: #{mtcn_av_forward.1} parent=1 // pred_fallthru
      _
    // Predicated region
    $region102: #{mtcn_av_forward.1} parent=1 // pred_check
      _
    $region103: #{mtcn_av_forward.1} parent=1 // pred_check_branch
      %198 = sbr.rel (0) target = $region105
    $region104: #{mtcn_av_forward.1} parent=1 // pred_region
      %200 = dma.done [#allocation12], 32
    $region105: #{mtcn_av_forward.1} parent=1 // pred_fallthru
      _
    // Predicated region
    $region106: #{mtcn_av_forward.1} parent=1 // pred_check
      _
    $region107: #{mtcn_av_forward.1} parent=1 // pred_check_branch
      %202 = sbr.rel (0) target = $region109
    $region108: #{mtcn_av_forward.1} parent=1 // pred_region
      %204 = dma.done [#allocation15], 32
    $region109: #{mtcn_av_forward.1} parent=1 // pred_fallthru
      _
    // Predicated region
    $region110: #{mtcn_av_forward.1} parent=1 // pred_check
      _
    $region111: #{mtcn_av_forward.1} parent=1 // pred_check_branch
      %206 = sbr.rel (0) target = $region113
    $region112: #{mtcn_av_forward.1} parent=1 // pred_region
      %208 = dma.done [#allocation15], 32
    $region113: #{mtcn_av_forward.1} parent=1 // pred_fallthru
      _
    // Predicated region
    $region114: #{mtcn_av_forward.1} parent=1 // pred_check
      _
    $region115: #{mtcn_av_forward.1} parent=1 // pred_check_branch
      %210 = sbr.rel (0) target = $region117
    $region116: #{mtcn_av_forward.1} parent=1 // pred_region
      %212 = dma.done [#allocation18], 16
    $region117: #{mtcn_av_forward.1} parent=1 // pred_fallthru
      _
    %v214 = vld [vmem:[%s3] sm:$0xff]
    %v215 = vld [vmem:[%s3 + $0x8] sm:$0x1f]
    %v216 = vld [vmem:[#allocation5] sm:$0x1]
    %v217 = vld [vmem:[%s1] sm:$0xf]
    %v218 = vld [vmem:[%s1 + $0x4] sm:$0xf]
    %v219 = vld [vmem:[%s1 + $0x8] sm:$0xf]
    %v220 = vld [vmem:[%s1 + $0xc] sm:$0xf]
    %v221 = vld [vmem:[%s1 + $0x10] sm:$0xf]
    %v222 = vld [vmem:[%s1 + $0x14] sm:$0xf]
    %v223 = vld [vmem:[%s1 + $0x18] sm:$0xf]
    %v224 = vld [vmem:[%s1 + $0x1c] sm:$0xf]
    %v225 = vld [vmem:[#allocation2] sm:$0x1]
    %v226 = vld [vmem:[%s0] sm:$0x3f]
    %v227 = vpack.c.bf16 %v226, %v226
    %v229 = vperm.slane %v225, 0
    %v239 = vunpack.c.l.b16 %v217
    %v240 = vunpack.c.l.b16 %v218
    %v241 = vunpack.c.l.b16 %v219
    %v242 = vunpack.c.l.b16 %v220
    %v243 = vunpack.c.l.b16 %v221
    %v244 = vunpack.c.l.b16 %v222
    %v245 = vunpack.c.l.b16 %v223
    %v246 = vunpack.c.l.b16 %v224
    %v247 = vpack.c.b16 %v240, %v239
    %v248 = vpack.c.b16 %v242, %v241
    %v249 = vpack.c.b16 %v244, %v243
    %v250 = vpack.c.b16 %v246, %v245
    %vm255 = vcmask 523264
    %v257 = vsel %vm255, %v227, 0
    %259 = vmatpush.bf16.msra.mxu0 0
    %260 = vmatpush.bf16.msra.mxu0 0
    %261 = vmatpush.bf16.msra.mxu0 0
    %262 = vmatpush.bf16.msra.mxu0 0
    %263 = vmatpush.bf16.msra.mxu0 %v250
    %264 = vmatpush.bf16.msra.mxu0 %v249
    %265 = vmatpush.bf16.msra.mxu0 %v248
    %266 = vmatpush.bf16.msra.mxu0 %v247
    %267 = vmatmul.bf16.gmra.mxu0 %v257
    %v268 = vpop.f32.mrf.mxu0
    %v269 = vadd.f32 %v229, %v268
    %v270 = vpop.f32.mrf.mxu0
    %271 = vdwg.mxu0
    %v273 = vrot.slane %v269, 2
    %274 = vrot.lane.b32.xlu0 %v273, 96
    %v275 = vpop.permute.xlu0 %274
    %v278 = vperm.slane %v216, 0
    %vm280 = vcmask 1045504
    %v281 = vsel %vm280, %v269, %v275
    %vm282 = vcmask 1043456
    %v283 = vsel %vm282, %v275, %v278
    %v284 = vadd.f32 %v281, %v214
    %v285 = vadd.f32 %v283, %v215
    %v286 = vpack.c.bf16 %v285, %v284
    %v287 = vld [vmem:[%s5] sm:$0xf]
    %v288 = vld [vmem:[%s5 + $0x4] sm:$0xf]
    %v289 = vld [vmem:[%s5 + $0x8] sm:$0xf]
    %v290 = vld [vmem:[%s5 + $0xc] sm:$0xf]
    %v291 = vld [vmem:[%s6] sm:$0x1]
    %v293 = vperm.slane %v291, 0
    %v299 = vunpack.c.l.b16 %v287
    %v300 = vunpack.c.l.b16 %v288
    %v301 = vunpack.c.l.b16 %v289
    %v302 = vunpack.c.l.b16 %v290
    %v303 = vpack.c.b16 %v300, %v299
    %v304 = vpack.c.b16 %v302, %v301
    %vm307 = vcmask 261120
    %v309 = vsel %vm307, %v286, 0
    %311 = vmatpush.bf16.msra.mxu0 0
    %312 = vmatpush.bf16.msra.mxu0 0
    %313 = vmatpush.bf16.msra.mxu0 0
    %314 = vmatpush.bf16.msra.mxu0 0
    %315 = vmatpush.bf16.msra.mxu0 0
    %316 = vmatpush.bf16.msra.mxu0 0
    %317 = vmatpush.bf16.msra.mxu0 %v304
    %318 = vmatpush.bf16.msra.mxu0 %v303
    %319 = vmatmul.bf16.gmra.mxu0 %v309
    %v320 = vpop.f32.mrf.mxu0
    %v321 = vadd.f32 %v293, %v320
    %v322 = vpop.f32.mrf.mxu0
    %v323 = vadd.f32 %v293, %v322
    %324 = vdwg.mxu0
    %v325 = vld [vmem:[%s7] sm:$0xf]
    %v326 = vld [vmem:[%s7 + $0x4] sm:$0xf]
    %v327 = vld [vmem:[%s7 + $0x8] sm:$0xf]
    %v328 = vld [vmem:[%s7 + $0xc] sm:$0xf]
    %v329 = vpack.c.bf16 %v323, %v321
    %332 = vrot.lane.b32.xlu0 %v321, 96
    %v333 = vpop.permute.xlu0 %332
    %334 = vrot.lane.b32.xlu0 %v323, 96
    %v335 = vpop.permute.xlu0 %334
    %338 = vxpose.xlu0.b32.start [1/16] %v333, 128
    %339 = vxpose.xlu0.b32.cont [2/16] %v335, 128
    %340 = vxpose.xlu0.b32.cont [3/16] 0.0, 128
    %341 = vxpose.xlu0.b32.cont [4/16] 0.0, 128
    %342 = vxpose.xlu0.b32.cont [5/16] 0.0, 128
    %343 = vxpose.xlu0.b32.cont [6/16] 0.0, 128
    %344 = vxpose.xlu0.b32.cont [7/16] 0.0, 128
    %345 = vxpose.xlu0.b32.cont [8/16] 0.0, 128
    %346 = vxpose.xlu0.b32.cont [9/16] 0.0, 128
    %347 = vxpose.xlu0.b32.cont [10/16] 0.0, 128
    %348 = vxpose.xlu0.b32.cont [11/16] 0.0, 128
    %349 = vxpose.xlu0.b32.cont [12/16] 0.0, 128
    %350 = vxpose.xlu0.b32.cont [13/16] 0.0, 128
    %351 = vxpose.xlu0.b32.cont [14/16] 0.0, 128
    %352 = vxpose.xlu0.b32.cont [15/16] 0.0, 128
    %353 = vxpose.xlu0.b32.end [16/16] 0.0, 128
    %v354 = vpop.trf.xlu0
    %v355 = vpop.trf.xlu0
    %v356 = vpop.trf.xlu0
    %v357 = vpop.trf.xlu0
    %v358 = vpop.trf.xlu0
    %v359 = vpop.trf.xlu0
    %v360 = vpop.trf.xlu0
    %v361 = vpop.trf.xlu0
    %v362 = vpop.trf.xlu0
    %v363 = vpop.trf.xlu0
    %v364 = vpop.trf.xlu0
    %v365 = vpop.trf.xlu0
    %v366 = vpop.trf.xlu0
    %v367 = vpop.trf.xlu0
    %v368 = vpop.trf.xlu0
    %v369 = vpop.trf.xlu0
    %v370 = vpack.c.bf16 %v354, %v354
    %vm371 = vcmask 64512
    %v373 = vsel %vm371, %v329, 0
    %v376 = vsel %vm282, %v370, 0
    %378 = vmatpush.bf16.msra.mxu0 0
    %379 = vmatpush.bf16.msra.mxu0 0
    %380 = vmatpush.bf16.msra.mxu0 0
    %381 = vmatpush.bf16.msra.mxu0 0
    %382 = vmatpush.bf16.msra.mxu0 0
    %383 = vmatpush.bf16.msra.mxu0 0
    %384 = vmatpush.bf16.msra.mxu0 0
    %385 = vmatpush.bf16.msra.mxu0 %v376
    %386 = vmatmul.bf16.gmra.mxu0 %v373
    %v387 = vpop.f32.mrf.mxu0
    %v388 = vadd.f32 0.0, %v387
    %v389 = vpop.f32.mrf.mxu0
    %v390 = vadd.f32 0.0, %v389
    %391 = vdwg.mxu0
    %vm392 = vcmask 105472
    %v393 = vsel %vm392, %v388, -inf
    %394 = vmax.xlane.f32.xlu0 %v393
    %v395 = vpop.xlane.xlu0 %394
    %vm396 = vcmask 102400
    %v397 = vsel %vm396, %v390, -inf
    %398 = vmax.xlane.f32.xlu0 %v397
    %v399 = vpop.xlane.xlu0 %398
    %v400 = vsub.f32 %v388, %v395
    %v401 = vsub.f32 %v390, %v399
    %v402 = vmul.f32 %v400, 1.442695
    %v403 = vpow.pop %v402
    %v404 = vmul.f32 %v401, 1.442695
    %v405 = vpow.pop %v404
    %v406 = vsel %vm392, %v403, 0.0
    %407 = vadd.xlane.f32.xlu0 %v406
    %v408 = vpop.xlane.xlu0 %407
    %v409 = vsel %vm396, %v405, 0.0
    %410 = vadd.xlane.f32.xlu0 %v409
    %v411 = vpop.xlane.xlu0 %410
    %v412 = vrcp.pop %v408
    %v413 = vrcp.pop %v411
    %v414 = vmul.f32 %v403, %v412
    %v415 = vmul.f32 %v405, %v413
    %v416 = vpack.c.bf16 %v415, %v414
    %418 = vrot.lane.b32.xlu0 %v329, 64
    %v419 = vpop.permute.xlu0 %418
    %v421 = vsel %vm392, %v416, 0
    %vm423 = vcmask 1046528
    %v424 = vsel %vm280, 4294967295, 65535
    %v425 = vsel %vm423, %v424, 0
    %v427 = vand.u32 %v419, %v425
    %429 = vmatpush.bf16.msra.mxu0 0
    %430 = vmatpush.bf16.msra.mxu0 0
    %431 = vmatpush.bf16.msra.mxu0 0
    %432 = vmatpush.bf16.msra.mxu0 0
    %433 = vmatpush.bf16.msra.mxu0 0
    %434 = vmatpush.bf16.msra.mxu0 0
    %435 = vmatpush.bf16.msra.mxu0 0
    %436 = vmatpush.bf16.msra.mxu0 %v427
    %437 = vmatmul.bf16.gmra.mxu0 %v421
    %v438 = vpop.f32.mrf.mxu0
    %v439 = vadd.f32 0.0, %v438
    %v440 = vpop.f32.mrf.mxu0
    %v441 = vadd.f32 0.0, %v440
    %442 = vdwg.mxu0
    %v443 = vpack.c.bf16 %v441, %v439
    %444 = vrot.lane.b32.xlu0 %v321, 88
    %v445 = vpop.permute.xlu0 %444
    %446 = vrot.lane.b32.xlu0 %v323, 88
    %v447 = vpop.permute.xlu0 %446
    %450 = vxpose.xlu0.b32.start [1/16] %v445, 128
    %451 = vxpose.xlu0.b32.cont [2/16] %v447, 128
    %452 = vxpose.xlu0.b32.cont [3/16] 0.0, 128
    %453 = vxpose.xlu0.b32.cont [4/16] 0.0, 128
    %454 = vxpose.xlu0.b32.cont [5/16] 0.0, 128
    %455 = vxpose.xlu0.b32.cont [6/16] 0.0, 128
    %456 = vxpose.xlu0.b32.cont [7/16] 0.0, 128
    %457 = vxpose.xlu0.b32.cont [8/16] 0.0, 128
    %458 = vxpose.xlu0.b32.cont [9/16] 0.0, 128
    %459 = vxpose.xlu0.b32.cont [10/16] 0.0, 128
    %460 = vxpose.xlu0.b32.cont [11/16] 0.0, 128
    %461 = vxpose.xlu0.b32.cont [12/16] 0.0, 128
    %462 = vxpose.xlu0.b32.cont [13/16] 0.0, 128
    %463 = vxpose.xlu0.b32.cont [14/16] 0.0, 128
    %464 = vxpose.xlu0.b32.cont [15/16] 0.0, 128
    %465 = vxpose.xlu0.b32.end [16/16] 0.0, 128
    %v466 = vpop.trf.xlu0
    %v467 = vpop.trf.xlu0
    %v468 = vpop.trf.xlu0
    %v469 = vpop.trf.xlu0
    %v470 = vpop.trf.xlu0
    %v471 = vpop.trf.xlu0
    %v472 = vpop.trf.xlu0
    %v473 = vpop.trf.xlu0
    %v474 = vpop.trf.xlu0
    %v475 = vpop.trf.xlu0
    %v476 = vpop.trf.xlu0
    %v477 = vpop.trf.xlu0
    %v478 = vpop.trf.xlu0
    %v479 = vpop.trf.xlu0
    %v480 = vpop.trf.xlu0
    %v481 = vpop.trf.xlu0
    %v482 = vpack.c.bf16 %v466, %v466
    %483 = vrot.lane.b32.xlu0 %v329, 120
    %v484 = vpop.permute.xlu0 %483
    %v486 = vsel %vm371, %v484, 0
    %v489 = vsel %vm282, %v482, 0
    %491 = vmatpush.bf16.msra.mxu0 0
    %492 = vmatpush.bf16.msra.mxu0 0
    %493 = vmatpush.bf16.msra.mxu0 0
    %494 = vmatpush.bf16.msra.mxu0 0
    %495 = vmatpush.bf16.msra.mxu0 0
    %496 = vmatpush.bf16.msra.mxu0 0
    %497 = vmatpush.bf16.msra.mxu0 0
    %498 = vmatpush.bf16.msra.mxu0 %v489
    %499 = vmatmul.bf16.gmra.mxu0 %v486
    %v500 = vpop.f32.mrf.mxu0
    %v501 = vadd.f32 0.0, %v500
    %v502 = vpop.f32.mrf.mxu0
    %v503 = vadd.f32 0.0, %v502
    %504 = vdwg.mxu0
    %v505 = vsel %vm392, %v501, -inf
    %506 = vmax.xlane.f32.xlu0 %v505
    %v507 = vpop.xlane.xlu0 %506
    %v508 = vsel %vm396, %v503, -inf
    %509 = vmax.xlane.f32.xlu0 %v508
    %v510 = vpop.xlane.xlu0 %509
    %v511 = vsub.f32 %v501, %v507
    %v512 = vsub.f32 %v503, %v510
    %v513 = vmul.f32 %v511, 1.442695
    %v514 = vpow.pop %v513
    %v515 = vmul.f32 %v512, 1.442695
    %v516 = vpow.pop %v515
    %v517 = vsel %vm392, %v514, 0.0
    %518 = vadd.xlane.f32.xlu0 %v517
    %v519 = vpop.xlane.xlu0 %518
    %v520 = vsel %vm396, %v516, 0.0
    %521 = vadd.xlane.f32.xlu0 %v520
    %v522 = vpop.xlane.xlu0 %521
    %v523 = vrcp.pop %v519
    %v524 = vrcp.pop %v522
    %v525 = vmul.f32 %v514, %v523
    %v526 = vmul.f32 %v516, %v524
    %v527 = vpack.c.bf16 %v526, %v525
    %528 = vrot.lane.b32.xlu0 %v329, 56
    %v529 = vpop.permute.xlu0 %528
    %v531 = vsel %vm392, %v527, 0
    %v534 = vand.u32 %v529, %v425
    %536 = vmatpush.bf16.msra.mxu0 0
    %537 = vmatpush.bf16.msra.mxu0 0
    %538 = vmatpush.bf16.msra.mxu0 0
    %539 = vmatpush.bf16.msra.mxu0 0
    %540 = vmatpush.bf16.msra.mxu0 0
    %541 = vmatpush.bf16.msra.mxu0 0
    %542 = vmatpush.bf16.msra.mxu0 0
    %543 = vmatpush.bf16.msra.mxu0 %v534
    %544 = vmatmul.bf16.gmra.mxu0 %v531
    %v545 = vpop.f32.mrf.mxu0
    %v546 = vadd.f32 0.0, %v545
    %v547 = vpop.f32.mrf.mxu0
    %v548 = vadd.f32 0.0, %v547
    %549 = vdwg.mxu0
    %v550 = vpack.c.bf16 %v548, %v546
    %v552 = vsel %vm371, %v550, 0
    %v555 = vsel %vm282, %v326, 0
    %557 = vmatpush.bf16.msra.mxu0 0
    %558 = vmatpush.bf16.msra.mxu0 0
    %559 = vmatpush.bf16.msra.mxu0 0
    %560 = vmatpush.bf16.msra.mxu0 0
    %561 = vmatpush.bf16.msra.mxu0 0
    %562 = vmatpush.bf16.msra.mxu0 0
    %563 = vmatpush.bf16.msra.mxu0 0
    %564 = vmatpush.bf16.msra.mxu0 %v555
    %565 = vmatmul.bf16.gmra.mxu0 %v552
    %v566 = vpop.f32.mrf.mxu0
    %v567 = vadd.f32 0.0, %v566
    %v568 = vpop.f32.mrf.mxu0
    %v569 = vadd.f32 0.0, %v568
    %570 = vdwg.mxu0
    %v572 = vsel %vm371, %v443, 0
    %v575 = vsel %vm282, %v325, 0
    %577 = vmatpush.bf16.msra.mxu0 0
    %578 = vmatpush.bf16.msra.mxu0 0
    %579 = vmatpush.bf16.msra.mxu0 0
    %580 = vmatpush.bf16.msra.mxu0 0
    %581 = vmatpush.bf16.msra.mxu0 0
    %582 = vmatpush.bf16.msra.mxu0 0
    %583 = vmatpush.bf16.msra.mxu0 0
    %584 = vmatpush.bf16.msra.mxu0 %v575
    %585 = vmatmul.bf16.gmra.mxu0 %v572
    %v586 = vpop.f32.mrf.mxu0
    %v587 = vadd.f32 %v567, %v586
    %v588 = vpop.f32.mrf.mxu0
    %v589 = vadd.f32 %v569, %v588
    %590 = vdwg.mxu0
    %591 = vrot.lane.b32.xlu0 %v321, 80
    %v592 = vpop.permute.xlu0 %591
    %593 = vrot.lane.b32.xlu0 %v323, 80
    %v594 = vpop.permute.xlu0 %593
    %597 = vxpose.xlu0.b32.start [1/16] %v592, 128
    %598 = vxpose.xlu0.b32.cont [2/16] %v594, 128
    %599 = vxpose.xlu0.b32.cont [3/16] 0.0, 128
    %600 = vxpose.xlu0.b32.cont [4/16] 0.0, 128
    %601 = vxpose.xlu0.b32.cont [5/16] 0.0, 128
    %602 = vxpose.xlu0.b32.cont [6/16] 0.0, 128
    %603 = vxpose.xlu0.b32.cont [7/16] 0.0, 128
    %604 = vxpose.xlu0.b32.cont [8/16] 0.0, 128
    %605 = vxpose.xlu0.b32.cont [9/16] 0.0, 128
    %606 = vxpose.xlu0.b32.cont [10/16] 0.0, 128
    %607 = vxpose.xlu0.b32.cont [11/16] 0.0, 128
    %608 = vxpose.xlu0.b32.cont [12/16] 0.0, 128
    %609 = vxpose.xlu0.b32.cont [13/16] 0.0, 128
    %610 = vxpose.xlu0.b32.cont [14/16] 0.0, 128
    %611 = vxpose.xlu0.b32.cont [15/16] 0.0, 128
    %612 = vxpose.xlu0.b32.end [16/16] 0.0, 128
    %v613 = vpop.trf.xlu0
    %v614 = vpop.trf.xlu0
    %v615 = vpop.trf.xlu0
    %v616 = vpop.trf.xlu0
    %v617 = vpop.trf.xlu0
    %v618 = vpop.trf.xlu0
    %v619 = vpop.trf.xlu0
    %v620 = vpop.trf.xlu0
    %v621 = vpop.trf.xlu0
    %v622 = vpop.trf.xlu0
    %v623 = vpop.trf.xlu0
    %v624 = vpop.trf.xlu0
    %v625 = vpop.trf.xlu0
    %v626 = vpop.trf.xlu0
    %v627 = vpop.trf.xlu0
    %v628 = vpop.trf.xlu0
    %v629 = vpack.c.bf16 %v613, %v613
    %630 = vrot.lane.b32.xlu0 %v329, 112
    %v631 = vpop.permute.xlu0 %630
    %v633 = vsel %vm371, %v631, 0
    %v636 = vsel %vm282, %v629, 0
    %638 = vmatpush.bf16.msra.mxu0 0
    %639 = vmatpush.bf16.msra.mxu0 0
    %640 = vmatpush.bf16.msra.mxu0 0
    %641 = vmatpush.bf16.msra.mxu0 0
    %642 = vmatpush.bf16.msra.mxu0 0
    %643 = vmatpush.bf16.msra.mxu0 0
    %644 = vmatpush.bf16.msra.mxu0 0
    %645 = vmatpush.bf16.msra.mxu0 %v636
    %646 = vmatmul.bf16.gmra.mxu0 %v633
    %v647 = vpop.f32.mrf.mxu0
    %v648 = vadd.f32 0.0, %v647
    %v649 = vpop.f32.mrf.mxu0
    %v650 = vadd.f32 0.0, %v649
    %651 = vdwg.mxu0
    %v652 = vsel %vm392, %v648, -inf
    %653 = vmax.xlane.f32.xlu0 %v652
    %v654 = vpop.xlane.xlu0 %653
    %v655 = vsel %vm396, %v650, -inf
    %656 = vmax.xlane.f32.xlu0 %v655
    %v657 = vpop.xlane.xlu0 %656
    %v658 = vsub.f32 %v648, %v654
    %v659 = vsub.f32 %v650, %v657
    %v660 = vmul.f32 %v658, 1.442695
    %v661 = vpow.pop %v660
    %v662 = vmul.f32 %v659, 1.442695
    %v663 = vpow.pop %v662
    %v664 = vsel %vm392, %v661, 0.0
    %665 = vadd.xlane.f32.xlu0 %v664
    %v666 = vpop.xlane.xlu0 %665
    %v667 = vsel %vm396, %v663, 0.0
    %668 = vadd.xlane.f32.xlu0 %v667
    %v669 = vpop.xlane.xlu0 %668
    %v670 = vrcp.pop %v666
    %v671 = vrcp.pop %v669
    %v672 = vmul.f32 %v661, %v670
    %v673 = vmul.f32 %v663, %v671
    %v674 = vpack.c.bf16 %v673, %v672
    %675 = vrot.lane.b32.xlu0 %v329, 48
    %v676 = vpop.permute.xlu0 %675
    %v678 = vsel %vm392, %v674, 0
    %v681 = vand.u32 %v676, %v425
    %683 = vmatpush.bf16.msra.mxu0 0
    %684 = vmatpush.bf16.msra.mxu0 0
    %685 = vmatpush.bf16.msra.mxu0 0
    %686 = vmatpush.bf16.msra.mxu0 0
    %687 = vmatpush.bf16.msra.mxu0 0
    %688 = vmatpush.bf16.msra.mxu0 0
    %689 = vmatpush.bf16.msra.mxu0 0
    %690 = vmatpush.bf16.msra.mxu0 %v681
    %691 = vmatmul.bf16.gmra.mxu0 %v678
    %v692 = vpop.f32.mrf.mxu0
    %v693 = vadd.f32 0.0, %v692
    %v694 = vpop.f32.mrf.mxu0
    %v695 = vadd.f32 0.0, %v694
    %696 = vdwg.mxu0
    %v697 = vpack.c.bf16 %v695, %v693
    %v699 = vsel %vm371, %v697, 0
    %v702 = vsel %vm282, %v327, 0
    %704 = vmatpush.bf16.msra.mxu0 0
    %705 = vmatpush.bf16.msra.mxu0 0
    %706 = vmatpush.bf16.msra.mxu0 0
    %707 = vmatpush.bf16.msra.mxu0 0
    %708 = vmatpush.bf16.msra.mxu0 0
    %709 = vmatpush.bf16.msra.mxu0 0
    %710 = vmatpush.bf16.msra.mxu0 0
    %711 = vmatpush.bf16.msra.mxu0 %v702
    %712 = vmatmul.bf16.gmra.mxu0 %v699
    %v713 = vpop.f32.mrf.mxu0
    %v714 = vadd.f32 0.0, %v713
    %v715 = vpop.f32.mrf.mxu0
    %v716 = vadd.f32 0.0, %v715
    %717 = vdwg.mxu0
    %v718 = vadd.f32 %v587, %v714
    %v719 = vadd.f32 %v589, %v716
    %720 = vrot.lane.b32.xlu0 %v321, 72
    %v721 = vpop.permute.xlu0 %720
    %722 = vrot.lane.b32.xlu0 %v323, 72
    %v723 = vpop.permute.xlu0 %722
    %726 = vxpose.xlu0.b32.start [1/16] %v721, 128
    %727 = vxpose.xlu0.b32.cont [2/16] %v723, 128
    %728 = vxpose.xlu0.b32.cont [3/16] 0.0, 128
    %729 = vxpose.xlu0.b32.cont [4/16] 0.0, 128
    %730 = vxpose.xlu0.b32.cont [5/16] 0.0, 128
    %731 = vxpose.xlu0.b32.cont [6/16] 0.0, 128
    %732 = vxpose.xlu0.b32.cont [7/16] 0.0, 128
    %733 = vxpose.xlu0.b32.cont [8/16] 0.0, 128
    %734 = vxpose.xlu0.b32.cont [9/16] 0.0, 128
    %735 = vxpose.xlu0.b32.cont [10/16] 0.0, 128
    %736 = vxpose.xlu0.b32.cont [11/16] 0.0, 128
    %737 = vxpose.xlu0.b32.cont [12/16] 0.0, 128
    %738 = vxpose.xlu0.b32.cont [13/16] 0.0, 128
    %739 = vxpose.xlu0.b32.cont [14/16] 0.0, 128
    %740 = vxpose.xlu0.b32.cont [15/16] 0.0, 128
    %741 = vxpose.xlu0.b32.end [16/16] 0.0, 128
    %v742 = vpop.trf.xlu0
    %v743 = vpop.trf.xlu0
    %v744 = vpop.trf.xlu0
    %v745 = vpop.trf.xlu0
    %v746 = vpop.trf.xlu0
    %v747 = vpop.trf.xlu0
    %v748 = vpop.trf.xlu0
    %v749 = vpop.trf.xlu0
    %v750 = vpop.trf.xlu0
    %v751 = vpop.trf.xlu0
    %v752 = vpop.trf.xlu0
    %v753 = vpop.trf.xlu0
    %v754 = vpop.trf.xlu0
    %v755 = vpop.trf.xlu0
    %v756 = vpop.trf.xlu0
    %v757 = vpop.trf.xlu0
    %v758 = vpack.c.bf16 %v742, %v742
    %759 = vrot.lane.b32.xlu0 %v329, 104
    %v760 = vpop.permute.xlu0 %759
    %v762 = vsel %vm371, %v760, 0
    %v765 = vsel %vm282, %v758, 0
    %767 = vmatpush.bf16.msra.mxu0 0
    %768 = vmatpush.bf16.msra.mxu0 0
    %769 = vmatpush.bf16.msra.mxu0 0
    %770 = vmatpush.bf16.msra.mxu0 0
    %771 = vmatpush.bf16.msra.mxu0 0
    %772 = vmatpush.bf16.msra.mxu0 0
    %773 = vmatpush.bf16.msra.mxu0 0
    %774 = vmatpush.bf16.msra.mxu0 %v765
    %775 = vmatmul.bf16.gmra.mxu0 %v762
    %v776 = vpop.f32.mrf.mxu0
    %v777 = vadd.f32 0.0, %v776
    %v778 = vpop.f32.mrf.mxu0
    %v779 = vadd.f32 0.0, %v778
    %780 = vdwg.mxu0
    %v781 = vsel %vm392, %v777, -inf
    %782 = vmax.xlane.f32.xlu0 %v781
    %v783 = vpop.xlane.xlu0 %782
    %v784 = vsel %vm396, %v779, -inf
    %785 = vmax.xlane.f32.xlu0 %v784
    %v786 = vpop.xlane.xlu0 %785
    %v787 = vsub.f32 %v777, %v783
    %v788 = vsub.f32 %v779, %v786
    %v789 = vmul.f32 %v787, 1.442695
    %v790 = vpow.pop %v789
    %v791 = vmul.f32 %v788, 1.442695
    %v792 = vpow.pop %v791
    %v793 = vsel %vm392, %v790, 0.0
    %794 = vadd.xlane.f32.xlu0 %v793
    %v795 = vpop.xlane.xlu0 %794
    %v796 = vsel %vm396, %v792, 0.0
    %797 = vadd.xlane.f32.xlu0 %v796
    %v798 = vpop.xlane.xlu0 %797
    %v799 = vrcp.pop %v795
    %v800 = vrcp.pop %v798
    %v801 = vmul.f32 %v790, %v799
    %v802 = vmul.f32 %v792, %v800
    %v803 = vpack.c.bf16 %v802, %v801
    %804 = vrot.lane.b32.xlu0 %v329, 40
    %v805 = vpop.permute.xlu0 %804
    %v807 = vsel %vm392, %v803, 0
    %v810 = vand.u32 %v805, %v425
    %812 = vmatpush.bf16.msra.mxu0 0
    %813 = vmatpush.bf16.msra.mxu0 0
    %814 = vmatpush.bf16.msra.mxu0 0
    %815 = vmatpush.bf16.msra.mxu0 0
    %816 = vmatpush.bf16.msra.mxu0 0
    %817 = vmatpush.bf16.msra.mxu0 0
    %818 = vmatpush.bf16.msra.mxu0 0
    %819 = vmatpush.bf16.msra.mxu0 %v810
    %820 = vmatmul.bf16.gmra.mxu0 %v807
    %v821 = vpop.f32.mrf.mxu0
    %v822 = vadd.f32 0.0, %v821
    %v823 = vpop.f32.mrf.mxu0
    %v824 = vadd.f32 0.0, %v823
    %825 = vdwg.mxu0
    %v826 = vpack.c.bf16 %v824, %v822
    %v828 = vsel %vm371, %v826, 0
    %v831 = vsel %vm282, %v328, 0
    %833 = vmatpush.bf16.msra.mxu0 0
    %834 = vmatpush.bf16.msra.mxu0 0
    %835 = vmatpush.bf16.msra.mxu0 0
    %836 = vmatpush.bf16.msra.mxu0 0
    %837 = vmatpush.bf16.msra.mxu0 0
    %838 = vmatpush.bf16.msra.mxu0 0
    %839 = vmatpush.bf16.msra.mxu0 0
    %840 = vmatpush.bf16.msra.mxu0 %v831
    %841 = vmatmul.bf16.gmra.mxu0 %v828
    %v842 = vpop.f32.mrf.mxu0
    %v843 = vadd.f32 0.0, %v842
    %v844 = vpop.f32.mrf.mxu0
    %v845 = vadd.f32 0.0, %v844
    %846 = vdwg.mxu0
    %v847 = vadd.f32 %v718, %v843
    %v848 = vadd.f32 %v719, %v845
    %v849 = vld [vmem:[%s8] sm:$0x1]
    %v851 = vperm.slane %v849, 0
    %v853 = vadd.f32 %v847, %v851
    %v854 = vadd.f32 %v848, %v851
    %v855 = vadd.f32 %v284, %v853
    %v856 = vadd.f32 %v285, %v854
    %v857 = vld [vmem:[#allocation7] sm:$0x1]
    %v858 = vld [vmem:[#allocation8] sm:$0x1]
    %v859 = vsel %vm307, %v855, 0.0
    %860 = vadd.xlane.f32.xlu0 %v859
    %v861 = vpop.xlane.xlu0 %860
    %vm862 = vcmask 258048
    %v863 = vsel %vm862, %v856, 0.0
    %864 = vadd.xlane.f32.xlu0 %v863
    %v865 = vpop.xlane.xlu0 %864
    %v866 = vrcp.pop 32.0
    %v867 = vmul.f32 32.0, %v866
    %v868 = vsub.f32 1.0, %v867
    %v869 = vmul.f32 %v866, %v868
    %v870 = vadd.f32 %v866, %v869
    %vm871 = vweird.f32 %v866
    %v872 = vsel %vm871, %v866, %v870
    %v873 = vmul.f32 %v861, %v872
    %v874 = vmul.f32 %v865, %v872
    %v875 = vsub.f32 %v855, %v873
    %v876 = vsub.f32 %v856, %v874
    %v877 = vmul.f32 %v875, %v875
    %v878 = vmul.f32 %v876, %v876
    %v879 = vsel %vm307, %v877, 0.0
    %880 = vadd.xlane.f32.xlu0 %v879
    %v881 = vpop.xlane.xlu0 %880
    %v882 = vsel %vm862, %v878, 0.0
    %883 = vadd.xlane.f32.xlu0 %v882
    %v884 = vpop.xlane.xlu0 %883
    %v885 = vmul.f32 %v881, %v872
    %v886 = vmul.f32 %v884, %v872
    %v887 = vadd.f32 %v885, 1e-05
    %v888 = vadd.f32 %v886, 1e-05
    %v889 = vrsqrt.pop %v887
    %v890 = vmul.f32 %v889, %v887
    %v891 = vmul.f32 %v890, %v889
    %v892 = vmul.f32 0.5, %v891
    %v893 = vsub.f32 1.5, %v892
    %v894 = vmul.f32 %v889, %v893
    %vm895 = vweird.f32 %v887
    %vm896 = vweird.f32 %v889
    %vm897 = vmor %vm895, %vm896
    %v898 = vsel %vm897, %v889, %v894
    %v899 = vrsqrt.pop %v888
    %v900 = vmul.f32 %v899, %v888
    %v901 = vmul.f32 %v900, %v899
    %v902 = vmul.f32 0.5, %v901
    %v903 = vsub.f32 1.5, %v902
    %v904 = vmul.f32 %v899, %v903
    %vm905 = vweird.f32 %v888
    %vm906 = vweird.f32 %v899
    %vm907 = vmor %vm905, %vm906
    %v908 = vsel %vm907, %v899, %v904
    %v909 = vmul.f32 %v875, %v898
    %v910 = vmul.f32 %v876, %v908
    %v912 = vperm.slane %v857, 0
    %v914 = vmul.f32 %v909, %v912
    %v915 = vmul.f32 %v910, %v912
    %v917 = vperm.slane %v858, 0
    %v919 = vadd.f32 %v914, %v917
    %v920 = vadd.f32 %v915, %v917
    %v921 = vpack.c.bf16 %v920, %v919
    %v922 = vld [vmem:[#allocation10] sm:$0xf]
    %v923 = vld [vmem:[#allocation10 + $0x4] sm:$0xf]
    %v924 = vld [vmem:[#allocation10 + $0x8] sm:$0xf]
    %v925 = vld [vmem:[#allocation10 + $0xc] sm:$0xf]
    %v926 = vld [vmem:[#allocation11] sm:$0x1]
    %v928 = vperm.slane %v926, 0
    %v934 = vunpack.c.l.b16 %v922
    %v935 = vunpack.c.l.b16 %v923
    %v936 = vunpack.c.l.b16 %v924
    %v937 = vunpack.c.l.b16 %v925
    %v938 = vpack.c.b16 %v935, %v934
    %v939 = vpack.c.b16 %v937, %v936
    %v943 = vsel %vm307, %v921, 0
    %945 = vmatpush.bf16.msra.mxu0 0
    %946 = vmatpush.bf16.msra.mxu0 0
    %947 = vmatpush.bf16.msra.mxu0 0
    %948 = vmatpush.bf16.msra.mxu0 0
    %949 = vmatpush.bf16.msra.mxu0 0
    %950 = vmatpush.bf16.msra.mxu0 0
    %951 = vmatpush.bf16.msra.mxu0 %v939
    %952 = vmatpush.bf16.msra.mxu0 %v938
    %953 = vmatmul.bf16.gmra.mxu0 %v943
    %v954 = vpop.f32.mrf.mxu0
    %v955 = vadd.f32 %v928, %v954
    %v956 = vpop.f32.mrf.mxu0
    %v957 = vadd.f32 %v928, %v956
    %958 = vdwg.mxu0
    %v959 = vmax.f32 %v955, 0.0
    %v960 = vmax.f32 %v957, 0.0
    %v961 = vpack.c.bf16 %v960, %v959
    %v962 = vld [vmem:[%s13] sm:$0xf]
    %v963 = vld [vmem:[%s13 + $0x4] sm:$0xf]
    %v964 = vld [vmem:[%s13 + $0x8] sm:$0xf]
    %v965 = vld [vmem:[%s13 + $0xc] sm:$0xf]
    %v966 = vld [vmem:[%s13 + $0x10] sm:$0xf]
    %v967 = vld [vmem:[%s13 + $0x14] sm:$0xf]
    %v968 = vld [vmem:[%s13 + $0x18] sm:$0xf]
    %v969 = vld [vmem:[%s13 + $0x1c] sm:$0xf]
    %v970 = vld [vmem:[#allocation13] sm:$0x1]
    %v972 = vperm.slane %v970, 0
    %v982 = vunpack.c.l.b16 %v962
    %v983 = vunpack.c.l.b16 %v963
    %v984 = vunpack.c.l.b16 %v964
    %v985 = vunpack.c.l.b16 %v965
    %v986 = vunpack.c.l.b16 %v966
    %v987 = vunpack.c.l.b16 %v967
    %v988 = vunpack.c.l.b16 %v968
    %v989 = vunpack.c.l.b16 %v969
    %v990 = vpack.c.b16 %v983, %v982
    %v991 = vpack.c.b16 %v985, %v984
    %v992 = vpack.c.b16 %v987, %v986
    %v993 = vpack.c.b16 %v989, %v988
    %v999 = vsel %vm255, %v961, 0
    %1001 = vmatpush.bf16.msra.mxu0 0
    %1002 = vmatpush.bf16.msra.mxu0 0
    %1003 = vmatpush.bf16.msra.mxu0 0
    %1004 = vmatpush.bf16.msra.mxu0 0
    %1005 = vmatpush.bf16.msra.mxu0 %v993
    %1006 = vmatpush.bf16.msra.mxu0 %v992
    %1007 = vmatpush.bf16.msra.mxu0 %v991
    %1008 = vmatpush.bf16.msra.mxu0 %v990
    %1009 = vmatmul.bf16.gmra.mxu0 %v999
    %v1010 = vpop.f32.mrf.mxu0
    %v1011 = vadd.f32 %v972, %v1010
    %v1012 = vpop.f32.mrf.mxu0
    %v1013 = vadd.f32 %v972, %v1012
    %1014 = vdwg.mxu0
    %v1015 = vadd.f32 %v919, %v1011
    %v1016 = vadd.f32 %v920, %v1013
    %v1017 = vld [vmem:[#allocation14] sm:$0x1]
    %v1018 = vld [vmem:[#allocation16] sm:$0x1]
    %v1019 = vsel %vm307, %v1015, 0.0
    %1020 = vadd.xlane.f32.xlu0 %v1019
    %v1021 = vpop.xlane.xlu0 %1020
    %v1022 = vsel %vm862, %v1016, 0.0
    %1023 = vadd.xlane.f32.xlu0 %v1022
    %v1024 = vpop.xlane.xlu0 %1023
    %v1025 = vmul.f32 %v1021, %v872
    %v1026 = vmul.f32 %v1024, %v872
    %v1027 = vsub.f32 %v1015, %v1025
    %v1028 = vsub.f32 %v1016, %v1026
    %v1029 = vmul.f32 %v1027, %v1027
    %v1030 = vmul.f32 %v1028, %v1028
    %v1031 = vsel %vm307, %v1029, 0.0
    %1032 = vadd.xlane.f32.xlu0 %v1031
    %v1033 = vpop.xlane.xlu0 %1032
    %v1034 = vsel %vm862, %v1030, 0.0
    %1035 = vadd.xlane.f32.xlu0 %v1034
    %v1036 = vpop.xlane.xlu0 %1035
    %v1037 = vmul.f32 %v1033, %v872
    %v1038 = vmul.f32 %v1036, %v872
    %v1039 = vadd.f32 %v1037, 1e-05
    %v1040 = vadd.f32 %v1038, 1e-05
    %v1041 = vrsqrt.pop %v1039
    %v1042 = vmul.f32 %v1041, %v1039
    %v1043 = vmul.f32 %v1042, %v1041
    %v1044 = vmul.f32 0.5, %v1043
    %v1045 = vsub.f32 1.5, %v1044
    %v1046 = vmul.f32 %v1041, %v1045
    %vm1047 = vweird.f32 %v1039
    %vm1048 = vweird.f32 %v1041
    %vm1049 = vmor %vm1047, %vm1048
    %v1050 = vsel %vm1049, %v1041, %v1046
    %v1051 = vrsqrt.pop %v1040
    %v1052 = vmul.f32 %v1051, %v1040
    %v1053 = vmul.f32 %v1052, %v1051
    %v1054 = vmul.f32 0.5, %v1053
    %v1055 = vsub.f32 1.5, %v1054
    %v1056 = vmul.f32 %v1051, %v1055
    %vm1057 = vweird.f32 %v1040
    %vm1058 = vweird.f32 %v1051
    %vm1059 = vmor %vm1057, %vm1058
    %v1060 = vsel %vm1059, %v1051, %v1056
    %v1061 = vmul.f32 %v1027, %v1050
    %v1062 = vmul.f32 %v1028, %v1060
    %v1064 = vperm.slane %v1017, 0
    %v1066 = vmul.f32 %v1061, %v1064
    %v1067 = vmul.f32 %v1062, %v1064
    %v1069 = vperm.slane %v1018, 0
    %v1071 = vadd.f32 %v1066, %v1069
    %v1072 = vadd.f32 %v1067, %v1069
    %v1073 = vpack.c.bf16 %v1072, %v1071
    %s1074 = scalar_lea.vmem %s5, 16
    %v1075 = vld [vmem:[%s1074] sm:$0xf]
    %v1076 = vld [vmem:[%s1074 + $0x4] sm:$0xf]
    %v1077 = vld [vmem:[%s1074 + $0x8] sm:$0xf]
    %v1078 = vld [vmem:[%s1074 + $0xc] sm:$0xf]
    %s1079 = scalar_lea.vmem %s6, 1
    %v1080 = vld [vmem:[%s1079] sm:$0x1]
    %v1082 = vperm.slane %v1080, 0
    %v1088 = vunpack.c.l.b16 %v1075
    %v1089 = vunpack.c.l.b16 %v1076
    %v1090 = vunpack.c.l.b16 %v1077
    %v1091 = vunpack.c.l.b16 %v1078
    %v1092 = vpack.c.b16 %v1089, %v1088
    %v1093 = vpack.c.b16 %v1091, %v1090
    %v1097 = vsel %vm307, %v1073, 0
    %1099 = vmatpush.bf16.msra.mxu0 0
    %1100 = vmatpush.bf16.msra.mxu0 0
    %1101 = vmatpush.bf16.msra.mxu0 0
    %1102 = vmatpush.bf16.msra.mxu0 0
    %1103 = vmatpush.bf16.msra.mxu0 0
    %1104 = vmatpush.bf16.msra.mxu0 0
    %1105 = vmatpush.bf16.msra.mxu0 %v1093
    %1106 = vmatpush.bf16.msra.mxu0 %v1092
    %1107 = vmatmul.bf16.gmra.mxu0 %v1097
    %v1108 = vpop.f32.mrf.mxu0
    %v1109 = vadd.f32 %v1082, %v1108
    %v1110 = vpop.f32.mrf.mxu0
    %v1111 = vadd.f32 %v1082, %v1110
    %1112 = vdwg.mxu0
    %s1113 = scalar_lea.vmem %s7, 16
    %v1114 = vld [vmem:[%s1113] sm:$0xf]
    %v1115 = vld [vmem:[%s1113 + $0x4] sm:$0xf]
    %v1116 = vld [vmem:[%s1113 + $0x8] sm:$0xf]
    %v1117 = vld [vmem:[%s1113 + $0xc] sm:$0xf]
    %v1118 = vpack.c.bf16 %v1111, %v1109
    %1121 = vrot.lane.b32.xlu0 %v1109, 96
    %v1122 = vpop.permute.xlu0 %1121
    %1123 = vrot.lane.b32.xlu0 %v1111, 96
    %v1124 = vpop.permute.xlu0 %1123
    %1127 = vxpose.xlu0.b32.start [1/16] %v1122, 128
    %1128 = vxpose.xlu0.b32.cont [2/16] %v1124, 128
    %1129 = vxpose.xlu0.b32.cont [3/16] 0.0, 128
    %1130 = vxpose.xlu0.b32.cont [4/16] 0.0, 128
    %1131 = vxpose.xlu0.b32.cont [5/16] 0.0, 128
    %1132 = vxpose.xlu0.b32.cont [6/16] 0.0, 128
    %1133 = vxpose.xlu0.b32.cont [7/16] 0.0, 128
    %1134 = vxpose.xlu0.b32.cont [8/16] 0.0, 128
    %1135 = vxpose.xlu0.b32.cont [9/16] 0.0, 128
    %1136 = vxpose.xlu0.b32.cont [10/16] 0.0, 128
    %1137 = vxpose.xlu0.b32.cont [11/16] 0.0, 128
    %1138 = vxpose.xlu0.b32.cont [12/16] 0.0, 128
    %1139 = vxpose.xlu0.b32.cont [13/16] 0.0, 128
    %1140 = vxpose.xlu0.b32.cont [14/16] 0.0, 128
    %1141 = vxpose.xlu0.b32.cont [15/16] 0.0, 128
    %1142 = vxpose.xlu0.b32.end [16/16] 0.0, 128
    %v1143 = vpop.trf.xlu0
    %v1144 = vpop.trf.xlu0
    %v1145 = vpop.trf.xlu0
    %v1146 = vpop.trf.xlu0
    %v1147 = vpop.trf.xlu0
    %v1148 = vpop.trf.xlu0
    %v1149 = vpop.trf.xlu0
    %v1150 = vpop.trf.xlu0
    %v1151 = vpop.trf.xlu0
    %v1152 = vpop.trf.xlu0
    %v1153 = vpop.trf.xlu0
    %v1154 = vpop.trf.xlu0
    %v1155 = vpop.trf.xlu0
    %v1156 = vpop.trf.xlu0
    %v1157 = vpop.trf.xlu0
    %v1158 = vpop.trf.xlu0
    %v1159 = vpack.c.bf16 %v1143, %v1143
    %v1161 = vsel %vm371, %v1118, 0
    %v1164 = vsel %vm282, %v1159, 0
    %1166 = vmatpush.bf16.msra.mxu0 0
    %1167 = vmatpush.bf16.msra.mxu0 0
    %1168 = vmatpush.bf16.msra.mxu0 0
    %1169 = vmatpush.bf16.msra.mxu0 0
    %1170 = vmatpush.bf16.msra.mxu0 0
    %1171 = vmatpush.bf16.msra.mxu0 0
    %1172 = vmatpush.bf16.msra.mxu0 0
    %1173 = vmatpush.bf16.msra.mxu0 %v1164
    %1174 = vmatmul.bf16.gmra.mxu0 %v1161
    %v1175 = vpop.f32.mrf.mxu0
    %v1176 = vadd.f32 0.0, %v1175
    %v1177 = vpop.f32.mrf.mxu0
    %v1178 = vadd.f32 0.0, %v1177
    %1179 = vdwg.mxu0
    %v1180 = vsel %vm392, %v1176, -inf
    %1181 = vmax.xlane.f32.xlu0 %v1180
    %v1182 = vpop.xlane.xlu0 %1181
    %v1183 = vsel %vm396, %v1178, -inf
    %1184 = vmax.xlane.f32.xlu0 %v1183
    %v1185 = vpop.xlane.xlu0 %1184
    %v1186 = vsub.f32 %v1176, %v1182
    %v1187 = vsub.f32 %v1178, %v1185
    %v1188 = vmul.f32 %v1186, 1.442695
    %v1189 = vpow.pop %v1188
    %v1190 = vmul.f32 %v1187, 1.442695
    %v1191 = vpow.pop %v1190
    %v1192 = vsel %vm392, %v1189, 0.0
    %1193 = vadd.xlane.f32.xlu0 %v1192
    %v1194 = vpop.xlane.xlu0 %1193
    %v1195 = vsel %vm396, %v1191, 0.0
    %1196 = vadd.xlane.f32.xlu0 %v1195
    %v1197 = vpop.xlane.xlu0 %1196
    %v1198 = vrcp.pop %v1194
    %v1199 = vrcp.pop %v1197
    %v1200 = vmul.f32 %v1189, %v1198
    %v1201 = vmul.f32 %v1191, %v1199
    %v1202 = vpack.c.bf16 %v1201, %v1200
    %1204 = vrot.lane.b32.xlu0 %v1118, 64
    %v1205 = vpop.permute.xlu0 %1204
    %v1207 = vsel %vm392, %v1202, 0
    %v1210 = vand.u32 %v1205, %v425
    %1212 = vmatpush.bf16.msra.mxu0 0
    %1213 = vmatpush.bf16.msra.mxu0 0
    %1214 = vmatpush.bf16.msra.mxu0 0
    %1215 = vmatpush.bf16.msra.mxu0 0
    %1216 = vmatpush.bf16.msra.mxu0 0
    %1217 = vmatpush.bf16.msra.mxu0 0
    %1218 = vmatpush.bf16.msra.mxu0 0
    %1219 = vmatpush.bf16.msra.mxu0 %v1210
    %1220 = vmatmul.bf16.gmra.mxu0 %v1207
    %v1221 = vpop.f32.mrf.mxu0
    %v1222 = vadd.f32 0.0, %v1221
    %v1223 = vpop.f32.mrf.mxu0
    %v1224 = vadd.f32 0.0, %v1223
    %1225 = vdwg.mxu0
    %v1226 = vpack.c.bf16 %v1224, %v1222
    %1227 = vrot.lane.b32.xlu0 %v1109, 88
    %v1228 = vpop.permute.xlu0 %1227
    %1229 = vrot.lane.b32.xlu0 %v1111, 88
    %v1230 = vpop.permute.xlu0 %1229
    %1233 = vxpose.xlu0.b32.start [1/16] %v1228, 128
    %1234 = vxpose.xlu0.b32.cont [2/16] %v1230, 128
    %1235 = vxpose.xlu0.b32.cont [3/16] 0.0, 128
    %1236 = vxpose.xlu0.b32.cont [4/16] 0.0, 128
    %1237 = vxpose.xlu0.b32.cont [5/16] 0.0, 128
    %1238 = vxpose.xlu0.b32.cont [6/16] 0.0, 128
    %1239 = vxpose.xlu0.b32.cont [7/16] 0.0, 128
    %1240 = vxpose.xlu0.b32.cont [8/16] 0.0, 128
    %1241 = vxpose.xlu0.b32.cont [9/16] 0.0, 128
    %1242 = vxpose.xlu0.b32.cont [10/16] 0.0, 128
    %1243 = vxpose.xlu0.b32.cont [11/16] 0.0, 128
    %1244 = vxpose.xlu0.b32.cont [12/16] 0.0, 128
    %1245 = vxpose.xlu0.b32.cont [13/16] 0.0, 128
    %1246 = vxpose.xlu0.b32.cont [14/16] 0.0, 128
    %1247 = vxpose.xlu0.b32.cont [15/16] 0.0, 128
    %1248 = vxpose.xlu0.b32.end [16/16] 0.0, 128
    %v1249 = vpop.trf.xlu0
    %v1250 = vpop.trf.xlu0
    %v1251 = vpop.trf.xlu0
    %v1252 = vpop.trf.xlu0
    %v1253 = vpop.trf.xlu0
    %v1254 = vpop.trf.xlu0
    %v1255 = vpop.trf.xlu0
    %v1256 = vpop.trf.xlu0
    %v1257 = vpop.trf.xlu0
    %v1258 = vpop.trf.xlu0
    %v1259 = vpop.trf.xlu0
    %v1260 = vpop.trf.xlu0
    %v1261 = vpop.trf.xlu0
    %v1262 = vpop.trf.xlu0
    %v1263 = vpop.trf.xlu0
    %v1264 = vpop.trf.xlu0
    %v1265 = vpack.c.bf16 %v1249, %v1249
    %1266 = vrot.lane.b32.xlu0 %v1118, 120
    %v1267 = vpop.permute.xlu0 %1266
    %v1269 = vsel %vm371, %v1267, 0
    %v1272 = vsel %vm282, %v1265, 0
    %1274 = vmatpush.bf16.msra.mxu0 0
    %1275 = vmatpush.bf16.msra.mxu0 0
    %1276 = vmatpush.bf16.msra.mxu0 0
    %1277 = vmatpush.bf16.msra.mxu0 0
    %1278 = vmatpush.bf16.msra.mxu0 0
    %1279 = vmatpush.bf16.msra.mxu0 0
    %1280 = vmatpush.bf16.msra.mxu0 0
    %1281 = vmatpush.bf16.msra.mxu0 %v1272
    %1282 = vmatmul.bf16.gmra.mxu0 %v1269
    %v1283 = vpop.f32.mrf.mxu0
    %v1284 = vadd.f32 0.0, %v1283
    %v1285 = vpop.f32.mrf.mxu0
    %v1286 = vadd.f32 0.0, %v1285
    %1287 = vdwg.mxu0
    %v1288 = vsel %vm392, %v1284, -inf
    %1289 = vmax.xlane.f32.xlu0 %v1288
    %v1290 = vpop.xlane.xlu0 %1289
    %v1291 = vsel %vm396, %v1286, -inf
    %1292 = vmax.xlane.f32.xlu0 %v1291
    %v1293 = vpop.xlane.xlu0 %1292
    %v1294 = vsub.f32 %v1284, %v1290
    %v1295 = vsub.f32 %v1286, %v1293
    %v1296 = vmul.f32 %v1294, 1.442695
    %v1297 = vpow.pop %v1296
    %v1298 = vmul.f32 %v1295, 1.442695
    %v1299 = vpow.pop %v1298
    %v1300 = vsel %vm392, %v1297, 0.0
    %1301 = vadd.xlane.f32.xlu0 %v1300
    %v1302 = vpop.xlane.xlu0 %1301
    %v1303 = vsel %vm396, %v1299, 0.0
    %1304 = vadd.xlane.f32.xlu0 %v1303
    %v1305 = vpop.xlane.xlu0 %1304
    %v1306 = vrcp.pop %v1302
    %v1307 = vrcp.pop %v1305
    %v1308 = vmul.f32 %v1297, %v1306
    %v1309 = vmul.f32 %v1299, %v1307
    %v1310 = vpack.c.bf16 %v1309, %v1308
    %1311 = vrot.lane.b32.xlu0 %v1118, 56
    %v1312 = vpop.permute.xlu0 %1311
    %v1314 = vsel %vm392, %v1310, 0
    %v1317 = vand.u32 %v1312, %v425
    %1319 = vmatpush.bf16.msra.mxu0 0
    %1320 = vmatpush.bf16.msra.mxu0 0
    %1321 = vmatpush.bf16.msra.mxu0 0
    %1322 = vmatpush.bf16.msra.mxu0 0
    %1323 = vmatpush.bf16.msra.mxu0 0
    %1324 = vmatpush.bf16.msra.mxu0 0
    %1325 = vmatpush.bf16.msra.mxu0 0
    %1326 = vmatpush.bf16.msra.mxu0 %v1317
    %1327 = vmatmul.bf16.gmra.mxu0 %v1314
    %v1328 = vpop.f32.mrf.mxu0
    %v1329 = vadd.f32 0.0, %v1328
    %v1330 = vpop.f32.mrf.mxu0
    %v1331 = vadd.f32 0.0, %v1330
    %1332 = vdwg.mxu0
    %v1333 = vpack.c.bf16 %v1331, %v1329
    %v1335 = vsel %vm371, %v1333, 0
    %v1338 = vsel %vm282, %v1115, 0
    %1340 = vmatpush.bf16.msra.mxu0 0
    %1341 = vmatpush.bf16.msra.mxu0 0
    %1342 = vmatpush.bf16.msra.mxu0 0
    %1343 = vmatpush.bf16.msra.mxu0 0
    %1344 = vmatpush.bf16.msra.mxu0 0
    %1345 = vmatpush.bf16.msra.mxu0 0
    %1346 = vmatpush.bf16.msra.mxu0 0
    %1347 = vmatpush.bf16.msra.mxu0 %v1338
    %1348 = vmatmul.bf16.gmra.mxu0 %v1335
    %v1349 = vpop.f32.mrf.mxu0
    %v1350 = vadd.f32 0.0, %v1349
    %v1351 = vpop.f32.mrf.mxu0
    %v1352 = vadd.f32 0.0, %v1351
    %1353 = vdwg.mxu0
    %v1355 = vsel %vm371, %v1226, 0
    %v1358 = vsel %vm282, %v1114, 0
    %1360 = vmatpush.bf16.msra.mxu0 0
    %1361 = vmatpush.bf16.msra.mxu0 0
    %1362 = vmatpush.bf16.msra.mxu0 0
    %1363 = vmatpush.bf16.msra.mxu0 0
    %1364 = vmatpush.bf16.msra.mxu0 0
    %1365 = vmatpush.bf16.msra.mxu0 0
    %1366 = vmatpush.bf16.msra.mxu0 0
    %1367 = vmatpush.bf16.msra.mxu0 %v1358
    %1368 = vmatmul.bf16.gmra.mxu0 %v1355
    %v1369 = vpop.f32.mrf.mxu0
    %v1370 = vadd.f32 %v1350, %v1369
    %v1371 = vpop.f32.mrf.mxu0
    %v1372 = vadd.f32 %v1352, %v1371
    %1373 = vdwg.mxu0
    %1374 = vrot.lane.b32.xlu0 %v1109, 80
    %v1375 = vpop.permute.xlu0 %1374
    %1376 = vrot.lane.b32.xlu0 %v1111, 80
    %v1377 = vpop.permute.xlu0 %1376
    %1380 = vxpose.xlu0.b32.start [1/16] %v1375, 128
    %1381 = vxpose.xlu0.b32.cont [2/16] %v1377, 128
    %1382 = vxpose.xlu0.b32.cont [3/16] 0.0, 128
    %1383 = vxpose.xlu0.b32.cont [4/16] 0.0, 128
    %1384 = vxpose.xlu0.b32.cont [5/16] 0.0, 128
    %1385 = vxpose.xlu0.b32.cont [6/16] 0.0, 128
    %1386 = vxpose.xlu0.b32.cont [7/16] 0.0, 128
    %1387 = vxpose.xlu0.b32.cont [8/16] 0.0, 128
    %1388 = vxpose.xlu0.b32.cont [9/16] 0.0, 128
    %1389 = vxpose.xlu0.b32.cont [10/16] 0.0, 128
    %1390 = vxpose.xlu0.b32.cont [11/16] 0.0, 128
    %1391 = vxpose.xlu0.b32.cont [12/16] 0.0, 128
    %1392 = vxpose.xlu0.b32.cont [13/16] 0.0, 128
    %1393 = vxpose.xlu0.b32.cont [14/16] 0.0, 128
    %1394 = vxpose.xlu0.b32.cont [15/16] 0.0, 128
    %1395 = vxpose.xlu0.b32.end [16/16] 0.0, 128
    %v1396 = vpop.trf.xlu0
    %v1397 = vpop.trf.xlu0
    %v1398 = vpop.trf.xlu0
    %v1399 = vpop.trf.xlu0
    %v1400 = vpop.trf.xlu0
    %v1401 = vpop.trf.xlu0
    %v1402 = vpop.trf.xlu0
    %v1403 = vpop.trf.xlu0
    %v1404 = vpop.trf.xlu0
    %v1405 = vpop.trf.xlu0
    %v1406 = vpop.trf.xlu0
    %v1407 = vpop.trf.xlu0
    %v1408 = vpop.trf.xlu0
    %v1409 = vpop.trf.xlu0
    %v1410 = vpop.trf.xlu0
    %v1411 = vpop.trf.xlu0
    %v1412 = vpack.c.bf16 %v1396, %v1396
    %1413 = vrot.lane.b32.xlu0 %v1118, 112
    %v1414 = vpop.permute.xlu0 %1413
    %v1416 = vsel %vm371, %v1414, 0
    %v1419 = vsel %vm282, %v1412, 0
    %1421 = vmatpush.bf16.msra.mxu0 0
    %1422 = vmatpush.bf16.msra.mxu0 0
    %1423 = vmatpush.bf16.msra.mxu0 0
    %1424 = vmatpush.bf16.msra.mxu0 0
    %1425 = vmatpush.bf16.msra.mxu0 0
    %1426 = vmatpush.bf16.msra.mxu0 0
    %1427 = vmatpush.bf16.msra.mxu0 0
    %1428 = vmatpush.bf16.msra.mxu0 %v1419
    %1429 = vmatmul.bf16.gmra.mxu0 %v1416
    %v1430 = vpop.f32.mrf.mxu0
    %v1431 = vadd.f32 0.0, %v1430
    %v1432 = vpop.f32.mrf.mxu0
    %v1433 = vadd.f32 0.0, %v1432
    %1434 = vdwg.mxu0
    %v1435 = vsel %vm392, %v1431, -inf
    %1436 = vmax.xlane.f32.xlu0 %v1435
    %v1437 = vpop.xlane.xlu0 %1436
    %v1438 = vsel %vm396, %v1433, -inf
    %1439 = vmax.xlane.f32.xlu0 %v1438
    %v1440 = vpop.xlane.xlu0 %1439
    %v1441 = vsub.f32 %v1431, %v1437
    %v1442 = vsub.f32 %v1433, %v1440
    %v1443 = vmul.f32 %v1441, 1.442695
    %v1444 = vpow.pop %v1443
    %v1445 = vmul.f32 %v1442, 1.442695
    %v1446 = vpow.pop %v1445
    %v1447 = vsel %vm392, %v1444, 0.0
    %1448 = vadd.xlane.f32.xlu0 %v1447
    %v1449 = vpop.xlane.xlu0 %1448
    %v1450 = vsel %vm396, %v1446, 0.0
    %1451 = vadd.xlane.f32.xlu0 %v1450
    %v1452 = vpop.xlane.xlu0 %1451
    %v1453 = vrcp.pop %v1449
    %v1454 = vrcp.pop %v1452
    %v1455 = vmul.f32 %v1444, %v1453
    %v1456 = vmul.f32 %v1446, %v1454
    %v1457 = vpack.c.bf16 %v1456, %v1455
    %1458 = vrot.lane.b32.xlu0 %v1118, 48
    %v1459 = vpop.permute.xlu0 %1458
    %v1461 = vsel %vm392, %v1457, 0
    %v1464 = vand.u32 %v1459, %v425
    %1466 = vmatpush.bf16.msra.mxu0 0
    %1467 = vmatpush.bf16.msra.mxu0 0
    %1468 = vmatpush.bf16.msra.mxu0 0
    %1469 = vmatpush.bf16.msra.mxu0 0
    %1470 = vmatpush.bf16.msra.mxu0 0
    %1471 = vmatpush.bf16.msra.mxu0 0
    %1472 = vmatpush.bf16.msra.mxu0 0
    %1473 = vmatpush.bf16.msra.mxu0 %v1464
    %1474 = vmatmul.bf16.gmra.mxu0 %v1461
    %v1475 = vpop.f32.mrf.mxu0
    %v1476 = vadd.f32 0.0, %v1475
    %v1477 = vpop.f32.mrf.mxu0
    %v1478 = vadd.f32 0.0, %v1477
    %1479 = vdwg.mxu0
    %v1480 = vpack.c.bf16 %v1478, %v1476
    %v1482 = vsel %vm371, %v1480, 0
    %v1485 = vsel %vm282, %v1116, 0
    %1487 = vmatpush.bf16.msra.mxu0 0
    %1488 = vmatpush.bf16.msra.mxu0 0
    %1489 = vmatpush.bf16.msra.mxu0 0
    %1490 = vmatpush.bf16.msra.mxu0 0
    %1491 = vmatpush.bf16.msra.mxu0 0
    %1492 = vmatpush.bf16.msra.mxu0 0
    %1493 = vmatpush.bf16.msra.mxu0 0
    %1494 = vmatpush.bf16.msra.mxu0 %v1485
    %1495 = vmatmul.bf16.gmra.mxu0 %v1482
    %v1496 = vpop.f32.mrf.mxu0
    %v1497 = vadd.f32 0.0, %v1496
    %v1498 = vpop.f32.mrf.mxu0
    %v1499 = vadd.f32 0.0, %v1498
    %1500 = vdwg.mxu0
    %v1501 = vadd.f32 %v1370, %v1497
    %v1502 = vadd.f32 %v1372, %v1499
    %1503 = vrot.lane.b32.xlu0 %v1109, 72
    %v1504 = vpop.permute.xlu0 %1503
    %1505 = vrot.lane.b32.xlu0 %v1111, 72
    %v1506 = vpop.permute.xlu0 %1505
    %1509 = vxpose.xlu0.b32.start [1/16] %v1504, 128
    %1510 = vxpose.xlu0.b32.cont [2/16] %v1506, 128
    %1511 = vxpose.xlu0.b32.cont [3/16] 0.0, 128
    %1512 = vxpose.xlu0.b32.cont [4/16] 0.0, 128
    %1513 = vxpose.xlu0.b32.cont [5/16] 0.0, 128
    %1514 = vxpose.xlu0.b32.cont [6/16] 0.0, 128
    %1515 = vxpose.xlu0.b32.cont [7/16] 0.0, 128
    %1516 = vxpose.xlu0.b32.cont [8/16] 0.0, 128
    %1517 = vxpose.xlu0.b32.cont [9/16] 0.0, 128
    %1518 = vxpose.xlu0.b32.cont [10/16] 0.0, 128
    %1519 = vxpose.xlu0.b32.cont [11/16] 0.0, 128
    %1520 = vxpose.xlu0.b32.cont [12/16] 0.0, 128
    %1521 = vxpose.xlu0.b32.cont [13/16] 0.0, 128
    %1522 = vxpose.xlu0.b32.cont [14/16] 0.0, 128
    %1523 = vxpose.xlu0.b32.cont [15/16] 0.0, 128
    %1524 = vxpose.xlu0.b32.end [16/16] 0.0, 128
    %v1525 = vpop.trf.xlu0
    %v1526 = vpop.trf.xlu0
    %v1527 = vpop.trf.xlu0
    %v1528 = vpop.trf.xlu0
    %v1529 = vpop.trf.xlu0
    %v1530 = vpop.trf.xlu0
    %v1531 = vpop.trf.xlu0
    %v1532 = vpop.trf.xlu0
    %v1533 = vpop.trf.xlu0
    %v1534 = vpop.trf.xlu0
    %v1535 = vpop.trf.xlu0
    %v1536 = vpop.trf.xlu0
    %v1537 = vpop.trf.xlu0
    %v1538 = vpop.trf.xlu0
    %v1539 = vpop.trf.xlu0
    %v1540 = vpop.trf.xlu0
    %v1541 = vpack.c.bf16 %v1525, %v1525
    %1542 = vrot.lane.b32.xlu0 %v1118, 104
    %v1543 = vpop.permute.xlu0 %1542
    %v1545 = vsel %vm371, %v1543, 0
    %v1548 = vsel %vm282, %v1541, 0
    %1550 = vmatpush.bf16.msra.mxu0 0
    %1551 = vmatpush.bf16.msra.mxu0 0
    %1552 = vmatpush.bf16.msra.mxu0 0
    %1553 = vmatpush.bf16.msra.mxu0 0
    %1554 = vmatpush.bf16.msra.mxu0 0
    %1555 = vmatpush.bf16.msra.mxu0 0
    %1556 = vmatpush.bf16.msra.mxu0 0
    %1557 = vmatpush.bf16.msra.mxu0 %v1548
    %1558 = vmatmul.bf16.gmra.mxu0 %v1545
    %v1559 = vpop.f32.mrf.mxu0
    %v1560 = vadd.f32 0.0, %v1559
    %v1561 = vpop.f32.mrf.mxu0
    %v1562 = vadd.f32 0.0, %v1561
    %1563 = vdwg.mxu0
    %v1564 = vsel %vm392, %v1560, -inf
    %1565 = vmax.xlane.f32.xlu0 %v1564
    %v1566 = vpop.xlane.xlu0 %1565
    %v1567 = vsel %vm396, %v1562, -inf
    %1568 = vmax.xlane.f32.xlu0 %v1567
    %v1569 = vpop.xlane.xlu0 %1568
    %v1570 = vsub.f32 %v1560, %v1566
    %v1571 = vsub.f32 %v1562, %v1569
    %v1572 = vmul.f32 %v1570, 1.442695
    %v1573 = vpow.pop %v1572
    %v1574 = vmul.f32 %v1571, 1.442695
    %v1575 = vpow.pop %v1574
    %v1576 = vsel %vm392, %v1573, 0.0
    %1577 = vadd.xlane.f32.xlu0 %v1576
    %v1578 = vpop.xlane.xlu0 %1577
    %v1579 = vsel %vm396, %v1575, 0.0
    %1580 = vadd.xlane.f32.xlu0 %v1579
    %v1581 = vpop.xlane.xlu0 %1580
    %v1582 = vrcp.pop %v1578
    %v1583 = vrcp.pop %v1581
    %v1584 = vmul.f32 %v1573, %v1582
    %v1585 = vmul.f32 %v1575, %v1583
    %v1586 = vpack.c.bf16 %v1585, %v1584
    %1587 = vrot.lane.b32.xlu0 %v1118, 40
    %v1588 = vpop.permute.xlu0 %1587
    %v1590 = vsel %vm392, %v1586, 0
    %v1593 = vand.u32 %v1588, %v425
    %1595 = vmatpush.bf16.msra.mxu0 0
    %1596 = vmatpush.bf16.msra.mxu0 0
    %1597 = vmatpush.bf16.msra.mxu0 0
    %1598 = vmatpush.bf16.msra.mxu0 0
    %1599 = vmatpush.bf16.msra.mxu0 0
    %1600 = vmatpush.bf16.msra.mxu0 0
    %1601 = vmatpush.bf16.msra.mxu0 0
    %1602 = vmatpush.bf16.msra.mxu0 %v1593
    %1603 = vmatmul.bf16.gmra.mxu0 %v1590
    %v1604 = vpop.f32.mrf.mxu0
    %v1605 = vadd.f32 0.0, %v1604
    %v1606 = vpop.f32.mrf.mxu0
    %v1607 = vadd.f32 0.0, %v1606
    %1608 = vdwg.mxu0
    %v1609 = vpack.c.bf16 %v1607, %v1605
    %v1611 = vsel %vm371, %v1609, 0
    %v1614 = vsel %vm282, %v1117, 0
    %1616 = vmatpush.bf16.msra.mxu0 0
    %1617 = vmatpush.bf16.msra.mxu0 0
    %1618 = vmatpush.bf16.msra.mxu0 0
    %1619 = vmatpush.bf16.msra.mxu0 0
    %1620 = vmatpush.bf16.msra.mxu0 0
    %1621 = vmatpush.bf16.msra.mxu0 0
    %1622 = vmatpush.bf16.msra.mxu0 0
    %1623 = vmatpush.bf16.msra.mxu0 %v1614
    %1624 = vmatmul.bf16.gmra.mxu0 %v1611
    %v1625 = vpop.f32.mrf.mxu0
    %v1626 = vadd.f32 0.0, %v1625
    %v1627 = vpop.f32.mrf.mxu0
    %v1628 = vadd.f32 0.0, %v1627
    %1629 = vdwg.mxu0
    %v1630 = vadd.f32 %v1501, %v1626
    %v1631 = vadd.f32 %v1502, %v1628
    %s1632 = scalar_lea.vmem %s8, 1
    %v1633 = vld [vmem:[%s1632] sm:$0x1]
    %v1635 = vperm.slane %v1633, 0
    %v1637 = vadd.f32 %v1630, %v1635
    %v1638 = vadd.f32 %v1631, %v1635
    %v1639 = vadd.f32 %v1071, %v1637
    %v1640 = vadd.f32 %v1072, %v1638
    %s1641 = scalar_lea.vmem [#allocation7], 1
    %v1642 = vld [vmem:[%s1641] sm:$0x1]
    %s1643 = scalar_lea.vmem [#allocation8], 1
    %v1644 = vld [vmem:[%s1643] sm:$0x1]
    %v1645 = vsel %vm307, %v1639, 0.0
    %1646 = vadd.xlane.f32.xlu0 %v1645
    %v1647 = vpop.xlane.xlu0 %1646
    %v1648 = vsel %vm862, %v1640, 0.0
    %1649 = vadd.xlane.f32.xlu0 %v1648
    %v1650 = vpop.xlane.xlu0 %1649
    %v1651 = vmul.f32 %v1647, %v872
    %v1652 = vmul.f32 %v1650, %v872
    %v1653 = vsub.f32 %v1639, %v1651
    %v1654 = vsub.f32 %v1640, %v1652
    %v1655 = vmul.f32 %v1653, %v1653
    %v1656 = vmul.f32 %v1654, %v1654
    %v1657 = vsel %vm307, %v1655, 0.0
    %1658 = vadd.xlane.f32.xlu0 %v1657
    %v1659 = vpop.xlane.xlu0 %1658
    %v1660 = vsel %vm862, %v1656, 0.0
    %1661 = vadd.xlane.f32.xlu0 %v1660
    %v1662 = vpop.xlane.xlu0 %1661
    %v1663 = vmul.f32 %v1659, %v872
    %v1664 = vmul.f32 %v1662, %v872
    %v1665 = vadd.f32 %v1663, 1e-05
    %v1666 = vadd.f32 %v1664, 1e-05
    %v1667 = vrsqrt.pop %v1665
    %v1668 = vmul.f32 %v1667, %v1665
    %v1669 = vmul.f32 %v1668, %v1667
    %v1670 = vmul.f32 0.5, %v1669
    %v1671 = vsub.f32 1.5, %v1670
    %v1672 = vmul.f32 %v1667, %v1671
    %vm1673 = vweird.f32 %v1665
    %vm1674 = vweird.f32 %v1667
    %vm1675 = vmor %vm1673, %vm1674
    %v1676 = vsel %vm1675, %v1667, %v1672
    %v1677 = vrsqrt.pop %v1666
    %v1678 = vmul.f32 %v1677, %v1666
    %v1679 = vmul.f32 %v1678, %v1677
    %v1680 = vmul.f32 0.5, %v1679
    %v1681 = vsub.f32 1.5, %v1680
    %v1682 = vmul.f32 %v1677, %v1681
    %vm1683 = vweird.f32 %v1666
    %vm1684 = vweird.f32 %v1677
    %vm1685 = vmor %vm1683, %vm1684
    %v1686 = vsel %vm1685, %v1677, %v1682
    %v1687 = vmul.f32 %v1653, %v1676
    %v1688 = vmul.f32 %v1654, %v1686
    %v1690 = vperm.slane %v1642, 0
    %v1692 = vmul.f32 %v1687, %v1690
    %v1693 = vmul.f32 %v1688, %v1690
    %v1695 = vperm.slane %v1644, 0
    %v1697 = vadd.f32 %v1692, %v1695
    %v1698 = vadd.f32 %v1693, %v1695
    %v1699 = vpack.c.bf16 %v1698, %v1697
    %s1700 = scalar_lea.vmem [#allocation10], 16
    %v1701 = vld [vmem:[%s1700] sm:$0xf]
    %v1702 = vld [vmem:[%s1700 + $0x4] sm:$0xf]
    %v1703 = vld [vmem:[%s1700 + $0x8] sm:$0xf]
    %v1704 = vld [vmem:[%s1700 + $0xc] sm:$0xf]
    %s1705 = scalar_lea.vmem [#allocation11], 1
    %v1706 = vld [vmem:[%s1705] sm:$0x1]
    %v1708 = vperm.slane %v1706, 0
    %v1714 = vunpack.c.l.b16 %v1701
    %v1715 = vunpack.c.l.b16 %v1702
    %v1716 = vunpack.c.l.b16 %v1703
    %v1717 = vunpack.c.l.b16 %v1704
    %v1718 = vpack.c.b16 %v1715, %v1714
    %v1719 = vpack.c.b16 %v1717, %v1716
    %v1723 = vsel %vm307, %v1699, 0
    %1725 = vmatpush.bf16.msra.mxu0 0
    %1726 = vmatpush.bf16.msra.mxu0 0
    %1727 = vmatpush.bf16.msra.mxu0 0
    %1728 = vmatpush.bf16.msra.mxu0 0
    %1729 = vmatpush.bf16.msra.mxu0 0
    %1730 = vmatpush.bf16.msra.mxu0 0
    %1731 = vmatpush.bf16.msra.mxu0 %v1719
    %1732 = vmatpush.bf16.msra.mxu0 %v1718
    %1733 = vmatmul.bf16.gmra.mxu0 %v1723
    %v1734 = vpop.f32.mrf.mxu0
    %v1735 = vadd.f32 %v1708, %v1734
    %v1736 = vpop.f32.mrf.mxu0
    %v1737 = vadd.f32 %v1708, %v1736
    %1738 = vdwg.mxu0
    %v1739 = vmax.f32 %v1735, 0.0
    %v1740 = vmax.f32 %v1737, 0.0
    %v1741 = vpack.c.bf16 %v1740, %v1739
    %s1742 = scalar_lea.vmem %s13, 32
    %v1743 = vld [vmem:[%s1742] sm:$0xf]
    %v1744 = vld [vmem:[%s1742 + $0x4] sm:$0xf]
    %v1745 = vld [vmem:[%s1742 + $0x8] sm:$0xf]
    %v1746 = vld [vmem:[%s1742 + $0xc] sm:$0xf]
    %v1747 = vld [vmem:[%s1742 + $0x10] sm:$0xf]
    %v1748 = vld [vmem:[%s1742 + $0x14] sm:$0xf]
    %v1749 = vld [vmem:[%s1742 + $0x18] sm:$0xf]
    %v1750 = vld [vmem:[%s1742 + $0x1c] sm:$0xf]
    %s1751 = scalar_lea.vmem [#allocation13], 1
    %v1752 = vld [vmem:[%s1751] sm:$0x1]
    %v1754 = vperm.slane %v1752, 0
    %v1764 = vunpack.c.l.b16 %v1743
    %v1765 = vunpack.c.l.b16 %v1744
    %v1766 = vunpack.c.l.b16 %v1745
    %v1767 = vunpack.c.l.b16 %v1746
    %v1768 = vunpack.c.l.b16 %v1747
    %v1769 = vunpack.c.l.b16 %v1748
    %v1770 = vunpack.c.l.b16 %v1749
    %v1771 = vunpack.c.l.b16 %v1750
    %v1772 = vpack.c.b16 %v1765, %v1764
    %v1773 = vpack.c.b16 %v1767, %v1766
    %v1774 = vpack.c.b16 %v1769, %v1768
    %v1775 = vpack.c.b16 %v1771, %v1770
    %v1781 = vsel %vm255, %v1741, 0
    %1783 = vmatpush.bf16.msra.mxu0 0
    %1784 = vmatpush.bf16.msra.mxu0 0
    %1785 = vmatpush.bf16.msra.mxu0 0
    %1786 = vmatpush.bf16.msra.mxu0 0
    %1787 = vmatpush.bf16.msra.mxu0 %v1775
    %1788 = vmatpush.bf16.msra.mxu0 %v1774
    %1789 = vmatpush.bf16.msra.mxu0 %v1773
    %1790 = vmatpush.bf16.msra.mxu0 %v1772
    %1791 = vmatmul.bf16.gmra.mxu0 %v1781
    %v1792 = vpop.f32.mrf.mxu0
    %v1793 = vpop.f32.mrf.mxu0
    %v1794 = vadd.f32 %v1754, %v1793
    %1795 = vdwg.mxu0
    %v1796 = vadd.f32 %v1698, %v1794
    %s1797 = scalar_lea.vmem [#allocation14], 1
    %v1798 = vld [vmem:[%s1797] sm:$0x1]
    %s1799 = scalar_lea.vmem [#allocation16], 1
    %v1800 = vld [vmem:[%s1799] sm:$0x1]
    %v1801 = vsel %vm862, %v1796, 0.0
    %1802 = vadd.xlane.f32.xlu0 %v1801
    %v1803 = vpop.xlane.xlu0 %1802
    %v1804 = vmul.f32 %v1803, %v872
    %v1805 = vsub.f32 %v1796, %v1804
    %v1806 = vmul.f32 %v1805, %v1805
    %v1807 = vsel %vm862, %v1806, 0.0
    %1808 = vadd.xlane.f32.xlu0 %v1807
    %v1809 = vpop.xlane.xlu0 %1808
    %v1810 = vmul.f32 %v1809, %v872
    %v1811 = vadd.f32 %v1810, 1e-05
    %v1812 = vrsqrt.pop %v1811
    %v1813 = vmul.f32 %v1812, %v1811
    %v1814 = vmul.f32 %v1813, %v1812
    %v1815 = vmul.f32 0.5, %v1814
    %v1816 = vsub.f32 1.5, %v1815
    %v1817 = vmul.f32 %v1812, %v1816
    %vm1818 = vweird.f32 %v1811
    %vm1819 = vweird.f32 %v1812
    %vm1820 = vmor %vm1818, %vm1819
    %v1821 = vsel %vm1820, %v1812, %v1817
    %v1822 = vmul.f32 %v1805, %v1821
    %v1824 = vperm.slane %v1798, 0
    %v1826 = vmul.f32 %v1822, %v1824
    %v1828 = vperm.slane %v1800, 0
    %v1830 = vadd.f32 %v1826, %v1828
    %s1831 = scalar_lea.vmem %s0, 8
    %v1832 = vld [vmem:[%s1831] sm:$0x3f]
    %v1833 = vpack.c.bf16 %v1832, %v1832
    %v1835 = vsel %vm255, %v1833, 0
    %1837 = vmatpush.bf16.msra.mxu0 0
    %1838 = vmatpush.bf16.msra.mxu0 0
    %1839 = vmatpush.bf16.msra.mxu0 0
    %1840 = vmatpush.bf16.msra.mxu0 0
    %1841 = vmatpush.bf16.msra.mxu0 %v250
    %1842 = vmatpush.bf16.msra.mxu0 %v249
    %1843 = vmatpush.bf16.msra.mxu0 %v248
    %1844 = vmatpush.bf16.msra.mxu0 %v247
    %1845 = vmatmul.bf16.gmra.mxu0 %v1835
    %v1846 = vpop.f32.mrf.mxu0
    %v1847 = vadd.f32 %v229, %v1846
    %v1848 = vpop.f32.mrf.mxu0
    %1849 = vdwg.mxu0
    %v1851 = vrot.slane %v1847, 2
    %1852 = vrot.lane.b32.xlu0 %v1851, 96
    %v1853 = vpop.permute.xlu0 %1852
    %v1855 = vsel %vm280, %v1847, %v1853
    %v1856 = vsel %vm282, %v1853, %v278
    %v1857 = vadd.f32 %v1855, %v214
    %v1858 = vadd.f32 %v1856, %v215
    %v1859 = vpack.c.bf16 %v1858, %v1857
    %v1861 = vsel %vm307, %v1859, 0
    %1863 = vmatpush.bf16.msra.mxu0 0
    %1864 = vmatpush.bf16.msra.mxu0 0
    %1865 = vmatpush.bf16.msra.mxu0 0
    %1866 = vmatpush.bf16.msra.mxu0 0
    %1867 = vmatpush.bf16.msra.mxu0 0
    %1868 = vmatpush.bf16.msra.mxu0 0
    %1869 = vmatpush.bf16.msra.mxu0 %v304
    %1870 = vmatpush.bf16.msra.mxu0 %v303
    %1871 = vmatmul.bf16.gmra.mxu0 %v1861
    %v1872 = vpop.f32.mrf.mxu0
    %v1873 = vadd.f32 %v293, %v1872
    %v1874 = vpop.f32.mrf.mxu0
    %v1875 = vadd.f32 %v293, %v1874
    %1876 = vdwg.mxu0
    %v1877 = vpack.c.bf16 %v1875, %v1873
    %1880 = vrot.lane.b32.xlu0 %v1873, 96
    %v1881 = vpop.permute.xlu0 %1880
    %1882 = vrot.lane.b32.xlu0 %v1875, 96
    %v1883 = vpop.permute.xlu0 %1882
    %1886 = vxpose.xlu0.b32.start [1/16] %v1881, 128
    %1887 = vxpose.xlu0.b32.cont [2/16] %v1883, 128
    %1888 = vxpose.xlu0.b32.cont [3/16] 0.0, 128
    %1889 = vxpose.xlu0.b32.cont [4/16] 0.0, 128
    %1890 = vxpose.xlu0.b32.cont [5/16] 0.0, 128
    %1891 = vxpose.xlu0.b32.cont [6/16] 0.0, 128
    %1892 = vxpose.xlu0.b32.cont [7/16] 0.0, 128
    %1893 = vxpose.xlu0.b32.cont [8/16] 0.0, 128
    %1894 = vxpose.xlu0.b32.cont [9/16] 0.0, 128
    %1895 = vxpose.xlu0.b32.cont [10/16] 0.0, 128
    %1896 = vxpose.xlu0.b32.cont [11/16] 0.0, 128
    %1897 = vxpose.xlu0.b32.cont [12/16] 0.0, 128
    %1898 = vxpose.xlu0.b32.cont [13/16] 0.0, 128
    %1899 = vxpose.xlu0.b32.cont [14/16] 0.0, 128
    %1900 = vxpose.xlu0.b32.cont [15/16] 0.0, 128
    %1901 = vxpose.xlu0.b32.end [16/16] 0.0, 128
    %v1902 = vpop.trf.xlu0
    %v1903 = vpop.trf.xlu0
    %v1904 = vpop.trf.xlu0
    %v1905 = vpop.trf.xlu0
    %v1906 = vpop.trf.xlu0
    %v1907 = vpop.trf.xlu0
    %v1908 = vpop.trf.xlu0
    %v1909 = vpop.trf.xlu0
    %v1910 = vpop.trf.xlu0
    %v1911 = vpop.trf.xlu0
    %v1912 = vpop.trf.xlu0
    %v1913 = vpop.trf.xlu0
    %v1914 = vpop.trf.xlu0
    %v1915 = vpop.trf.xlu0
    %v1916 = vpop.trf.xlu0
    %v1917 = vpop.trf.xlu0
    %v1918 = vpack.c.bf16 %v1902, %v1902
    %v1920 = vsel %vm371, %v1877, 0
    %v1923 = vsel %vm282, %v1918, 0
    %1925 = vmatpush.bf16.msra.mxu0 0
    %1926 = vmatpush.bf16.msra.mxu0 0
    %1927 = vmatpush.bf16.msra.mxu0 0
    %1928 = vmatpush.bf16.msra.mxu0 0
    %1929 = vmatpush.bf16.msra.mxu0 0
    %1930 = vmatpush.bf16.msra.mxu0 0
    %1931 = vmatpush.bf16.msra.mxu0 0
    %1932 = vmatpush.bf16.msra.mxu0 %v1923
    %1933 = vmatmul.bf16.gmra.mxu0 %v1920
    %v1934 = vpop.f32.mrf.mxu0
    %v1935 = vadd.f32 0.0, %v1934
    %v1936 = vpop.f32.mrf.mxu0
    %v1937 = vadd.f32 0.0, %v1936
    %1938 = vdwg.mxu0
    %v1939 = vsel %vm392, %v1935, -inf
    %1940 = vmax.xlane.f32.xlu0 %v1939
    %v1941 = vpop.xlane.xlu0 %1940
    %v1942 = vsel %vm396, %v1937, -inf
    %1943 = vmax.xlane.f32.xlu0 %v1942
    %v1944 = vpop.xlane.xlu0 %1943
    %v1945 = vsub.f32 %v1935, %v1941
    %v1946 = vsub.f32 %v1937, %v1944
    %v1947 = vmul.f32 %v1945, 1.442695
    %v1948 = vpow.pop %v1947
    %v1949 = vmul.f32 %v1946, 1.442695
    %v1950 = vpow.pop %v1949
    %v1951 = vsel %vm392, %v1948, 0.0
    %1952 = vadd.xlane.f32.xlu0 %v1951
    %v1953 = vpop.xlane.xlu0 %1952
    %v1954 = vsel %vm396, %v1950, 0.0
    %1955 = vadd.xlane.f32.xlu0 %v1954
    %v1956 = vpop.xlane.xlu0 %1955
    %v1957 = vrcp.pop %v1953
    %v1958 = vrcp.pop %v1956
    %v1959 = vmul.f32 %v1948, %v1957
    %v1960 = vmul.f32 %v1950, %v1958
    %v1961 = vpack.c.bf16 %v1960, %v1959
    %1963 = vrot.lane.b32.xlu0 %v1877, 64
    %v1964 = vpop.permute.xlu0 %1963
    %v1966 = vsel %vm392, %v1961, 0
    %v1969 = vand.u32 %v1964, %v425
    %1971 = vmatpush.bf16.msra.mxu0 0
    %1972 = vmatpush.bf16.msra.mxu0 0
    %1973 = vmatpush.bf16.msra.mxu0 0
    %1974 = vmatpush.bf16.msra.mxu0 0
    %1975 = vmatpush.bf16.msra.mxu0 0
    %1976 = vmatpush.bf16.msra.mxu0 0
    %1977 = vmatpush.bf16.msra.mxu0 0
    %1978 = vmatpush.bf16.msra.mxu0 %v1969
    %1979 = vmatmul.bf16.gmra.mxu0 %v1966
    %v1980 = vpop.f32.mrf.mxu0
    %v1981 = vadd.f32 0.0, %v1980
    %v1982 = vpop.f32.mrf.mxu0
    %v1983 = vadd.f32 0.0, %v1982
    %1984 = vdwg.mxu0
    %v1985 = vpack.c.bf16 %v1983, %v1981
    %1986 = vrot.lane.b32.xlu0 %v1873, 88
    %v1987 = vpop.permute.xlu0 %1986
    %1988 = vrot.lane.b32.xlu0 %v1875, 88
    %v1989 = vpop.permute.xlu0 %1988
    %1992 = vxpose.xlu0.b32.start [1/16] %v1987, 128
    %1993 = vxpose.xlu0.b32.cont [2/16] %v1989, 128
    %1994 = vxpose.xlu0.b32.cont [3/16] 0.0, 128
    %1995 = vxpose.xlu0.b32.cont [4/16] 0.0, 128
    %1996 = vxpose.xlu0.b32.cont [5/16] 0.0, 128
    %1997 = vxpose.xlu0.b32.cont [6/16] 0.0, 128
    %1998 = vxpose.xlu0.b32.cont [7/16] 0.0, 128
    %1999 = vxpose.xlu0.b32.cont [8/16] 0.0, 128
    %2000 = vxpose.xlu0.b32.cont [9/16] 0.0, 128
    %2001 = vxpose.xlu0.b32.cont [10/16] 0.0, 128
    %2002 = vxpose.xlu0.b32.cont [11/16] 0.0, 128
    %2003 = vxpose.xlu0.b32.cont [12/16] 0.0, 128
    %2004 = vxpose.xlu0.b32.cont [13/16] 0.0, 128
    %2005 = vxpose.xlu0.b32.cont [14/16] 0.0, 128
    %2006 = vxpose.xlu0.b32.cont [15/16] 0.0, 128
    %2007 = vxpose.xlu0.b32.end [16/16] 0.0, 128
    %v2008 = vpop.trf.xlu0
    %v2009 = vpop.trf.xlu0
    %v2010 = vpop.trf.xlu0
    %v2011 = vpop.trf.xlu0
    %v2012 = vpop.trf.xlu0
    %v2013 = vpop.trf.xlu0
    %v2014 = vpop.trf.xlu0
    %v2015 = vpop.trf.xlu0
    %v2016 = vpop.trf.xlu0
    %v2017 = vpop.trf.xlu0
    %v2018 = vpop.trf.xlu0
    %v2019 = vpop.trf.xlu0
    %v2020 = vpop.trf.xlu0
    %v2021 = vpop.trf.xlu0
    %v2022 = vpop.trf.xlu0
    %v2023 = vpop.trf.xlu0
    %v2024 = vpack.c.bf16 %v2008, %v2008
    %2025 = vrot.lane.b32.xlu0 %v1877, 120
    %v2026 = vpop.permute.xlu0 %2025
    %v2028 = vsel %vm371, %v2026, 0
    %v2031 = vsel %vm282, %v2024, 0
    %2033 = vmatpush.bf16.msra.mxu0 0
    %2034 = vmatpush.bf16.msra.mxu0 0
    %2035 = vmatpush.bf16.msra.mxu0 0
    %2036 = vmatpush.bf16.msra.mxu0 0
    %2037 = vmatpush.bf16.msra.mxu0 0
    %2038 = vmatpush.bf16.msra.mxu0 0
    %2039 = vmatpush.bf16.msra.mxu0 0
    %2040 = vmatpush.bf16.msra.mxu0 %v2031
    %2041 = vmatmul.bf16.gmra.mxu0 %v2028
    %v2042 = vpop.f32.mrf.mxu0
    %v2043 = vadd.f32 0.0, %v2042
    %v2044 = vpop.f32.mrf.mxu0
    %v2045 = vadd.f32 0.0, %v2044
    %2046 = vdwg.mxu0
    %v2047 = vsel %vm392, %v2043, -inf
    %2048 = vmax.xlane.f32.xlu0 %v2047
    %v2049 = vpop.xlane.xlu0 %2048
    %v2050 = vsel %vm396, %v2045, -inf
    %2051 = vmax.xlane.f32.xlu0 %v2050
    %v2052 = vpop.xlane.xlu0 %2051
    %v2053 = vsub.f32 %v2043, %v2049
    %v2054 = vsub.f32 %v2045, %v2052
    %v2055 = vmul.f32 %v2053, 1.442695
    %v2056 = vpow.pop %v2055
    %v2057 = vmul.f32 %v2054, 1.442695
    %v2058 = vpow.pop %v2057
    %v2059 = vsel %vm392, %v2056, 0.0
    %2060 = vadd.xlane.f32.xlu0 %v2059
    %v2061 = vpop.xlane.xlu0 %2060
    %v2062 = vsel %vm396, %v2058, 0.0
    %2063 = vadd.xlane.f32.xlu0 %v2062
    %v2064 = vpop.xlane.xlu0 %2063
    %v2065 = vrcp.pop %v2061
    %v2066 = vrcp.pop %v2064
    %v2067 = vmul.f32 %v2056, %v2065
    %v2068 = vmul.f32 %v2058, %v2066
    %v2069 = vpack.c.bf16 %v2068, %v2067
    %2070 = vrot.lane.b32.xlu0 %v1877, 56
    %v2071 = vpop.permute.xlu0 %2070
    %v2073 = vsel %vm392, %v2069, 0
    %v2076 = vand.u32 %v2071, %v425
    %2078 = vmatpush.bf16.msra.mxu0 0
    %2079 = vmatpush.bf16.msra.mxu0 0
    %2080 = vmatpush.bf16.msra.mxu0 0
    %2081 = vmatpush.bf16.msra.mxu0 0
    %2082 = vmatpush.bf16.msra.mxu0 0
    %2083 = vmatpush.bf16.msra.mxu0 0
    %2084 = vmatpush.bf16.msra.mxu0 0
    %2085 = vmatpush.bf16.msra.mxu0 %v2076
    %2086 = vmatmul.bf16.gmra.mxu0 %v2073
    %v2087 = vpop.f32.mrf.mxu0
    %v2088 = vadd.f32 0.0, %v2087
    %v2089 = vpop.f32.mrf.mxu0
    %v2090 = vadd.f32 0.0, %v2089
    %2091 = vdwg.mxu0
    %v2092 = vpack.c.bf16 %v2090, %v2088
    %v2094 = vsel %vm371, %v2092, 0
    %2096 = vmatpush.bf16.msra.mxu0 0
    %2097 = vmatpush.bf16.msra.mxu0 0
    %2098 = vmatpush.bf16.msra.mxu0 0
    %2099 = vmatpush.bf16.msra.mxu0 0
    %2100 = vmatpush.bf16.msra.mxu0 0
    %2101 = vmatpush.bf16.msra.mxu0 0
    %2102 = vmatpush.bf16.msra.mxu0 0
    %2103 = vmatpush.bf16.msra.mxu0 %v555
    %2104 = vmatmul.bf16.gmra.mxu0 %v2094
    %v2105 = vpop.f32.mrf.mxu0
    %v2106 = vadd.f32 0.0, %v2105
    %v2107 = vpop.f32.mrf.mxu0
    %v2108 = vadd.f32 0.0, %v2107
    %2109 = vdwg.mxu0
    %v2111 = vsel %vm371, %v1985, 0
    %2113 = vmatpush.bf16.msra.mxu0 0
    %2114 = vmatpush.bf16.msra.mxu0 0
    %2115 = vmatpush.bf16.msra.mxu0 0
    %2116 = vmatpush.bf16.msra.mxu0 0
    %2117 = vmatpush.bf16.msra.mxu0 0
    %2118 = vmatpush.bf16.msra.mxu0 0
    %2119 = vmatpush.bf16.msra.mxu0 0
    %2120 = vmatpush.bf16.msra.mxu0 %v575
    %2121 = vmatmul.bf16.gmra.mxu0 %v2111
    %v2122 = vpop.f32.mrf.mxu0
    %v2123 = vadd.f32 %v2106, %v2122
    %v2124 = vpop.f32.mrf.mxu0
    %v2125 = vadd.f32 %v2108, %v2124
    %2126 = vdwg.mxu0
    %2127 = vrot.lane.b32.xlu0 %v1873, 80
    %v2128 = vpop.permute.xlu0 %2127
    %2129 = vrot.lane.b32.xlu0 %v1875, 80
    %v2130 = vpop.permute.xlu0 %2129
    %2133 = vxpose.xlu0.b32.start [1/16] %v2128, 128
    %2134 = vxpose.xlu0.b32.cont [2/16] %v2130, 128
    %2135 = vxpose.xlu0.b32.cont [3/16] 0.0, 128
    %2136 = vxpose.xlu0.b32.cont [4/16] 0.0, 128
    %2137 = vxpose.xlu0.b32.cont [5/16] 0.0, 128
    %2138 = vxpose.xlu0.b32.cont [6/16] 0.0, 128
    %2139 = vxpose.xlu0.b32.cont [7/16] 0.0, 128
    %2140 = vxpose.xlu0.b32.cont [8/16] 0.0, 128
    %2141 = vxpose.xlu0.b32.cont [9/16] 0.0, 128
    %2142 = vxpose.xlu0.b32.cont [10/16] 0.0, 128
    %2143 = vxpose.xlu0.b32.cont [11/16] 0.0, 128
    %2144 = vxpose.xlu0.b32.cont [12/16] 0.0, 128
    %2145 = vxpose.xlu0.b32.cont [13/16] 0.0, 128
    %2146 = vxpose.xlu0.b32.cont [14/16] 0.0, 128
    %2147 = vxpose.xlu0.b32.cont [15/16] 0.0, 128
    %2148 = vxpose.xlu0.b32.end [16/16] 0.0, 128
    %v2149 = vpop.trf.xlu0
    %v2150 = vpop.trf.xlu0
    %v2151 = vpop.trf.xlu0
    %v2152 = vpop.trf.xlu0
    %v2153 = vpop.trf.xlu0
    %v2154 = vpop.trf.xlu0
    %v2155 = vpop.trf.xlu0
    %v2156 = vpop.trf.xlu0
    %v2157 = vpop.trf.xlu0
    %v2158 = vpop.trf.xlu0
    %v2159 = vpop.trf.xlu0
    %v2160 = vpop.trf.xlu0
    %v2161 = vpop.trf.xlu0
    %v2162 = vpop.trf.xlu0
    %v2163 = vpop.trf.xlu0
    %v2164 = vpop.trf.xlu0
    %v2165 = vpack.c.bf16 %v2149, %v2149
    %2166 = vrot.lane.b32.xlu0 %v1877, 112
    %v2167 = vpop.permute.xlu0 %2166
    %v2169 = vsel %vm371, %v2167, 0
    %v2172 = vsel %vm282, %v2165, 0
    %2174 = vmatpush.bf16.msra.mxu0 0
    %2175 = vmatpush.bf16.msra.mxu0 0
    %2176 = vmatpush.bf16.msra.mxu0 0
    %2177 = vmatpush.bf16.msra.mxu0 0
    %2178 = vmatpush.bf16.msra.mxu0 0
    %2179 = vmatpush.bf16.msra.mxu0 0
    %2180 = vmatpush.bf16.msra.mxu0 0
    %2181 = vmatpush.bf16.msra.mxu0 %v2172
    %2182 = vmatmul.bf16.gmra.mxu0 %v2169
    %v2183 = vpop.f32.mrf.mxu0
    %v2184 = vadd.f32 0.0, %v2183
    %v2185 = vpop.f32.mrf.mxu0
    %v2186 = vadd.f32 0.0, %v2185
    %2187 = vdwg.mxu0
    %v2188 = vsel %vm392, %v2184, -inf
    %2189 = vmax.xlane.f32.xlu0 %v2188
    %v2190 = vpop.xlane.xlu0 %2189
    %v2191 = vsel %vm396, %v2186, -inf
    %2192 = vmax.xlane.f32.xlu0 %v2191
    %v2193 = vpop.xlane.xlu0 %2192
    %v2194 = vsub.f32 %v2184, %v2190
    %v2195 = vsub.f32 %v2186, %v2193
    %v2196 = vmul.f32 %v2194, 1.442695
    %v2197 = vpow.pop %v2196
    %v2198 = vmul.f32 %v2195, 1.442695
    %v2199 = vpow.pop %v2198
    %v2200 = vsel %vm392, %v2197, 0.0
    %2201 = vadd.xlane.f32.xlu0 %v2200
    %v2202 = vpop.xlane.xlu0 %2201
    %v2203 = vsel %vm396, %v2199, 0.0
    %2204 = vadd.xlane.f32.xlu0 %v2203
    %v2205 = vpop.xlane.xlu0 %2204
    %v2206 = vrcp.pop %v2202
    %v2207 = vrcp.pop %v2205
    %v2208 = vmul.f32 %v2197, %v2206
    %v2209 = vmul.f32 %v2199, %v2207
    %v2210 = vpack.c.bf16 %v2209, %v2208
    %2211 = vrot.lane.b32.xlu0 %v1877, 48
    %v2212 = vpop.permute.xlu0 %2211
    %v2214 = vsel %vm392, %v2210, 0
    %v2217 = vand.u32 %v2212, %v425
    %2219 = vmatpush.bf16.msra.mxu0 0
    %2220 = vmatpush.bf16.msra.mxu0 0
    %2221 = vmatpush.bf16.msra.mxu0 0
    %2222 = vmatpush.bf16.msra.mxu0 0
    %2223 = vmatpush.bf16.msra.mxu0 0
    %2224 = vmatpush.bf16.msra.mxu0 0
    %2225 = vmatpush.bf16.msra.mxu0 0
    %2226 = vmatpush.bf16.msra.mxu0 %v2217
    %2227 = vmatmul.bf16.gmra.mxu0 %v2214
    %v2228 = vpop.f32.mrf.mxu0
    %v2229 = vadd.f32 0.0, %v2228
    %v2230 = vpop.f32.mrf.mxu0
    %v2231 = vadd.f32 0.0, %v2230
    %2232 = vdwg.mxu0
    %v2233 = vpack.c.bf16 %v2231, %v2229
    %v2235 = vsel %vm371, %v2233, 0
    %2237 = vmatpush.bf16.msra.mxu0 0
    %2238 = vmatpush.bf16.msra.mxu0 0
    %2239 = vmatpush.bf16.msra.mxu0 0
    %2240 = vmatpush.bf16.msra.mxu0 0
    %2241 = vmatpush.bf16.msra.mxu0 0
    %2242 = vmatpush.bf16.msra.mxu0 0
    %2243 = vmatpush.bf16.msra.mxu0 0
    %2244 = vmatpush.bf16.msra.mxu0 %v702
    %2245 = vmatmul.bf16.gmra.mxu0 %v2235
    %v2246 = vpop.f32.mrf.mxu0
    %v2247 = vadd.f32 0.0, %v2246
    %v2248 = vpop.f32.mrf.mxu0
    %v2249 = vadd.f32 0.0, %v2248
    %2250 = vdwg.mxu0
    %v2251 = vadd.f32 %v2123, %v2247
    %v2252 = vadd.f32 %v2125, %v2249
    %2253 = vrot.lane.b32.xlu0 %v1873, 72
    %v2254 = vpop.permute.xlu0 %2253
    %2255 = vrot.lane.b32.xlu0 %v1875, 72
    %v2256 = vpop.permute.xlu0 %2255
    %2259 = vxpose.xlu0.b32.start [1/16] %v2254, 128
    %2260 = vxpose.xlu0.b32.cont [2/16] %v2256, 128
    %2261 = vxpose.xlu0.b32.cont [3/16] 0.0, 128
    %2262 = vxpose.xlu0.b32.cont [4/16] 0.0, 128
    %2263 = vxpose.xlu0.b32.cont [5/16] 0.0, 128
    %2264 = vxpose.xlu0.b32.cont [6/16] 0.0, 128
    %2265 = vxpose.xlu0.b32.cont [7/16] 0.0, 128
    %2266 = vxpose.xlu0.b32.cont [8/16] 0.0, 128
    %2267 = vxpose.xlu0.b32.cont [9/16] 0.0, 128
    %2268 = vxpose.xlu0.b32.cont [10/16] 0.0, 128
    %2269 = vxpose.xlu0.b32.cont [11/16] 0.0, 128
    %2270 = vxpose.xlu0.b32.cont [12/16] 0.0, 128
    %2271 = vxpose.xlu0.b32.cont [13/16] 0.0, 128
    %2272 = vxpose.xlu0.b32.cont [14/16] 0.0, 128
    %2273 = vxpose.xlu0.b32.cont [15/16] 0.0, 128
    %2274 = vxpose.xlu0.b32.end [16/16] 0.0, 128
    %v2275 = vpop.trf.xlu0
    %v2276 = vpop.trf.xlu0
    %v2277 = vpop.trf.xlu0
    %v2278 = vpop.trf.xlu0
    %v2279 = vpop.trf.xlu0
    %v2280 = vpop.trf.xlu0
    %v2281 = vpop.trf.xlu0
    %v2282 = vpop.trf.xlu0
    %v2283 = vpop.trf.xlu0
    %v2284 = vpop.trf.xlu0
    %v2285 = vpop.trf.xlu0
    %v2286 = vpop.trf.xlu0
    %v2287 = vpop.trf.xlu0
    %v2288 = vpop.trf.xlu0
    %v2289 = vpop.trf.xlu0
    %v2290 = vpop.trf.xlu0
    %v2291 = vpack.c.bf16 %v2275, %v2275
    %2292 = vrot.lane.b32.xlu0 %v1877, 104
    %v2293 = vpop.permute.xlu0 %2292
    %v2295 = vsel %vm371, %v2293, 0
    %v2298 = vsel %vm282, %v2291, 0
    %2300 = vmatpush.bf16.msra.mxu0 0
    %2301 = vmatpush.bf16.msra.mxu0 0
    %2302 = vmatpush.bf16.msra.mxu0 0
    %2303 = vmatpush.bf16.msra.mxu0 0
    %2304 = vmatpush.bf16.msra.mxu0 0
    %2305 = vmatpush.bf16.msra.mxu0 0
    %2306 = vmatpush.bf16.msra.mxu0 0
    %2307 = vmatpush.bf16.msra.mxu0 %v2298
    %2308 = vmatmul.bf16.gmra.mxu0 %v2295
    %v2309 = vpop.f32.mrf.mxu0
    %v2310 = vadd.f32 0.0, %v2309
    %v2311 = vpop.f32.mrf.mxu0
    %v2312 = vadd.f32 0.0, %v2311
    %2313 = vdwg.mxu0
    %v2314 = vsel %vm392, %v2310, -inf
    %2315 = vmax.xlane.f32.xlu0 %v2314
    %v2316 = vpop.xlane.xlu0 %2315
    %v2317 = vsel %vm396, %v2312, -inf
    %2318 = vmax.xlane.f32.xlu0 %v2317
    %v2319 = vpop.xlane.xlu0 %2318
    %v2320 = vsub.f32 %v2310, %v2316
    %v2321 = vsub.f32 %v2312, %v2319
    %v2322 = vmul.f32 %v2320, 1.442695
    %v2323 = vpow.pop %v2322
    %v2324 = vmul.f32 %v2321, 1.442695
    %v2325 = vpow.pop %v2324
    %v2326 = vsel %vm392, %v2323, 0.0
    %2327 = vadd.xlane.f32.xlu0 %v2326
    %v2328 = vpop.xlane.xlu0 %2327
    %v2329 = vsel %vm396, %v2325, 0.0
    %2330 = vadd.xlane.f32.xlu0 %v2329
    %v2331 = vpop.xlane.xlu0 %2330
    %v2332 = vrcp.pop %v2328
    %v2333 = vrcp.pop %v2331
    %v2334 = vmul.f32 %v2323, %v2332
    %v2335 = vmul.f32 %v2325, %v2333
    %v2336 = vpack.c.bf16 %v2335, %v2334
    %2337 = vrot.lane.b32.xlu0 %v1877, 40
    %v2338 = vpop.permute.xlu0 %2337
    %v2340 = vsel %vm392, %v2336, 0
    %v2343 = vand.u32 %v2338, %v425
    %2345 = vmatpush.bf16.msra.mxu0 0
    %2346 = vmatpush.bf16.msra.mxu0 0
    %2347 = vmatpush.bf16.msra.mxu0 0
    %2348 = vmatpush.bf16.msra.mxu0 0
    %2349 = vmatpush.bf16.msra.mxu0 0
    %2350 = vmatpush.bf16.msra.mxu0 0
    %2351 = vmatpush.bf16.msra.mxu0 0
    %2352 = vmatpush.bf16.msra.mxu0 %v2343
    %2353 = vmatmul.bf16.gmra.mxu0 %v2340
    %v2354 = vpop.f32.mrf.mxu0
    %v2355 = vadd.f32 0.0, %v2354
    %v2356 = vpop.f32.mrf.mxu0
    %v2357 = vadd.f32 0.0, %v2356
    %2358 = vdwg.mxu0
    %v2359 = vpack.c.bf16 %v2357, %v2355
    %v2361 = vsel %vm371, %v2359, 0
    %2363 = vmatpush.bf16.msra.mxu0 0
    %2364 = vmatpush.bf16.msra.mxu0 0
    %2365 = vmatpush.bf16.msra.mxu0 0
    %2366 = vmatpush.bf16.msra.mxu0 0
    %2367 = vmatpush.bf16.msra.mxu0 0
    %2368 = vmatpush.bf16.msra.mxu0 0
    %2369 = vmatpush.bf16.msra.mxu0 0
    %2370 = vmatpush.bf16.msra.mxu0 %v831
    %2371 = vmatmul.bf16.gmra.mxu0 %v2361
    %v2372 = vpop.f32.mrf.mxu0
    %v2373 = vadd.f32 0.0, %v2372
    %v2374 = vpop.f32.mrf.mxu0
    %v2375 = vadd.f32 0.0, %v2374
    %2376 = vdwg.mxu0
    %v2377 = vadd.f32 %v2251, %v2373
    %v2378 = vadd.f32 %v2252, %v2375
    %v2379 = vadd.f32 %v2377, %v851
    %v2380 = vadd.f32 %v2378, %v851
    %v2381 = vadd.f32 %v1857, %v2379
    %v2382 = vadd.f32 %v1858, %v2380
    %v2383 = vsel %vm307, %v2381, 0.0
    %2384 = vadd.xlane.f32.xlu0 %v2383
    %v2385 = vpop.xlane.xlu0 %2384
    %v2386 = vsel %vm862, %v2382, 0.0
    %2387 = vadd.xlane.f32.xlu0 %v2386
    %v2388 = vpop.xlane.xlu0 %2387
    %v2389 = vmul.f32 %v2385, %v872
    %v2390 = vmul.f32 %v2388, %v872
    %v2391 = vsub.f32 %v2381, %v2389
    %v2392 = vsub.f32 %v2382, %v2390
    %v2393 = vmul.f32 %v2391, %v2391
    %v2394 = vmul.f32 %v2392, %v2392
    %v2395 = vsel %vm307, %v2393, 0.0
    %2396 = vadd.xlane.f32.xlu0 %v2395
    %v2397 = vpop.xlane.xlu0 %2396
    %v2398 = vsel %vm862, %v2394, 0.0
    %2399 = vadd.xlane.f32.xlu0 %v2398
    %v2400 = vpop.xlane.xlu0 %2399
    %v2401 = vmul.f32 %v2397, %v872
    %v2402 = vmul.f32 %v2400, %v872
    %v2403 = vadd.f32 %v2401, 1e-05
    %v2404 = vadd.f32 %v2402, 1e-05
    %v2405 = vrsqrt.pop %v2403
    %v2406 = vmul.f32 %v2405, %v2403
    %v2407 = vmul.f32 %v2406, %v2405
    %v2408 = vmul.f32 0.5, %v2407
    %v2409 = vsub.f32 1.5, %v2408
    %v2410 = vmul.f32 %v2405, %v2409
    %vm2411 = vweird.f32 %v2403
    %vm2412 = vweird.f32 %v2405
    %vm2413 = vmor %vm2411, %vm2412
    %v2414 = vsel %vm2413, %v2405, %v2410
    %v2415 = vrsqrt.pop %v2404
    %v2416 = vmul.f32 %v2415, %v2404
    %v2417 = vmul.f32 %v2416, %v2415
    %v2418 = vmul.f32 0.5, %v2417
    %v2419 = vsub.f32 1.5, %v2418
    %v2420 = vmul.f32 %v2415, %v2419
    %vm2421 = vweird.f32 %v2404
    %vm2422 = vweird.f32 %v2415
    %vm2423 = vmor %vm2421, %vm2422
    %v2424 = vsel %vm2423, %v2415, %v2420
    %v2425 = vmul.f32 %v2391, %v2414
    %v2426 = vmul.f32 %v2392, %v2424
    %v2427 = vmul.f32 %v2425, %v912
    %v2428 = vmul.f32 %v2426, %v912
    %v2429 = vadd.f32 %v2427, %v917
    %v2430 = vadd.f32 %v2428, %v917
    %v2431 = vpack.c.bf16 %v2430, %v2429
    %v2433 = vsel %vm307, %v2431, 0
    %2435 = vmatpush.bf16.msra.mxu0 0
    %2436 = vmatpush.bf16.msra.mxu0 0
    %2437 = vmatpush.bf16.msra.mxu0 0
    %2438 = vmatpush.bf16.msra.mxu0 0
    %2439 = vmatpush.bf16.msra.mxu0 0
    %2440 = vmatpush.bf16.msra.mxu0 0
    %2441 = vmatpush.bf16.msra.mxu0 %v939
    %2442 = vmatpush.bf16.msra.mxu0 %v938
    %2443 = vmatmul.bf16.gmra.mxu0 %v2433
    %v2444 = vpop.f32.mrf.mxu0
    %v2445 = vadd.f32 %v928, %v2444
    %v2446 = vpop.f32.mrf.mxu0
    %v2447 = vadd.f32 %v928, %v2446
    %2448 = vdwg.mxu0
    %v2449 = vmax.f32 %v2445, 0.0
    %v2450 = vmax.f32 %v2447, 0.0
    %v2451 = vpack.c.bf16 %v2450, %v2449
    %v2453 = vsel %vm255, %v2451, 0
    %2455 = vmatpush.bf16.msra.mxu0 0
    %2456 = vmatpush.bf16.msra.mxu0 0
    %2457 = vmatpush.bf16.msra.mxu0 0
    %2458 = vmatpush.bf16.msra.mxu0 0
    %2459 = vmatpush.bf16.msra.mxu0 %v993
    %2460 = vmatpush.bf16.msra.mxu0 %v992
    %2461 = vmatpush.bf16.msra.mxu0 %v991
    %2462 = vmatpush.bf16.msra.mxu0 %v990
    %2463 = vmatmul.bf16.gmra.mxu0 %v2453
    %v2464 = vpop.f32.mrf.mxu0
    %v2465 = vadd.f32 %v972, %v2464
    %v2466 = vpop.f32.mrf.mxu0
    %v2467 = vadd.f32 %v972, %v2466
    %2468 = vdwg.mxu0
    %v2469 = vadd.f32 %v2429, %v2465
    %v2470 = vadd.f32 %v2430, %v2467
    %v2471 = vsel %vm307, %v2469, 0.0
    %2472 = vadd.xlane.f32.xlu0 %v2471
    %v2473 = vpop.xlane.xlu0 %2472
    %v2474 = vsel %vm862, %v2470, 0.0
    %2475 = vadd.xlane.f32.xlu0 %v2474
    %v2476 = vpop.xlane.xlu0 %2475
    %v2477 = vmul.f32 %v2473, %v872
    %v2478 = vmul.f32 %v2476, %v872
    %v2479 = vsub.f32 %v2469, %v2477
    %v2480 = vsub.f32 %v2470, %v2478
    %v2481 = vmul.f32 %v2479, %v2479
    %v2482 = vmul.f32 %v2480, %v2480
    %v2483 = vsel %vm307, %v2481, 0.0
    %2484 = vadd.xlane.f32.xlu0 %v2483
    %v2485 = vpop.xlane.xlu0 %2484
    %v2486 = vsel %vm862, %v2482, 0.0
    %2487 = vadd.xlane.f32.xlu0 %v2486
    %v2488 = vpop.xlane.xlu0 %2487
    %v2489 = vmul.f32 %v2485, %v872
    %v2490 = vmul.f32 %v2488, %v872
    %v2491 = vadd.f32 %v2489, 1e-05
    %v2492 = vadd.f32 %v2490, 1e-05
    %v2493 = vrsqrt.pop %v2491
    %v2494 = vmul.f32 %v2493, %v2491
    %v2495 = vmul.f32 %v2494, %v2493
    %v2496 = vmul.f32 0.5, %v2495
    %v2497 = vsub.f32 1.5, %v2496
    %v2498 = vmul.f32 %v2493, %v2497
    %vm2499 = vweird.f32 %v2491
    %vm2500 = vweird.f32 %v2493
    %vm2501 = vmor %vm2499, %vm2500
    %v2502 = vsel %vm2501, %v2493, %v2498
    %v2503 = vrsqrt.pop %v2492
    %v2504 = vmul.f32 %v2503, %v2492
    %v2505 = vmul.f32 %v2504, %v2503
    %v2506 = vmul.f32 0.5, %v2505
    %v2507 = vsub.f32 1.5, %v2506
    %v2508 = vmul.f32 %v2503, %v2507
    %vm2509 = vweird.f32 %v2492
    %vm2510 = vweird.f32 %v2503
    %vm2511 = vmor %vm2509, %vm2510
    %v2512 = vsel %vm2511, %v2503, %v2508
    %v2513 = vmul.f32 %v2479, %v2502
    %v2514 = vmul.f32 %v2480, %v2512
    %v2515 = vmul.f32 %v2513, %v1064
    %v2516 = vmul.f32 %v2514, %v1064
    %v2517 = vadd.f32 %v2515, %v1069
    %v2518 = vadd.f32 %v2516, %v1069
    %v2519 = vpack.c.bf16 %v2518, %v2517
    %v2521 = vsel %vm307, %v2519, 0
    %2523 = vmatpush.bf16.msra.mxu0 0
    %2524 = vmatpush.bf16.msra.mxu0 0
    %2525 = vmatpush.bf16.msra.mxu0 0
    %2526 = vmatpush.bf16.msra.mxu0 0
    %2527 = vmatpush.bf16.msra.mxu0 0
    %2528 = vmatpush.bf16.msra.mxu0 0
    %2529 = vmatpush.bf16.msra.mxu0 %v1093
    %2530 = vmatpush.bf16.msra.mxu0 %v1092
    %2531 = vmatmul.bf16.gmra.mxu0 %v2521
    %v2532 = vpop.f32.mrf.mxu0
    %v2533 = vadd.f32 %v1082, %v2532
    %v2534 = vpop.f32.mrf.mxu0
    %v2535 = vadd.f32 %v1082, %v2534
    %2536 = vdwg.mxu0
    %v2537 = vpack.c.bf16 %v2535, %v2533
    %2540 = vrot.lane.b32.xlu0 %v2533, 96
    %v2541 = vpop.permute.xlu0 %2540
    %2542 = vrot.lane.b32.xlu0 %v2535, 96
    %v2543 = vpop.permute.xlu0 %2542
    %2546 = vxpose.xlu0.b32.start [1/16] %v2541, 128
    %2547 = vxpose.xlu0.b32.cont [2/16] %v2543, 128
    %2548 = vxpose.xlu0.b32.cont [3/16] 0.0, 128
    %2549 = vxpose.xlu0.b32.cont [4/16] 0.0, 128
    %2550 = vxpose.xlu0.b32.cont [5/16] 0.0, 128
    %2551 = vxpose.xlu0.b32.cont [6/16] 0.0, 128
    %2552 = vxpose.xlu0.b32.cont [7/16] 0.0, 128
    %2553 = vxpose.xlu0.b32.cont [8/16] 0.0, 128
    %2554 = vxpose.xlu0.b32.cont [9/16] 0.0, 128
    %2555 = vxpose.xlu0.b32.cont [10/16] 0.0, 128
    %2556 = vxpose.xlu0.b32.cont [11/16] 0.0, 128
    %2557 = vxpose.xlu0.b32.cont [12/16] 0.0, 128
    %2558 = vxpose.xlu0.b32.cont [13/16] 0.0, 128
    %2559 = vxpose.xlu0.b32.cont [14/16] 0.0, 128
    %2560 = vxpose.xlu0.b32.cont [15/16] 0.0, 128
    %2561 = vxpose.xlu0.b32.end [16/16] 0.0, 128
    %v2562 = vpop.trf.xlu0
    %v2563 = vpop.trf.xlu0
    %v2564 = vpop.trf.xlu0
    %v2565 = vpop.trf.xlu0
    %v2566 = vpop.trf.xlu0
    %v2567 = vpop.trf.xlu0
    %v2568 = vpop.trf.xlu0
    %v2569 = vpop.trf.xlu0
    %v2570 = vpop.trf.xlu0
    %v2571 = vpop.trf.xlu0
    %v2572 = vpop.trf.xlu0
    %v2573 = vpop.trf.xlu0
    %v2574 = vpop.trf.xlu0
    %v2575 = vpop.trf.xlu0
    %v2576 = vpop.trf.xlu0
    %v2577 = vpop.trf.xlu0
    %v2578 = vpack.c.bf16 %v2562, %v2562
    %v2580 = vsel %vm371, %v2537, 0
    %v2583 = vsel %vm282, %v2578, 0
    %2585 = vmatpush.bf16.msra.mxu0 0
    %2586 = vmatpush.bf16.msra.mxu0 0
    %2587 = vmatpush.bf16.msra.mxu0 0
    %2588 = vmatpush.bf16.msra.mxu0 0
    %2589 = vmatpush.bf16.msra.mxu0 0
    %2590 = vmatpush.bf16.msra.mxu0 0
    %2591 = vmatpush.bf16.msra.mxu0 0
    %2592 = vmatpush.bf16.msra.mxu0 %v2583
    %2593 = vmatmul.bf16.gmra.mxu0 %v2580
    %v2594 = vpop.f32.mrf.mxu0
    %v2595 = vadd.f32 0.0, %v2594
    %v2596 = vpop.f32.mrf.mxu0
    %v2597 = vadd.f32 0.0, %v2596
    %2598 = vdwg.mxu0
    %v2599 = vsel %vm392, %v2595, -inf
    %2600 = vmax.xlane.f32.xlu0 %v2599
    %v2601 = vpop.xlane.xlu0 %2600
    %v2602 = vsel %vm396, %v2597, -inf
    %2603 = vmax.xlane.f32.xlu0 %v2602
    %v2604 = vpop.xlane.xlu0 %2603
    %v2605 = vsub.f32 %v2595, %v2601
    %v2606 = vsub.f32 %v2597, %v2604
    %v2607 = vmul.f32 %v2605, 1.442695
    %v2608 = vpow.pop %v2607
    %v2609 = vmul.f32 %v2606, 1.442695
    %v2610 = vpow.pop %v2609
    %v2611 = vsel %vm392, %v2608, 0.0
    %2612 = vadd.xlane.f32.xlu0 %v2611
    %v2613 = vpop.xlane.xlu0 %2612
    %v2614 = vsel %vm396, %v2610, 0.0
    %2615 = vadd.xlane.f32.xlu0 %v2614
    %v2616 = vpop.xlane.xlu0 %2615
    %v2617 = vrcp.pop %v2613
    %v2618 = vrcp.pop %v2616
    %v2619 = vmul.f32 %v2608, %v2617
    %v2620 = vmul.f32 %v2610, %v2618
    %v2621 = vpack.c.bf16 %v2620, %v2619
    %2623 = vrot.lane.b32.xlu0 %v2537, 64
    %v2624 = vpop.permute.xlu0 %2623
    %v2626 = vsel %vm392, %v2621, 0
    %v2629 = vand.u32 %v2624, %v425
    %2631 = vmatpush.bf16.msra.mxu0 0
    %2632 = vmatpush.bf16.msra.mxu0 0
    %2633 = vmatpush.bf16.msra.mxu0 0
    %2634 = vmatpush.bf16.msra.mxu0 0
    %2635 = vmatpush.bf16.msra.mxu0 0
    %2636 = vmatpush.bf16.msra.mxu0 0
    %2637 = vmatpush.bf16.msra.mxu0 0
    %2638 = vmatpush.bf16.msra.mxu0 %v2629
    %2639 = vmatmul.bf16.gmra.mxu0 %v2626
    %v2640 = vpop.f32.mrf.mxu0
    %v2641 = vadd.f32 0.0, %v2640
    %v2642 = vpop.f32.mrf.mxu0
    %v2643 = vadd.f32 0.0, %v2642
    %2644 = vdwg.mxu0
    %v2645 = vpack.c.bf16 %v2643, %v2641
    %2646 = vrot.lane.b32.xlu0 %v2533, 88
    %v2647 = vpop.permute.xlu0 %2646
    %2648 = vrot.lane.b32.xlu0 %v2535, 88
    %v2649 = vpop.permute.xlu0 %2648
    %2652 = vxpose.xlu0.b32.start [1/16] %v2647, 128
    %2653 = vxpose.xlu0.b32.cont [2/16] %v2649, 128
    %2654 = vxpose.xlu0.b32.cont [3/16] 0.0, 128
    %2655 = vxpose.xlu0.b32.cont [4/16] 0.0, 128
    %2656 = vxpose.xlu0.b32.cont [5/16] 0.0, 128
    %2657 = vxpose.xlu0.b32.cont [6/16] 0.0, 128
    %2658 = vxpose.xlu0.b32.cont [7/16] 0.0, 128
    %2659 = vxpose.xlu0.b32.cont [8/16] 0.0, 128
    %2660 = vxpose.xlu0.b32.cont [9/16] 0.0, 128
    %2661 = vxpose.xlu0.b32.cont [10/16] 0.0, 128
    %2662 = vxpose.xlu0.b32.cont [11/16] 0.0, 128
    %2663 = vxpose.xlu0.b32.cont [12/16] 0.0, 128
    %2664 = vxpose.xlu0.b32.cont [13/16] 0.0, 128
    %2665 = vxpose.xlu0.b32.cont [14/16] 0.0, 128
    %2666 = vxpose.xlu0.b32.cont [15/16] 0.0, 128
    %2667 = vxpose.xlu0.b32.end [16/16] 0.0, 128
    %v2668 = vpop.trf.xlu0
    %v2669 = vpop.trf.xlu0
    %v2670 = vpop.trf.xlu0
    %v2671 = vpop.trf.xlu0
    %v2672 = vpop.trf.xlu0
    %v2673 = vpop.trf.xlu0
    %v2674 = vpop.trf.xlu0
    %v2675 = vpop.trf.xlu0
    %v2676 = vpop.trf.xlu0
    %v2677 = vpop.trf.xlu0
    %v2678 = vpop.trf.xlu0
    %v2679 = vpop.trf.xlu0
    %v2680 = vpop.trf.xlu0
    %v2681 = vpop.trf.xlu0
    %v2682 = vpop.trf.xlu0
    %v2683 = vpop.trf.xlu0
    %v2684 = vpack.c.bf16 %v2668, %v2668
    %2685 = vrot.lane.b32.xlu0 %v2537, 120
    %v2686 = vpop.permute.xlu0 %2685
    %v2688 = vsel %vm371, %v2686, 0
    %v2691 = vsel %vm282, %v2684, 0
    %2693 = vmatpush.bf16.msra.mxu0 0
    %2694 = vmatpush.bf16.msra.mxu0 0
    %2695 = vmatpush.bf16.msra.mxu0 0
    %2696 = vmatpush.bf16.msra.mxu0 0
    %2697 = vmatpush.bf16.msra.mxu0 0
    %2698 = vmatpush.bf16.msra.mxu0 0
    %2699 = vmatpush.bf16.msra.mxu0 0
    %2700 = vmatpush.bf16.msra.mxu0 %v2691
    %2701 = vmatmul.bf16.gmra.mxu0 %v2688
    %v2702 = vpop.f32.mrf.mxu0
    %v2703 = vadd.f32 0.0, %v2702
    %v2704 = vpop.f32.mrf.mxu0
    %v2705 = vadd.f32 0.0, %v2704
    %2706 = vdwg.mxu0
    %v2707 = vsel %vm392, %v2703, -inf
    %2708 = vmax.xlane.f32.xlu0 %v2707
    %v2709 = vpop.xlane.xlu0 %2708
    %v2710 = vsel %vm396, %v2705, -inf
    %2711 = vmax.xlane.f32.xlu0 %v2710
    %v2712 = vpop.xlane.xlu0 %2711
    %v2713 = vsub.f32 %v2703, %v2709
    %v2714 = vsub.f32 %v2705, %v2712
    %v2715 = vmul.f32 %v2713, 1.442695
    %v2716 = vpow.pop %v2715
    %v2717 = vmul.f32 %v2714, 1.442695
    %v2718 = vpow.pop %v2717
    %v2719 = vsel %vm392, %v2716, 0.0
    %2720 = vadd.xlane.f32.xlu0 %v2719
    %v2721 = vpop.xlane.xlu0 %2720
    %v2722 = vsel %vm396, %v2718, 0.0
    %2723 = vadd.xlane.f32.xlu0 %v2722
    %v2724 = vpop.xlane.xlu0 %2723
    %v2725 = vrcp.pop %v2721
    %v2726 = vrcp.pop %v2724
    %v2727 = vmul.f32 %v2716, %v2725
    %v2728 = vmul.f32 %v2718, %v2726
    %v2729 = vpack.c.bf16 %v2728, %v2727
    %2730 = vrot.lane.b32.xlu0 %v2537, 56
    %v2731 = vpop.permute.xlu0 %2730
    %v2733 = vsel %vm392, %v2729, 0
    %v2736 = vand.u32 %v2731, %v425
    %2738 = vmatpush.bf16.msra.mxu0 0
    %2739 = vmatpush.bf16.msra.mxu0 0
    %2740 = vmatpush.bf16.msra.mxu0 0
    %2741 = vmatpush.bf16.msra.mxu0 0
    %2742 = vmatpush.bf16.msra.mxu0 0
    %2743 = vmatpush.bf16.msra.mxu0 0
    %2744 = vmatpush.bf16.msra.mxu0 0
    %2745 = vmatpush.bf16.msra.mxu0 %v2736
    %2746 = vmatmul.bf16.gmra.mxu0 %v2733
    %v2747 = vpop.f32.mrf.mxu0
    %v2748 = vadd.f32 0.0, %v2747
    %v2749 = vpop.f32.mrf.mxu0
    %v2750 = vadd.f32 0.0, %v2749
    %2751 = vdwg.mxu0
    %v2752 = vpack.c.bf16 %v2750, %v2748
    %v2754 = vsel %vm371, %v2752, 0
    %2756 = vmatpush.bf16.msra.mxu0 0
    %2757 = vmatpush.bf16.msra.mxu0 0
    %2758 = vmatpush.bf16.msra.mxu0 0
    %2759 = vmatpush.bf16.msra.mxu0 0
    %2760 = vmatpush.bf16.msra.mxu0 0
    %2761 = vmatpush.bf16.msra.mxu0 0
    %2762 = vmatpush.bf16.msra.mxu0 0
    %2763 = vmatpush.bf16.msra.mxu0 %v1338
    %2764 = vmatmul.bf16.gmra.mxu0 %v2754
    %v2765 = vpop.f32.mrf.mxu0
    %v2766 = vadd.f32 0.0, %v2765
    %v2767 = vpop.f32.mrf.mxu0
    %v2768 = vadd.f32 0.0, %v2767
    %2769 = vdwg.mxu0
    %v2771 = vsel %vm371, %v2645, 0
    %2773 = vmatpush.bf16.msra.mxu0 0
    %2774 = vmatpush.bf16.msra.mxu0 0
    %2775 = vmatpush.bf16.msra.mxu0 0
    %2776 = vmatpush.bf16.msra.mxu0 0
    %2777 = vmatpush.bf16.msra.mxu0 0
    %2778 = vmatpush.bf16.msra.mxu0 0
    %2779 = vmatpush.bf16.msra.mxu0 0
    %2780 = vmatpush.bf16.msra.mxu0 %v1358
    %2781 = vmatmul.bf16.gmra.mxu0 %v2771
    %v2782 = vpop.f32.mrf.mxu0
    %v2783 = vadd.f32 %v2766, %v2782
    %v2784 = vpop.f32.mrf.mxu0
    %v2785 = vadd.f32 %v2768, %v2784
    %2786 = vdwg.mxu0
    %2787 = vrot.lane.b32.xlu0 %v2533, 80
    %v2788 = vpop.permute.xlu0 %2787
    %2789 = vrot.lane.b32.xlu0 %v2535, 80
    %v2790 = vpop.permute.xlu0 %2789
    %2793 = vxpose.xlu0.b32.start [1/16] %v2788, 128
    %2794 = vxpose.xlu0.b32.cont [2/16] %v2790, 128
    %2795 = vxpose.xlu0.b32.cont [3/16] 0.0, 128
    %2796 = vxpose.xlu0.b32.cont [4/16] 0.0, 128
    %2797 = vxpose.xlu0.b32.cont [5/16] 0.0, 128
    %2798 = vxpose.xlu0.b32.cont [6/16] 0.0, 128
    %2799 = vxpose.xlu0.b32.cont [7/16] 0.0, 128
    %2800 = vxpose.xlu0.b32.cont [8/16] 0.0, 128
    %2801 = vxpose.xlu0.b32.cont [9/16] 0.0, 128
    %2802 = vxpose.xlu0.b32.cont [10/16] 0.0, 128
    %2803 = vxpose.xlu0.b32.cont [11/16] 0.0, 128
    %2804 = vxpose.xlu0.b32.cont [12/16] 0.0, 128
    %2805 = vxpose.xlu0.b32.cont [13/16] 0.0, 128
    %2806 = vxpose.xlu0.b32.cont [14/16] 0.0, 128
    %2807 = vxpose.xlu0.b32.cont [15/16] 0.0, 128
    %2808 = vxpose.xlu0.b32.end [16/16] 0.0, 128
    %v2809 = vpop.trf.xlu0
    %v2810 = vpop.trf.xlu0
    %v2811 = vpop.trf.xlu0
    %v2812 = vpop.trf.xlu0
    %v2813 = vpop.trf.xlu0
    %v2814 = vpop.trf.xlu0
    %v2815 = vpop.trf.xlu0
    %v2816 = vpop.trf.xlu0
    %v2817 = vpop.trf.xlu0
    %v2818 = vpop.trf.xlu0
    %v2819 = vpop.trf.xlu0
    %v2820 = vpop.trf.xlu0
    %v2821 = vpop.trf.xlu0
    %v2822 = vpop.trf.xlu0
    %v2823 = vpop.trf.xlu0
    %v2824 = vpop.trf.xlu0
    %v2825 = vpack.c.bf16 %v2809, %v2809
    %2826 = vrot.lane.b32.xlu0 %v2537, 112
    %v2827 = vpop.permute.xlu0 %2826
    %v2829 = vsel %vm371, %v2827, 0
    %v2832 = vsel %vm282, %v2825, 0
    %2834 = vmatpush.bf16.msra.mxu0 0
    %2835 = vmatpush.bf16.msra.mxu0 0
    %2836 = vmatpush.bf16.msra.mxu0 0
    %2837 = vmatpush.bf16.msra.mxu0 0
    %2838 = vmatpush.bf16.msra.mxu0 0
    %2839 = vmatpush.bf16.msra.mxu0 0
    %2840 = vmatpush.bf16.msra.mxu0 0
    %2841 = vmatpush.bf16.msra.mxu0 %v2832
    %2842 = vmatmul.bf16.gmra.mxu0 %v2829
    %v2843 = vpop.f32.mrf.mxu0
    %v2844 = vadd.f32 0.0, %v2843
    %v2845 = vpop.f32.mrf.mxu0
    %v2846 = vadd.f32 0.0, %v2845
    %2847 = vdwg.mxu0
    %v2848 = vsel %vm392, %v2844, -inf
    %2849 = vmax.xlane.f32.xlu0 %v2848
    %v2850 = vpop.xlane.xlu0 %2849
    %v2851 = vsel %vm396, %v2846, -inf
    %2852 = vmax.xlane.f32.xlu0 %v2851
    %v2853 = vpop.xlane.xlu0 %2852
    %v2854 = vsub.f32 %v2844, %v2850
    %v2855 = vsub.f32 %v2846, %v2853
    %v2856 = vmul.f32 %v2854, 1.442695
    %v2857 = vpow.pop %v2856
    %v2858 = vmul.f32 %v2855, 1.442695
    %v2859 = vpow.pop %v2858
    %v2860 = vsel %vm392, %v2857, 0.0
    %2861 = vadd.xlane.f32.xlu0 %v2860
    %v2862 = vpop.xlane.xlu0 %2861
    %v2863 = vsel %vm396, %v2859, 0.0
    %2864 = vadd.xlane.f32.xlu0 %v2863
    %v2865 = vpop.xlane.xlu0 %2864
    %v2866 = vrcp.pop %v2862
    %v2867 = vrcp.pop %v2865
    %v2868 = vmul.f32 %v2857, %v2866
    %v2869 = vmul.f32 %v2859, %v2867
    %v2870 = vpack.c.bf16 %v2869, %v2868
    %2871 = vrot.lane.b32.xlu0 %v2537, 48
    %v2872 = vpop.permute.xlu0 %2871
    %v2874 = vsel %vm392, %v2870, 0
    %v2877 = vand.u32 %v2872, %v425
    %2879 = vmatpush.bf16.msra.mxu0 0
    %2880 = vmatpush.bf16.msra.mxu0 0
    %2881 = vmatpush.bf16.msra.mxu0 0
    %2882 = vmatpush.bf16.msra.mxu0 0
    %2883 = vmatpush.bf16.msra.mxu0 0
    %2884 = vmatpush.bf16.msra.mxu0 0
    %2885 = vmatpush.bf16.msra.mxu0 0
    %2886 = vmatpush.bf16.msra.mxu0 %v2877
    %2887 = vmatmul.bf16.gmra.mxu0 %v2874
    %v2888 = vpop.f32.mrf.mxu0
    %v2889 = vadd.f32 0.0, %v2888
    %v2890 = vpop.f32.mrf.mxu0
    %v2891 = vadd.f32 0.0, %v2890
    %2892 = vdwg.mxu0
    %v2893 = vpack.c.bf16 %v2891, %v2889
    %v2895 = vsel %vm371, %v2893, 0
    %2897 = vmatpush.bf16.msra.mxu0 0
    %2898 = vmatpush.bf16.msra.mxu0 0
    %2899 = vmatpush.bf16.msra.mxu0 0
    %2900 = vmatpush.bf16.msra.mxu0 0
    %2901 = vmatpush.bf16.msra.mxu0 0
    %2902 = vmatpush.bf16.msra.mxu0 0
    %2903 = vmatpush.bf16.msra.mxu0 0
    %2904 = vmatpush.bf16.msra.mxu0 %v1485
    %2905 = vmatmul.bf16.gmra.mxu0 %v2895
    %v2906 = vpop.f32.mrf.mxu0
    %v2907 = vadd.f32 0.0, %v2906
    %v2908 = vpop.f32.mrf.mxu0
    %v2909 = vadd.f32 0.0, %v2908
    %2910 = vdwg.mxu0
    %v2911 = vadd.f32 %v2783, %v2907
    %v2912 = vadd.f32 %v2785, %v2909
    %2913 = vrot.lane.b32.xlu0 %v2533, 72
    %v2914 = vpop.permute.xlu0 %2913
    %2915 = vrot.lane.b32.xlu0 %v2535, 72
    %v2916 = vpop.permute.xlu0 %2915
    %2919 = vxpose.xlu0.b32.start [1/16] %v2914, 128
    %2920 = vxpose.xlu0.b32.cont [2/16] %v2916, 128
    %2921 = vxpose.xlu0.b32.cont [3/16] 0.0, 128
    %2922 = vxpose.xlu0.b32.cont [4/16] 0.0, 128
    %2923 = vxpose.xlu0.b32.cont [5/16] 0.0, 128
    %2924 = vxpose.xlu0.b32.cont [6/16] 0.0, 128
    %2925 = vxpose.xlu0.b32.cont [7/16] 0.0, 128
    %2926 = vxpose.xlu0.b32.cont [8/16] 0.0, 128
    %2927 = vxpose.xlu0.b32.cont [9/16] 0.0, 128
    %2928 = vxpose.xlu0.b32.cont [10/16] 0.0, 128
    %2929 = vxpose.xlu0.b32.cont [11/16] 0.0, 128
    %2930 = vxpose.xlu0.b32.cont [12/16] 0.0, 128
    %2931 = vxpose.xlu0.b32.cont [13/16] 0.0, 128
    %2932 = vxpose.xlu0.b32.cont [14/16] 0.0, 128
    %2933 = vxpose.xlu0.b32.cont [15/16] 0.0, 128
    %2934 = vxpose.xlu0.b32.end [16/16] 0.0, 128
    %v2935 = vpop.trf.xlu0
    %v2936 = vpop.trf.xlu0
    %v2937 = vpop.trf.xlu0
    %v2938 = vpop.trf.xlu0
    %v2939 = vpop.trf.xlu0
    %v2940 = vpop.trf.xlu0
    %v2941 = vpop.trf.xlu0
    %v2942 = vpop.trf.xlu0
    %v2943 = vpop.trf.xlu0
    %v2944 = vpop.trf.xlu0
    %v2945 = vpop.trf.xlu0
    %v2946 = vpop.trf.xlu0
    %v2947 = vpop.trf.xlu0
    %v2948 = vpop.trf.xlu0
    %v2949 = vpop.trf.xlu0
    %v2950 = vpop.trf.xlu0
    %v2951 = vpack.c.bf16 %v2935, %v2935
    %2952 = vrot.lane.b32.xlu0 %v2537, 104
    %v2953 = vpop.permute.xlu0 %2952
    %v2955 = vsel %vm371, %v2953, 0
    %v2958 = vsel %vm282, %v2951, 0
    %2960 = vmatpush.bf16.msra.mxu0 0
    %2961 = vmatpush.bf16.msra.mxu0 0
    %2962 = vmatpush.bf16.msra.mxu0 0
    %2963 = vmatpush.bf16.msra.mxu0 0
    %2964 = vmatpush.bf16.msra.mxu0 0
    %2965 = vmatpush.bf16.msra.mxu0 0
    %2966 = vmatpush.bf16.msra.mxu0 0
    %2967 = vmatpush.bf16.msra.mxu0 %v2958
    %2968 = vmatmul.bf16.gmra.mxu0 %v2955
    %v2969 = vpop.f32.mrf.mxu0
    %v2970 = vadd.f32 0.0, %v2969
    %v2971 = vpop.f32.mrf.mxu0
    %v2972 = vadd.f32 0.0, %v2971
    %2973 = vdwg.mxu0
    %v2974 = vsel %vm392, %v2970, -inf
    %2975 = vmax.xlane.f32.xlu0 %v2974
    %v2976 = vpop.xlane.xlu0 %2975
    %v2977 = vsel %vm396, %v2972, -inf
    %2978 = vmax.xlane.f32.xlu0 %v2977
    %v2979 = vpop.xlane.xlu0 %2978
    %v2980 = vsub.f32 %v2970, %v2976
    %v2981 = vsub.f32 %v2972, %v2979
    %v2982 = vmul.f32 %v2980, 1.442695
    %v2983 = vpow.pop %v2982
    %v2984 = vmul.f32 %v2981, 1.442695
    %v2985 = vpow.pop %v2984
    %v2986 = vsel %vm392, %v2983, 0.0
    %2987 = vadd.xlane.f32.xlu0 %v2986
    %v2988 = vpop.xlane.xlu0 %2987
    %v2989 = vsel %vm396, %v2985, 0.0
    %2990 = vadd.xlane.f32.xlu0 %v2989
    %v2991 = vpop.xlane.xlu0 %2990
    %v2992 = vrcp.pop %v2988
    %v2993 = vrcp.pop %v2991
    %v2994 = vmul.f32 %v2983, %v2992
    %v2995 = vmul.f32 %v2985, %v2993
    %v2996 = vpack.c.bf16 %v2995, %v2994
    %2997 = vrot.lane.b32.xlu0 %v2537, 40
    %v2998 = vpop.permute.xlu0 %2997
    %v3000 = vsel %vm392, %v2996, 0
    %v3003 = vand.u32 %v2998, %v425
    %3005 = vmatpush.bf16.msra.mxu0 0
    %3006 = vmatpush.bf16.msra.mxu0 0
    %3007 = vmatpush.bf16.msra.mxu0 0
    %3008 = vmatpush.bf16.msra.mxu0 0
    %3009 = vmatpush.bf16.msra.mxu0 0
    %3010 = vmatpush.bf16.msra.mxu0 0
    %3011 = vmatpush.bf16.msra.mxu0 0
    %3012 = vmatpush.bf16.msra.mxu0 %v3003
    %3013 = vmatmul.bf16.gmra.mxu0 %v3000
    %v3014 = vpop.f32.mrf.mxu0
    %v3015 = vadd.f32 0.0, %v3014
    %v3016 = vpop.f32.mrf.mxu0
    %v3017 = vadd.f32 0.0, %v3016
    %3018 = vdwg.mxu0
    %v3019 = vpack.c.bf16 %v3017, %v3015
    %v3021 = vsel %vm371, %v3019, 0
    %3023 = vmatpush.bf16.msra.mxu0 0
    %3024 = vmatpush.bf16.msra.mxu0 0
    %3025 = vmatpush.bf16.msra.mxu0 0
    %3026 = vmatpush.bf16.msra.mxu0 0
    %3027 = vmatpush.bf16.msra.mxu0 0
    %3028 = vmatpush.bf16.msra.mxu0 0
    %3029 = vmatpush.bf16.msra.mxu0 0
    %3030 = vmatpush.bf16.msra.mxu0 %v1614
    %3031 = vmatmul.bf16.gmra.mxu0 %v3021
    %v3032 = vpop.f32.mrf.mxu0
    %v3033 = vadd.f32 0.0, %v3032
    %v3034 = vpop.f32.mrf.mxu0
    %v3035 = vadd.f32 0.0, %v3034
    %3036 = vdwg.mxu0
    %v3037 = vadd.f32 %v2911, %v3033
    %v3038 = vadd.f32 %v2912, %v3035
    %v3039 = vadd.f32 %v3037, %v1635
    %v3040 = vadd.f32 %v3038, %v1635
    %v3041 = vadd.f32 %v2517, %v3039
    %v3042 = vadd.f32 %v2518, %v3040
    %v3043 = vsel %vm307, %v3041, 0.0
    %3044 = vadd.xlane.f32.xlu0 %v3043
    %v3045 = vpop.xlane.xlu0 %3044
    %v3046 = vsel %vm862, %v3042, 0.0
    %3047 = vadd.xlane.f32.xlu0 %v3046
    %v3048 = vpop.xlane.xlu0 %3047
    %v3049 = vmul.f32 %v3045, %v872
    %v3050 = vmul.f32 %v3048, %v872
    %v3051 = vsub.f32 %v3041, %v3049
    %v3052 = vsub.f32 %v3042, %v3050
    %v3053 = vmul.f32 %v3051, %v3051
    %v3054 = vmul.f32 %v3052, %v3052
    %v3055 = vsel %vm307, %v3053, 0.0
    %3056 = vadd.xlane.f32.xlu0 %v3055
    %v3057 = vpop.xlane.xlu0 %3056
    %v3058 = vsel %vm862, %v3054, 0.0
    %3059 = vadd.xlane.f32.xlu0 %v3058
    %v3060 = vpop.xlane.xlu0 %3059
    %v3061 = vmul.f32 %v3057, %v872
    %v3062 = vmul.f32 %v3060, %v872
    %v3063 = vadd.f32 %v3061, 1e-05
    %v3064 = vadd.f32 %v3062, 1e-05
    %v3065 = vrsqrt.pop %v3063
    %v3066 = vmul.f32 %v3065, %v3063
    %v3067 = vmul.f32 %v3066, %v3065
    %v3068 = vmul.f32 0.5, %v3067
    %v3069 = vsub.f32 1.5, %v3068
    %v3070 = vmul.f32 %v3065, %v3069
    %vm3071 = vweird.f32 %v3063
    %vm3072 = vweird.f32 %v3065
    %vm3073 = vmor %vm3071, %vm3072
    %v3074 = vsel %vm3073, %v3065, %v3070
    %v3075 = vrsqrt.pop %v3064
    %v3076 = vmul.f32 %v3075, %v3064
    %v3077 = vmul.f32 %v3076, %v3075
    %v3078 = vmul.f32 0.5, %v3077
    %v3079 = vsub.f32 1.5, %v3078
    %v3080 = vmul.f32 %v3075, %v3079
    %vm3081 = vweird.f32 %v3064
    %vm3082 = vweird.f32 %v3075
    %vm3083 = vmor %vm3081, %vm3082
    %v3084 = vsel %vm3083, %v3075, %v3080
    %v3085 = vmul.f32 %v3051, %v3074
    %v3086 = vmul.f32 %v3052, %v3084
    %v3087 = vmul.f32 %v3085, %v1690
    %v3088 = vmul.f32 %v3086, %v1690
    %v3089 = vadd.f32 %v3087, %v1695
    %v3090 = vadd.f32 %v3088, %v1695
    %v3091 = vpack.c.bf16 %v3090, %v3089
    %v3093 = vsel %vm307, %v3091, 0
    %3095 = vmatpush.bf16.msra.mxu0 0
    %3096 = vmatpush.bf16.msra.mxu0 0
    %3097 = vmatpush.bf16.msra.mxu0 0
    %3098 = vmatpush.bf16.msra.mxu0 0
    %3099 = vmatpush.bf16.msra.mxu0 0
    %3100 = vmatpush.bf16.msra.mxu0 0
    %3101 = vmatpush.bf16.msra.mxu0 %v1719
    %3102 = vmatpush.bf16.msra.mxu0 %v1718
    %3103 = vmatmul.bf16.gmra.mxu0 %v3093
    %v3104 = vpop.f32.mrf.mxu0
    %v3105 = vadd.f32 %v1708, %v3104
    %v3106 = vpop.f32.mrf.mxu0
    %v3107 = vadd.f32 %v1708, %v3106
    %3108 = vdwg.mxu0
    %v3109 = vmax.f32 %v3105, 0.0
    %v3110 = vmax.f32 %v3107, 0.0
    %v3111 = vpack.c.bf16 %v3110, %v3109
    %v3113 = vsel %vm255, %v3111, 0
    %3115 = vmatpush.bf16.msra.mxu0 0
    %3116 = vmatpush.bf16.msra.mxu0 0
    %3117 = vmatpush.bf16.msra.mxu0 0
    %3118 = vmatpush.bf16.msra.mxu0 0
    %3119 = vmatpush.bf16.msra.mxu0 %v1775
    %3120 = vmatpush.bf16.msra.mxu0 %v1774
    %3121 = vmatpush.bf16.msra.mxu0 %v1773
    %3122 = vmatpush.bf16.msra.mxu0 %v1772
    %3123 = vmatmul.bf16.gmra.mxu0 %v3113
    %v3124 = vpop.f32.mrf.mxu0
    %v3125 = vpop.f32.mrf.mxu0
    %v3126 = vadd.f32 %v1754, %v3125
    %3127 = vdwg.mxu0
    %v3128 = vadd.f32 %v3090, %v3126
    %v3129 = vsel %vm862, %v3128, 0.0
    %3130 = vadd.xlane.f32.xlu0 %v3129
    %v3131 = vpop.xlane.xlu0 %3130
    %v3132 = vmul.f32 %v3131, %v872
    %v3133 = vsub.f32 %v3128, %v3132
    %v3134 = vmul.f32 %v3133, %v3133
    %v3135 = vsel %vm862, %v3134, 0.0
    %3136 = vadd.xlane.f32.xlu0 %v3135
    %v3137 = vpop.xlane.xlu0 %3136
    %v3138 = vmul.f32 %v3137, %v872
    %v3139 = vadd.f32 %v3138, 1e-05
    %v3140 = vrsqrt.pop %v3139
    %v3141 = vmul.f32 %v3140, %v3139
    %v3142 = vmul.f32 %v3141, %v3140
    %v3143 = vmul.f32 0.5, %v3142
    %v3144 = vsub.f32 1.5, %v3143
    %v3145 = vmul.f32 %v3140, %v3144
    %vm3146 = vweird.f32 %v3139
    %vm3147 = vweird.f32 %v3140
    %vm3148 = vmor %vm3146, %vm3147
    %v3149 = vsel %vm3148, %v3140, %v3145
    %v3150 = vmul.f32 %v3133, %v3149
    %v3151 = vmul.f32 %v3150, %v1824
    %v3152 = vadd.f32 %v3151, %v1828
    %v3154 = vrot.slane %v1830, 4
    %v3157 = vrot.slane %v3152, 3
    %vm3159 = vcmask 1040384
    %v3160 = vsel %vm3159, %v3154, %v3157
    %v3161 = vpack.c.bf16 %v3160, %v3160
    %v3162 = vld [vmem:[%s17] sm:$0xf]
    %v3163 = vld [vmem:[%s17 + $0x4] sm:$0xf]
    %v3164 = vld [vmem:[%s17 + $0x8] sm:$0xf]
    %v3165 = vld [vmem:[%s17 + $0xc] sm:$0xf]
    %v3166 = vld [vmem:[#allocation17] sm:$0x1]
    %v3168 = vperm.slane %v3166, 0
    %v3174 = vunpack.c.l.b16 %v3162
    %v3175 = vunpack.c.l.b16 %v3163
    %v3176 = vunpack.c.l.b16 %v3164
    %v3177 = vunpack.c.l.b16 %v3165
    %v3178 = vpack.c.b16 %v3175, %v3174
    %v3179 = vpack.c.b16 %v3177, %v3176
    %v3183 = vsel %vm307, %v3161, 0
    %3185 = vmatpush.bf16.msra.mxu0 0
    %3186 = vmatpush.bf16.msra.mxu0 0
    %3187 = vmatpush.bf16.msra.mxu0 0
    %3188 = vmatpush.bf16.msra.mxu0 0
    %3189 = vmatpush.bf16.msra.mxu0 0
    %3190 = vmatpush.bf16.msra.mxu0 0
    %3191 = vmatpush.bf16.msra.mxu0 %v3179
    %3192 = vmatpush.bf16.msra.mxu0 %v3178
    %3193 = vmatmul.bf16.gmra.mxu0 %v3183
    %v3194 = vpop.f32.mrf.mxu0
    %v3195 = vadd.f32 %v3168, %v3194
    %v3196 = vpop.f32.mrf.mxu0
    %3197 = vdwg.mxu0
    %vm3198 = vcmask 74752
    %3199 = vst.msk [vmem:[#allocation19] sm:$0x3] %vm3198, %v3195
    // Predicated region
    $region118: #{mtcn_av_forward.1} parent=1 // pred_check
      _
    $region119: #{mtcn_av_forward.1} parent=1 // pred_check_branch
      %3201 = sbr.rel (0) target = $region121
    $region120: #{mtcn_av_forward.1} parent=1 // pred_region
      %3203 = vsyncadd [#allocation4], 0
      %s3205 = sshll.u32 [#allocation19], 4
      %s3206 = int_to_ptr.vmem [resolvable:$true] %s3205
      %s3207 = sshll.u32 %s19, 4
      %s3208 = int_to_ptr.hbm [resolvable:$true] %s3207
      %3210 = dma.vmem_to_hbm [thread:$0]  %s3206, 32, %s3208, [#allocation4]
    $region121: #{mtcn_av_forward.1} parent=1 // pred_fallthru
      _
    // Predicated region
    $region122: #{mtcn_av_forward.1} parent=1 // pred_check
      _
    $region123: #{mtcn_av_forward.1} parent=1 // pred_check_branch
      %3212 = sbr.rel (0) target = $region125
    $region124: #{mtcn_av_forward.1} parent=1 // pred_region
      %3214 = dma.done [#allocation4], 32
    $region125: #{mtcn_av_forward.1} parent=1 // pred_fallthru
      _
    %3215 = vsyncpa [#allocation3], 1
    %3216 = vsyncpa [#allocation6], 1
    %3217 = vsyncpa [#allocation9], 1
    %3218 = vsyncpa [#allocation12], 1
    %3219 = vsyncpa [#allocation15], 1
    %3220 = vsyncpa [#allocation18], 1
    %3221 = vsyncpa [#allocation4], 1

</llo_original>
